<compile_context>
chip_gen: v5e
topology: v5e:2x2
jax: 0.10.0
libtpu: 0.0.40
codegen_flags: <defaults>
</compile_context>

<pallas_src>
import math
from functools import partial

import jax
import jax.numpy as jnp
from jax import lax
from jax.experimental import pallas as pl
from jax.experimental.pallas import tpu as pltpu


# ----------------------------- Pallas kernels ------------------------------ #

def fused_pw_ln_dw_pw_gelu_kernel(x_ref,                    # (1, Cin, H, W)  VMEM
                                  w1_ref, b1_ref,           # SMEM (Cin,Cmid), (Cmid,)
                                  lng_ref, lnb_ref,         # SMEM (Cmid,), (Cmid,)
                                  dww_ref, dwb_ref,         # SMEM (9,Cmid), (Cmid,)
                                  w2_ref, b2_ref,           # SMEM (Cmid,Cout), (Cout,)
                                  g_ref,                    # (1, Cout, H, W) VMEM out
                                  ssq_ref):                 # (1, Cout, W)    VMEM out
    """pw(1x1)+bias -> LayerNorm(eps=1e-6) -> depthwise 3x3 (zero pad) -> pw(1x1)+bias
    -> exact GELU, fully fused per batch element. Also emits per-channel
    sum-of-squares partials (reduced over H) for the global GRN statistics."""
    _, Cin, H, W = x_ref.shape
    Cmid = w1_ref.shape[1]
    Cout = w2_ref.shape[1]

    rows = lax.broadcasted_iota(jnp.int32, (H, W), 0)
    cols = lax.broadcasted_iota(jnp.int32, (H, W), 1)

    def shift2d(a, si, sj):
        # shifted[i, j] = a[i + si, j + sj], zero outside the image (zero padding).
        if sj != 0:
            a = pltpu.roll(a, (-sj) % W, axis=1)                      # lane roll (XLU)
            a = jnp.where((cols + sj >= 0) & (cols + sj < W), a, 0.0)
        if si != 0:
            a = pltpu.roll(a, (-si) % H, axis=0)                      # sublane roll (XLU)
            a = jnp.where((rows + si >= 0) & (rows + si < H), a, 0.0)
        return a

    x = [x_ref[0, c] for c in range(Cin)]                             # Cin slabs (H, W)

    # --- 1x1 conv (Cin -> Cmid) + bias: SMEM-scalar broadcast FMAs on the VPU ---
    h = []
    for d in range(Cmid):
        acc = jnp.zeros((H, W), jnp.float32)
        for c in range(Cin):
            acc = acc + w1_ref[c, d] * x[c]
        h.append(acc + b1_ref[d])

    # --- LayerNorm over the channel axis (eps = 1e-6) ---
    inv_c = 1.0 / Cmid
    mu = h[0]
    for d in range(1, Cmid):
        mu = mu + h[d]
    mu = mu * inv_c
    var = jnp.zeros((H, W), jnp.float32)
    for d in range(Cmid):
        diff = h[d] - mu
        var = var + diff * diff
    var = var * inv_c
    inv_std = lax.rsqrt(var + 1e-6)
    hn = [(h[d] - mu) * inv_std * lng_ref[d] + lnb_ref[d] for d in range(Cmid)]

    # --- depthwise 3x3 conv, stride 1, zero padding (halo handled via roll+mask) ---
    hd = []
    for d in range(Cmid):
        col_sh = {sj: (hn[d] if sj == 0 else shift2d(hn[d], 0, sj)) for sj in (-1, 0, 1)}
        acc = jnp.zeros((H, W), jnp.float32)
        for si in (-1, 0, 1):
            for sj in (-1, 0, 1):
                tap = (si + 1) * 3 + (sj + 1)
                sh = col_sh[sj] if si == 0 else shift2d(col_sh[sj], si, 0)
                acc = acc + dww_ref[tap, d] * sh
        hd.append(acc + dwb_ref[d])

    # --- 1x1 conv (Cmid -> Cout) + bias + exact (erf) GELU; emit g and ssq partials ---
    inv_sqrt2 = 1.0 / math.sqrt(2.0)
    ssq_rows = []
    for e in range(Cout):
        acc = jnp.zeros((H, W), jnp.float32)
        for d in range(Cmid):
            acc = acc + w2_ref[d, e] * hd[d]
        acc = acc + b2_ref[e]
        ge = 0.5 * acc * (1.0 + lax.erf(acc * inv_sqrt2))
        g_ref[0, e] = ge
        ssq_rows.append(jnp.sum(ge * ge, axis=0, keepdims=True))      # (1, W)
    ssq_ref[0] = jnp.concatenate(ssq_rows, axis=0)                    # (Cout, W)


def grn_residual_kernel(g_ref, x_ref, scale_ref, bias_ref, o_ref):
    """Apply MinkowskiGRN (scale = grn_gamma * nx per channel, from global stats)
    fused with the residual add. out = x + g + scale*g + bias."""
    Cout = g_ref.shape[1]
    for e in range(Cout):
        ge = g_ref[0, e]
        o_ref[0, e] = x_ref[0, e] + ge + scale_ref[e] * ge + bias_ref[e]


def grn_kernel(g_ref, scale_ref, bias_ref, o_ref):
    """GRN apply without residual: out = g + scale*g + bias."""
    Cout = g_ref.shape[1]
    for e in range(Cout):
        ge = g_ref[0, e]
        o_ref[0, e] = ge + scale_ref[e] * ge + bias_ref[e]


# ------------------------------- glue code --------------------------------- #

@partial(jax.jit, static_argnames=("residual",))
def depthwise_block_forward(x_nchw, params, residual=True):
    """Forward pass of DepthWise (residual MBConv-style block) on NCHW input."""
    B, Cin, H, W = x_nchw.shape
    Cmid = params["w1"].shape[1]
    Cout = params["w2"].shape[1]

    f32 = jnp.float32
    x_nchw = x_nchw.astype(f32)
    w1 = params["w1"].astype(f32)
    b1 = params["b1"].reshape(-1).astype(f32)
    lng = params["ln_g"].reshape(-1).astype(f32)
    lnb = params["ln_b"].reshape(-1).astype(f32)
    dww = params["dw_w"].astype(f32)
    dwb = params["dw_b"].reshape(-1).astype(f32)
    w2 = params["w2"].astype(f32)
    b2 = params["b2"].reshape(-1).astype(f32)

    smem = pl.BlockSpec(memory_space=pltpu.MemorySpace.SMEM)
    act_in = pl.BlockSpec((1, Cin, H, W), lambda b: (b, 0, 0, 0))
    act_out = pl.BlockSpec((1, Cout, H, W), lambda b: (b, 0, 0, 0))
    ssq_spec = pl.BlockSpec((1, Cout, W), lambda b: (b, 0, 0))
    cparams = pltpu.CompilerParams(
        dimension_semantics=("parallel",),      # shard batches across TCs (v7x megacore)
        vmem_limit_bytes=32 * 1024 * 1024,      # explicit budget; fits v7x (64 MiB phys)
    )

    # Phase 1: fused pw1+LN -> dw3x3 -> pw2+GELU, plus GRN sum-of-square partials.
    g, ssq = pl.pallas_call(
        fused_pw_ln_dw_pw_gelu_kernel,
        grid=(B,),
        in_specs=[act_in] + [smem] * 8,
        out_specs=(act_out, ssq_spec),
        out_shape=(jax.ShapeDtypeStruct((B, Cout, H, W), f32),
                   jax.ShapeDtypeStruct((B, Cout, W), f32)),
        compiler_params=cparams,
    )(x_nchw, w1, b1, lng, lnb, dww, dwb, w2, b2)

    # Tiny global GRN statistics: O(B*Cout*W) partials -> O(Cout) scalars (plain JAX glue).
    gx = jnp.sqrt(jnp.sum(ssq, axis=(0, 2)))                 # (Cout,)
    nx = gx / (jnp.mean(gx) + 1e-6)
    scale = params["grn_g"].reshape(-1).astype(f32) * nx     # (Cout,)
    bias = params["grn_b"].reshape(-1).astype(f32)           # (Cout,)

    # Phase 2: apply GRN (+ residual), writing in place of g (aliased).
    if residual:
        out = pl.pallas_call(
            grn_residual_kernel,
            grid=(B,),
            in_specs=[act_out, act_in, smem, smem],
            out_specs=act_out,
            out_shape=jax.ShapeDtypeStruct((B, Cout, H, W), f32),
            input_output_aliases={0: 0},
            compiler_params=cparams,
        )(g, x_nchw, scale, bias)
    else:
        out = pl.pallas_call(
            grn_kernel,
            grid=(B,),
            in_specs=[act_out, smem, smem],
            out_specs=act_out,
            out_shape=jax.ShapeDtypeStruct((B, Cout, H, W), f32),
            input_output_aliases={0: 0},
            compiler_params=cparams,
        )(g, scale, bias)
    return out


def reference_forward(x_nchw, params, residual=True):
    """Pure-JAX reference (NCHW in/out) for correctness checking."""
    x = jnp.transpose(x_nchw, (0, 2, 3, 1))  # NHWC
    h = jnp.einsum("bhwc,cd->bhwd", x, params["w1"]) + params["b1"][0]
    mu = h.mean(-1, keepdims=True)
    var = ((h - mu) ** 2).mean(-1, keepdims=True)
    h = (h - mu) / jnp.sqrt(var + 1e-6) * params["ln_g"][0] + params["ln_b"][0]
    Cmid = h.shape[-1]
    dw = params["dw_w"].reshape(3, 3, 1, Cmid)
    h = lax.conv_general_dilated(
        h, dw, window_strides=(1, 1), padding="SAME",
        dimension_numbers=("NHWC", "HWIO", "NHWC"), feature_group_count=Cmid,
    ) + params["dw_b"].reshape(-1)
    g = jnp.einsum("bhwc,cd->bhwd", h, params["w2"]) + params["b2"][0]
    g = 0.5 * g * (1.0 + lax.erf(g / jnp.sqrt(2.0)))
    gf = g.reshape(-1, g.shape[-1])
    gx = jnp.sqrt(jnp.sum(gf * gf, axis=0, keepdims=True))
    nx = gx / (gx.mean(-1, keepdims=True) + 1e-6)
    grn = (params["grn_g"][0] * (gf * nx) + params["grn_b"][0] + gf).reshape(g.shape)
    out = x + grn if residual else grn
    return jnp.transpose(out, (0, 3, 1, 2))


# ---------------------------------- main ----------------------------------- #

if __name__ == "__main__":
    key = jax.random.PRNGKey(0)
    B, H, W = 2, 16, 16
    in_channels, out_channels = 4, 4          # residual => in == out
    groups, inner_scale = 4, 2
    Cmid = inner_scale * groups               # inner_scale * groups = 8

    ks = jax.random.split(key, 11)
    params = {
        "w1":    0.3 * jax.random.normal(ks[0], (in_channels, Cmid), jnp.float32),
        "b1":    0.1 * jax.random.normal(ks[1], (1, Cmid), jnp.float32),
        "ln_g":  1.0 + 0.1 * jax.random.normal(ks[2], (1, Cmid), jnp.float32),
        "ln_b":  0.1 * jax.random.normal(ks[3], (1, Cmid), jnp.float32),
        "dw_w":  0.3 * jax.random.normal(ks[4], (9, Cmid), jnp.float32),        # 3x3 taps
        "dw_b":  0.1 * jax.random.normal(ks[5], (1, 1, 1, Cmid), jnp.float32),
        "w2":    0.3 * jax.random.normal(ks[6], (Cmid, out_channels), jnp.float32),
        "b2":    0.1 * jax.random.normal(ks[7], (1, out_channels), jnp.float32),
        "grn_g": 0.2 * jax.random.normal(ks[8], (1, out_channels), jnp.float32),
        "grn_b": 0.1 * jax.random.normal(ks[9], (1, out_channels), jnp.float32),
    }
    # PyTorch-style NCHW input: (B, Cin, H, W) = (2, 4, 16, 16)
    x = jax.random.normal(ks[10], (B, in_channels, H, W), jnp.float32)

    out = depthwise_block_forward(x, params, residual=True)
    out = jax.block_until_ready(out)

    ref = reference_forward(x, params, residual=True)
    max_err = float(jnp.max(jnp.abs(out - ref)))
    assert jnp.allclose(out, ref, rtol=1e-4, atol=1e-4), f"max_err={max_err}"
    print("KERNEL_OK")
</pallas_src>

<mosaic_0001>
module attributes {stable_mosaic.version = 11 : i64} {
  func.func @grn_residual_kernel(%arg0: i32, %arg1: memref<1x4x16x16xf32, #tpu.memory_space<vmem>>, %arg2: memref<1x4x16x16xf32, #tpu.memory_space<vmem>>, %arg3: memref<4xf32, #tpu.memory_space<smem>>, %arg4: memref<4xf32, #tpu.memory_space<smem>>, %arg5: memref<1x4x16x16xf32, #tpu.memory_space<vmem>>) attributes {dimension_semantics = [#tpu.dimension_semantics<parallel>], iteration_bounds = array<i64: 2>, scalar_prefetch = 0 : i64, scratch_operands = 0 : i64, tpu.core_type = #tpu.core_type<tc>, window_params = [{transform_indices = @transform_0, window_bounds = array<i64: 1, 4, 16, 16>}, {transform_indices = @transform_1, window_bounds = array<i64: 1, 4, 16, 16>}, {transform_indices = @transform_2, window_bounds = array<i64: 4>}, {transform_indices = @transform_3, window_bounds = array<i64: 4>}, {transform_indices = @transform_4, window_bounds = array<i64: 1, 4, 16, 16>}]} {
    %c0 = arith.constant 0 : index
    %c0_0 = arith.constant 0 : index
    %c0_1 = arith.constant 0 : index
    %c0_2 = arith.constant 0 : index
    %0 = vector.load %arg1[%c0, %c0_0, %c0_1, %c0_2] : memref<1x4x16x16xf32, #tpu.memory_space<vmem>>, vector<1x1x16x16xf32>
    %1 = vector.shape_cast %0 : vector<1x1x16x16xf32> to vector<16x16xf32>
    %c0_3 = arith.constant 0 : index
    %c0_4 = arith.constant 0 : index
    %c0_5 = arith.constant 0 : index
    %c0_6 = arith.constant 0 : index
    %2 = vector.load %arg2[%c0_3, %c0_4, %c0_5, %c0_6] : memref<1x4x16x16xf32, #tpu.memory_space<vmem>>, vector<1x1x16x16xf32>
    %3 = vector.shape_cast %2 : vector<1x1x16x16xf32> to vector<16x16xf32>
    %4 = arith.addf %3, %1 : vector<16x16xf32>
    %c0_7 = arith.constant 0 : index
    %5 = memref.load %arg3[%c0_7] : memref<4xf32, #tpu.memory_space<smem>>
    %6 = vector.broadcast %5 : f32 to vector<16x16xf32>
    %7 = arith.mulf %6, %1 : vector<16x16xf32>
    %8 = arith.addf %4, %7 : vector<16x16xf32>
    %c0_8 = arith.constant 0 : index
    %9 = memref.load %arg4[%c0_8] : memref<4xf32, #tpu.memory_space<smem>>
    %10 = vector.broadcast %9 : f32 to vector<16x16xf32>
    %11 = arith.addf %8, %10 : vector<16x16xf32>
    %c0_9 = arith.constant 0 : index
    %c0_10 = arith.constant 0 : index
    %c0_11 = arith.constant 0 : index
    %c0_12 = arith.constant 0 : index
    %12 = vector.load %arg5[%c0_9, %c0_10, %c0_11, %c0_12] : memref<1x4x16x16xf32, #tpu.memory_space<vmem>>, vector<1x1x16x16xf32>
    %13 = vector.shape_cast %12 : vector<1x1x16x16xf32> to vector<16x16xf32>
    %14 = vector.shape_cast %11 : vector<16x16xf32> to vector<1x1x16x16xf32>
    tpu.vector_store %arg5[%c0_9, %c0_10, %c0_11, %c0_12], %14 {strides = array<i32>} : memref<1x4x16x16xf32, #tpu.memory_space<vmem>>, vector<1x1x16x16xf32>,
    %c0_13 = arith.constant 0 : index
    %c1 = arith.constant 1 : index
    %c0_14 = arith.constant 0 : index
    %c0_15 = arith.constant 0 : index
    %15 = vector.load %arg1[%c0_13, %c1, %c0_14, %c0_15] : memref<1x4x16x16xf32, #tpu.memory_space<vmem>>, vector<1x1x16x16xf32>
    %16 = vector.shape_cast %15 : vector<1x1x16x16xf32> to vector<16x16xf32>
    %c0_16 = arith.constant 0 : index
    %c1_17 = arith.constant 1 : index
    %c0_18 = arith.constant 0 : index
    %c0_19 = arith.constant 0 : index
    %17 = vector.load %arg2[%c0_16, %c1_17, %c0_18, %c0_19] : memref<1x4x16x16xf32, #tpu.memory_space<vmem>>, vector<1x1x16x16xf32>
    %18 = vector.shape_cast %17 : vector<1x1x16x16xf32> to vector<16x16xf32>
    %19 = arith.addf %18, %16 : vector<16x16xf32>
    %c1_20 = arith.constant 1 : index
    %20 = memref.load %arg3[%c1_20] : memref<4xf32, #tpu.memory_space<smem>>
    %21 = vector.broadcast %20 : f32 to vector<16x16xf32>
    %22 = arith.mulf %21, %16 : vector<16x16xf32>
    %23 = arith.addf %19, %22 : vector<16x16xf32>
    %c1_21 = arith.constant 1 : index
    %24 = memref.load %arg4[%c1_21] : memref<4xf32, #tpu.memory_space<smem>>
    %25 = vector.broadcast %24 : f32 to vector<16x16xf32>
    %26 = arith.addf %23, %25 : vector<16x16xf32>
    %c0_22 = arith.constant 0 : index
    %c1_23 = arith.constant 1 : index
    %c0_24 = arith.constant 0 : index
    %c0_25 = arith.constant 0 : index
    %27 = vector.load %arg5[%c0_22, %c1_23, %c0_24, %c0_25] : memref<1x4x16x16xf32, #tpu.memory_space<vmem>>, vector<1x1x16x16xf32>
    %28 = vector.shape_cast %27 : vector<1x1x16x16xf32> to vector<16x16xf32>
    %29 = vector.shape_cast %26 : vector<16x16xf32> to vector<1x1x16x16xf32>
    tpu.vector_store %arg5[%c0_22, %c1_23, %c0_24, %c0_25], %29 {strides = array<i32>} : memref<1x4x16x16xf32, #tpu.memory_space<vmem>>, vector<1x1x16x16xf32>,
    %c0_26 = arith.constant 0 : index
    %c2 = arith.constant 2 : index
    %c0_27 = arith.constant 0 : index
    %c0_28 = arith.constant 0 : index
    %30 = vector.load %arg1[%c0_26, %c2, %c0_27, %c0_28] : memref<1x4x16x16xf32, #tpu.memory_space<vmem>>, vector<1x1x16x16xf32>
    %31 = vector.shape_cast %30 : vector<1x1x16x16xf32> to vector<16x16xf32>
    %c0_29 = arith.constant 0 : index
    %c2_30 = arith.constant 2 : index
    %c0_31 = arith.constant 0 : index
    %c0_32 = arith.constant 0 : index
    %32 = vector.load %arg2[%c0_29, %c2_30, %c0_31, %c0_32] : memref<1x4x16x16xf32, #tpu.memory_space<vmem>>, vector<1x1x16x16xf32>
    %33 = vector.shape_cast %32 : vector<1x1x16x16xf32> to vector<16x16xf32>
    %34 = arith.addf %33, %31 : vector<16x16xf32>
    %c2_33 = arith.constant 2 : index
    %35 = memref.load %arg3[%c2_33] : memref<4xf32, #tpu.memory_space<smem>>
    %36 = vector.broadcast %35 : f32 to vector<16x16xf32>
    %37 = arith.mulf %36, %31 : vector<16x16xf32>
    %38 = arith.addf %34, %37 : vector<16x16xf32>
    %c2_34 = arith.constant 2 : index
    %39 = memref.load %arg4[%c2_34] : memref<4xf32, #tpu.memory_space<smem>>
    %40 = vector.broadcast %39 : f32 to vector<16x16xf32>
    %41 = arith.addf %38, %40 : vector<16x16xf32>
    %c0_35 = arith.constant 0 : index
    %c2_36 = arith.constant 2 : index
    %c0_37 = arith.constant 0 : index
    %c0_38 = arith.constant 0 : index
    %42 = vector.load %arg5[%c0_35, %c2_36, %c0_37, %c0_38] : memref<1x4x16x16xf32, #tpu.memory_space<vmem>>, vector<1x1x16x16xf32>
    %43 = vector.shape_cast %42 : vector<1x1x16x16xf32> to vector<16x16xf32>
    %44 = vector.shape_cast %41 : vector<16x16xf32> to vector<1x1x16x16xf32>
    tpu.vector_store %arg5[%c0_35, %c2_36, %c0_37, %c0_38], %44 {strides = array<i32>} : memref<1x4x16x16xf32, #tpu.memory_space<vmem>>, vector<1x1x16x16xf32>,
    %c0_39 = arith.constant 0 : index
    %c3 = arith.constant 3 : index
    %c0_40 = arith.constant 0 : index
    %c0_41 = arith.constant 0 : index
    %45 = vector.load %arg1[%c0_39, %c3, %c0_40, %c0_41] : memref<1x4x16x16xf32, #tpu.memory_space<vmem>>, vector<1x1x16x16xf32>
    %46 = vector.shape_cast %45 : vector<1x1x16x16xf32> to vector<16x16xf32>
    %c0_42 = arith.constant 0 : index
    %c3_43 = arith.constant 3 : index
    %c0_44 = arith.constant 0 : index
    %c0_45 = arith.constant 0 : index
    %47 = vector.load %arg2[%c0_42, %c3_43, %c0_44, %c0_45] : memref<1x4x16x16xf32, #tpu.memory_space<vmem>>, vector<1x1x16x16xf32>
    %48 = vector.shape_cast %47 : vector<1x1x16x16xf32> to vector<16x16xf32>
    %49 = arith.addf %48, %46 : vector<16x16xf32>
    %c3_46 = arith.constant 3 : index
    %50 = memref.load %arg3[%c3_46] : memref<4xf32, #tpu.memory_space<smem>>
    %51 = vector.broadcast %50 : f32 to vector<16x16xf32>
    %52 = arith.mulf %51, %46 : vector<16x16xf32>
    %53 = arith.addf %49, %52 : vector<16x16xf32>
    %c3_47 = arith.constant 3 : index
    %54 = memref.load %arg4[%c3_47] : memref<4xf32, #tpu.memory_space<smem>>
    %55 = vector.broadcast %54 : f32 to vector<16x16xf32>
    %56 = arith.addf %53, %55 : vector<16x16xf32>
    %c0_48 = arith.constant 0 : index
    %c3_49 = arith.constant 3 : index
    %c0_50 = arith.constant 0 : index
    %c0_51 = arith.constant 0 : index
    %57 = vector.load %arg5[%c0_48, %c3_49, %c0_50, %c0_51] : memref<1x4x16x16xf32, #tpu.memory_space<vmem>>, vector<1x1x16x16xf32>
    %58 = vector.shape_cast %57 : vector<1x1x16x16xf32> to vector<16x16xf32>
    %59 = vector.shape_cast %56 : vector<16x16xf32> to vector<1x1x16x16xf32>
    tpu.vector_store %arg5[%c0_48, %c3_49, %c0_50, %c0_51], %59 {strides = array<i32>} : memref<1x4x16x16xf32, #tpu.memory_space<vmem>>, vector<1x1x16x16xf32>,
    return
  }
  func.func @transform_0(%arg0: i32) -> (i32, i32, i32, i32) {
    %c0_i32 = arith.constant 0 : i32
    %c0_i32_0 = arith.constant 0 : i32
    %c0_i32_1 = arith.constant 0 : i32
    %c0_i32_2 = arith.constant 0 : i32
    return %arg0, %c0_i32, %c0_i32_0, %c0_i32_1 : i32, i32, i32, i32
  }
  func.func @transform_1(%arg0: i32) -> (i32, i32, i32, i32) {
    %c0_i32 = arith.constant 0 : i32
    %c0_i32_0 = arith.constant 0 : i32
    %c0_i32_1 = arith.constant 0 : i32
    %c0_i32_2 = arith.constant 0 : i32
    return %arg0, %c0_i32, %c0_i32_0, %c0_i32_1 : i32, i32, i32, i32
  }
  func.func @transform_2(%arg0: i32) -> i32 {
    %c0_i32 = arith.constant 0 : i32
    %c0_i32_0 = arith.constant 0 : i32
    return %c0_i32 : i32
  }
  func.func @transform_3(%arg0: i32) -> i32 {
    %c0_i32 = arith.constant 0 : i32
    %c0_i32_0 = arith.constant 0 : i32
    return %c0_i32 : i32
  }
  func.func @transform_4(%arg0: i32) -> (i32, i32, i32, i32) {
    %c0_i32 = arith.constant 0 : i32
    %c0_i32_0 = arith.constant 0 : i32
    %c0_i32_1 = arith.constant 0 : i32
    %c0_i32_2 = arith.constant 0 : i32
    return %arg0, %c0_i32, %c0_i32_0, %c0_i32_1 : i32, i32, i32, i32
  }
}

module attributes {stable_mosaic.version = 11 : i64} {
  func.func @fused_pw_ln_dw_pw_gelu_kernel(%arg0: i32, %arg1: memref<1x4x16x16xf32, #tpu.memory_space<vmem>>, %arg2: memref<4x8xf32, #tpu.memory_space<smem>>, %arg3: memref<8xf32, #tpu.memory_space<smem>>, %arg4: memref<8xf32, #tpu.memory_space<smem>>, %arg5: memref<8xf32, #tpu.memory_space<smem>>, %arg6: memref<9x8xf32, #tpu.memory_space<smem>>, %arg7: memref<8xf32, #tpu.memory_space<smem>>, %arg8: memref<8x4xf32, #tpu.memory_space<smem>>, %arg9: memref<4xf32, #tpu.memory_space<smem>>, %arg10: memref<1x4x16x16xf32, #tpu.memory_space<vmem>>, %arg11: memref<1x4x16xf32, #tpu.memory_space<vmem>>) attributes {dimension_semantics = [#tpu.dimension_semantics<parallel>], iteration_bounds = array<i64: 2>, scalar_prefetch = 0 : i64, scratch_operands = 0 : i64, tpu.core_type = #tpu.core_type<tc>, window_params = [{transform_indices = @transform_0, window_bounds = array<i64: 1, 4, 16, 16>}, {transform_indices = @transform_1, window_bounds = array<i64: 4, 8>}, {transform_indices = @transform_2, window_bounds = array<i64: 8>}, {transform_indices = @transform_3, window_bounds = array<i64: 8>}, {transform_indices = @transform_4, window_bounds = array<i64: 8>}, {transform_indices = @transform_5, window_bounds = array<i64: 9, 8>}, {transform_indices = @transform_6, window_bounds = array<i64: 8>}, {transform_indices = @transform_7, window_bounds = array<i64: 8, 4>}, {transform_indices = @transform_8, window_bounds = array<i64: 4>}, {transform_indices = @transform_9, window_bounds = array<i64: 1, 4, 16, 16>}, {transform_indices = @transform_10, window_bounds = array<i64: 1, 4, 16>}]} {
    %0 = tpu.iota {dimensions = array<i32: 0>} : vector<16x16xi32>
    %1 = tpu.iota {dimensions = array<i32: 1>} : vector<16x16xi32>
    %c0 = arith.constant 0 : index
    %c0_0 = arith.constant 0 : index
    %c0_1 = arith.constant 0 : index
    %c0_2 = arith.constant 0 : index
    %2 = vector.load %arg1[%c0, %c0_0, %c0_1, %c0_2] : memref<1x4x16x16xf32, #tpu.memory_space<vmem>>, vector<1x1x16x16xf32>
    %3 = vector.shape_cast %2 : vector<1x1x16x16xf32> to vector<16x16xf32>
    %c0_3 = arith.constant 0 : index
    %c1 = arith.constant 1 : index
    %c0_4 = arith.constant 0 : index
    %c0_5 = arith.constant 0 : index
    %4 = vector.load %arg1[%c0_3, %c1, %c0_4, %c0_5] : memref<1x4x16x16xf32, #tpu.memory_space<vmem>>, vector<1x1x16x16xf32>
    %5 = vector.shape_cast %4 : vector<1x1x16x16xf32> to vector<16x16xf32>
    %c0_6 = arith.constant 0 : index
    %c2 = arith.constant 2 : index
    %c0_7 = arith.constant 0 : index
    %c0_8 = arith.constant 0 : index
    %6 = vector.load %arg1[%c0_6, %c2, %c0_7, %c0_8] : memref<1x4x16x16xf32, #tpu.memory_space<vmem>>, vector<1x1x16x16xf32>
    %7 = vector.shape_cast %6 : vector<1x1x16x16xf32> to vector<16x16xf32>
    %c0_9 = arith.constant 0 : index
    %c3 = arith.constant 3 : index
    %c0_10 = arith.constant 0 : index
    %c0_11 = arith.constant 0 : index
    %8 = vector.load %arg1[%c0_9, %c3, %c0_10, %c0_11] : memref<1x4x16x16xf32, #tpu.memory_space<vmem>>, vector<1x1x16x16xf32>
    %9 = vector.shape_cast %8 : vector<1x1x16x16xf32> to vector<16x16xf32>
    %cst = arith.constant 0.000000e+00 : f32
    %10 = vector.broadcast %cst : f32 to vector<16x16xf32>
    %c0_12 = arith.constant 0 : index
    %c0_13 = arith.constant 0 : index
    %11 = memref.load %arg2[%c0_12, %c0_13] : memref<4x8xf32, #tpu.memory_space<smem>>
    %12 = vector.broadcast %11 : f32 to vector<16x16xf32>
    %13 = arith.mulf %12, %3 : vector<16x16xf32>
    %14 = arith.addf %10, %13 : vector<16x16xf32>
    %c1_14 = arith.constant 1 : index
    %c0_15 = arith.constant 0 : index
    %15 = memref.load %arg2[%c1_14, %c0_15] : memref<4x8xf32, #tpu.memory_space<smem>>
    %16 = vector.broadcast %15 : f32 to vector<16x16xf32>
    %17 = arith.mulf %16, %5 : vector<16x16xf32>
    %18 = arith.addf %14, %17 : vector<16x16xf32>
    %c2_16 = arith.constant 2 : index
    %c0_17 = arith.constant 0 : index
    %19 = memref.load %arg2[%c2_16, %c0_17] : memref<4x8xf32, #tpu.memory_space<smem>>
    %20 = vector.broadcast %19 : f32 to vector<16x16xf32>
    %21 = arith.mulf %20, %7 : vector<16x16xf32>
    %22 = arith.addf %18, %21 : vector<16x16xf32>
    %c3_18 = arith.constant 3 : index
    %c0_19 = arith.constant 0 : index
    %23 = memref.load %arg2[%c3_18, %c0_19] : memref<4x8xf32, #tpu.memory_space<smem>>
    %24 = vector.broadcast %23 : f32 to vector<16x16xf32>
    %25 = arith.mulf %24, %9 : vector<16x16xf32>
    %26 = arith.addf %22, %25 : vector<16x16xf32>
    %c0_20 = arith.constant 0 : index
    %27 = memref.load %arg3[%c0_20] : memref<8xf32, #tpu.memory_space<smem>>
    %28 = vector.broadcast %27 : f32 to vector<16x16xf32>
    %29 = arith.addf %26, %28 : vector<16x16xf32>
    %cst_21 = arith.constant 0.000000e+00 : f32
    %30 = vector.broadcast %cst_21 : f32 to vector<16x16xf32>
    %c0_22 = arith.constant 0 : index
    %c1_23 = arith.constant 1 : index
    %31 = memref.load %arg2[%c0_22, %c1_23] : memref<4x8xf32, #tpu.memory_space<smem>>
    %32 = vector.broadcast %31 : f32 to vector<16x16xf32>
    %33 = arith.mulf %32, %3 : vector<16x16xf32>
    %34 = arith.addf %30, %33 : vector<16x16xf32>
    %c1_24 = arith.constant 1 : index
    %c1_25 = arith.constant 1 : index
    %35 = memref.load %arg2[%c1_24, %c1_25] : memref<4x8xf32, #tpu.memory_space<smem>>
    %36 = vector.broadcast %35 : f32 to vector<16x16xf32>
    %37 = arith.mulf %36, %5 : vector<16x16xf32>
    %38 = arith.addf %34, %37 : vector<16x16xf32>
    %c2_26 = arith.constant 2 : index
    %c1_27 = arith.constant 1 : index
    %39 = memref.load %arg2[%c2_26, %c1_27] : memref<4x8xf32, #tpu.memory_space<smem>>
    %40 = vector.broadcast %39 : f32 to vector<16x16xf32>
    %41 = arith.mulf %40, %7 : vector<16x16xf32>
    %42 = arith.addf %38, %41 : vector<16x16xf32>
    %c3_28 = arith.constant 3 : index
    %c1_29 = arith.constant 1 : index
    %43 = memref.load %arg2[%c3_28, %c1_29] : memref<4x8xf32, #tpu.memory_space<smem>>
    %44 = vector.broadcast %43 : f32 to vector<16x16xf32>
    %45 = arith.mulf %44, %9 : vector<16x16xf32>
    %46 = arith.addf %42, %45 : vector<16x16xf32>
    %c1_30 = arith.constant 1 : index
    %47 = memref.load %arg3[%c1_30] : memref<8xf32, #tpu.memory_space<smem>>
    %48 = vector.broadcast %47 : f32 to vector<16x16xf32>
    %49 = arith.addf %46, %48 : vector<16x16xf32>
    %cst_31 = arith.constant 0.000000e+00 : f32
    %50 = vector.broadcast %cst_31 : f32 to vector<16x16xf32>
    %c0_32 = arith.constant 0 : index
    %c2_33 = arith.constant 2 : index
    %51 = memref.load %arg2[%c0_32, %c2_33] : memref<4x8xf32, #tpu.memory_space<smem>>
    %52 = vector.broadcast %51 : f32 to vector<16x16xf32>
    %53 = arith.mulf %52, %3 : vector<16x16xf32>
    %54 = arith.addf %50, %53 : vector<16x16xf32>
    %c1_34 = arith.constant 1 : index
    %c2_35 = arith.constant 2 : index
    %55 = memref.load %arg2[%c1_34, %c2_35] : memref<4x8xf32, #tpu.memory_space<smem>>
    %56 = vector.broadcast %55 : f32 to vector<16x16xf32>
    %57 = arith.mulf %56, %5 : vector<16x16xf32>
    %58 = arith.addf %54, %57 : vector<16x16xf32>
    %c2_36 = arith.constant 2 : index
    %c2_37 = arith.constant 2 : index
    %59 = memref.load %arg2[%c2_36, %c2_37] : memref<4x8xf32, #tpu.memory_space<smem>>
    %60 = vector.broadcast %59 : f32 to vector<16x16xf32>
    %61 = arith.mulf %60, %7 : vector<16x16xf32>
    %62 = arith.addf %58, %61 : vector<16x16xf32>
    %c3_38 = arith.constant 3 : index
    %c2_39 = arith.constant 2 : index
    %63 = memref.load %arg2[%c3_38, %c2_39] : memref<4x8xf32, #tpu.memory_space<smem>>
    %64 = vector.broadcast %63 : f32 to vector<16x16xf32>
    %65 = arith.mulf %64, %9 : vector<16x16xf32>
    %66 = arith.addf %62, %65 : vector<16x16xf32>
    %c2_40 = arith.constant 2 : index
    %67 = memref.load %arg3[%c2_40] : memref<8xf32, #tpu.memory_space<smem>>
    %68 = vector.broadcast %67 : f32 to vector<16x16xf32>
    %69 = arith.addf %66, %68 : vector<16x16xf32>
    %cst_41 = arith.constant 0.000000e+00 : f32
    %70 = vector.broadcast %cst_41 : f32 to vector<16x16xf32>
    %c0_42 = arith.constant 0 : index
    %c3_43 = arith.constant 3 : index
    %71 = memref.load %arg2[%c0_42, %c3_43] : memref<4x8xf32, #tpu.memory_space<smem>>
    %72 = vector.broadcast %71 : f32 to vector<16x16xf32>
    %73 = arith.mulf %72, %3 : vector<16x16xf32>
    %74 = arith.addf %70, %73 : vector<16x16xf32>
    %c1_44 = arith.constant 1 : index
    %c3_45 = arith.constant 3 : index
    %75 = memref.load %arg2[%c1_44, %c3_45] : memref<4x8xf32, #tpu.memory_space<smem>>
    %76 = vector.broadcast %75 : f32 to vector<16x16xf32>
    %77 = arith.mulf %76, %5 : vector<16x16xf32>
    %78 = arith.addf %74, %77 : vector<16x16xf32>
    %c2_46 = arith.constant 2 : index
    %c3_47 = arith.constant 3 : index
    %79 = memref.load %arg2[%c2_46, %c3_47] : memref<4x8xf32, #tpu.memory_space<smem>>
    %80 = vector.broadcast %79 : f32 to vector<16x16xf32>
    %81 = arith.mulf %80, %7 : vector<16x16xf32>
    %82 = arith.addf %78, %81 : vector<16x16xf32>
    %c3_48 = arith.constant 3 : index
    %c3_49 = arith.constant 3 : index
    %83 = memref.load %arg2[%c3_48, %c3_49] : memref<4x8xf32, #tpu.memory_space<smem>>
    %84 = vector.broadcast %83 : f32 to vector<16x16xf32>
    %85 = arith.mulf %84, %9 : vector<16x16xf32>
    %86 = arith.addf %82, %85 : vector<16x16xf32>
    %c3_50 = arith.constant 3 : index
    %87 = memref.load %arg3[%c3_50] : memref<8xf32, #tpu.memory_space<smem>>
    %88 = vector.broadcast %87 : f32 to vector<16x16xf32>
    %89 = arith.addf %86, %88 : vector<16x16xf32>
    %cst_51 = arith.constant 0.000000e+00 : f32
    %90 = vector.broadcast %cst_51 : f32 to vector<16x16xf32>
    %c0_52 = arith.constant 0 : index
    %c4 = arith.constant 4 : index
    %91 = memref.load %arg2[%c0_52, %c4] : memref<4x8xf32, #tpu.memory_space<smem>>
    %92 = vector.broadcast %91 : f32 to vector<16x16xf32>
    %93 = arith.mulf %92, %3 : vector<16x16xf32>
    %94 = arith.addf %90, %93 : vector<16x16xf32>
    %c1_53 = arith.constant 1 : index
    %c4_54 = arith.constant 4 : index
    %95 = memref.load %arg2[%c1_53, %c4_54] : memref<4x8xf32, #tpu.memory_space<smem>>
    %96 = vector.broadcast %95 : f32 to vector<16x16xf32>
    %97 = arith.mulf %96, %5 : vector<16x16xf32>
    %98 = arith.addf %94, %97 : vector<16x16xf32>
    %c2_55 = arith.constant 2 : index
    %c4_56 = arith.constant 4 : index
    %99 = memref.load %arg2[%c2_55, %c4_56] : memref<4x8xf32, #tpu.memory_space<smem>>
    %100 = vector.broadcast %99 : f32 to vector<16x16xf32>
    %101 = arith.mulf %100, %7 : vector<16x16xf32>
    %102 = arith.addf %98, %101 : vector<16x16xf32>
    %c3_57 = arith.constant 3 : index
    %c4_58 = arith.constant 4 : index
    %103 = memref.load %arg2[%c3_57, %c4_58] : memref<4x8xf32, #tpu.memory_space<smem>>
    %104 = vector.broadcast %103 : f32 to vector<16x16xf32>
    %105 = arith.mulf %104, %9 : vector<16x16xf32>
    %106 = arith.addf %102, %105 : vector<16x16xf32>
    %c4_59 = arith.constant 4 : index
    %107 = memref.load %arg3[%c4_59] : memref<8xf32, #tpu.memory_space<smem>>
    %108 = vector.broadcast %107 : f32 to vector<16x16xf32>
    %109 = arith.addf %106, %108 : vector<16x16xf32>
    %cst_60 = arith.constant 0.000000e+00 : f32
    %110 = vector.broadcast %cst_60 : f32 to vector<16x16xf32>
    %c0_61 = arith.constant 0 : index
    %c5 = arith.constant 5 : index
    %111 = memref.load %arg2[%c0_61, %c5] : memref<4x8xf32, #tpu.memory_space<smem>>
    %112 = vector.broadcast %111 : f32 to vector<16x16xf32>
    %113 = arith.mulf %112, %3 : vector<16x16xf32>
    %114 = arith.addf %110, %113 : vector<16x16xf32>
    %c1_62 = arith.constant 1 : index
    %c5_63 = arith.constant 5 : index
    %115 = memref.load %arg2[%c1_62, %c5_63] : memref<4x8xf32, #tpu.memory_space<smem>>
    %116 = vector.broadcast %115 : f32 to vector<16x16xf32>
    %117 = arith.mulf %116, %5 : vector<16x16xf32>
    %118 = arith.addf %114, %117 : vector<16x16xf32>
    %c2_64 = arith.constant 2 : index
    %c5_65 = arith.constant 5 : index
    %119 = memref.load %arg2[%c2_64, %c5_65] : memref<4x8xf32, #tpu.memory_space<smem>>
    %120 = vector.broadcast %119 : f32 to vector<16x16xf32>
    %121 = arith.mulf %120, %7 : vector<16x16xf32>
    %122 = arith.addf %118, %121 : vector<16x16xf32>
    %c3_66 = arith.constant 3 : index
    %c5_67 = arith.constant 5 : index
    %123 = memref.load %arg2[%c3_66, %c5_67] : memref<4x8xf32, #tpu.memory_space<smem>>
    %124 = vector.broadcast %123 : f32 to vector<16x16xf32>
    %125 = arith.mulf %124, %9 : vector<16x16xf32>
    %126 = arith.addf %122, %125 : vector<16x16xf32>
    %c5_68 = arith.constant 5 : index
    %127 = memref.load %arg3[%c5_68] : memref<8xf32, #tpu.memory_space<smem>>
    %128 = vector.broadcast %127 : f32 to vector<16x16xf32>
    %129 = arith.addf %126, %128 : vector<16x16xf32>
    %cst_69 = arith.constant 0.000000e+00 : f32
    %130 = vector.broadcast %cst_69 : f32 to vector<16x16xf32>
    %c0_70 = arith.constant 0 : index
    %c6 = arith.constant 6 : index
    %131 = memref.load %arg2[%c0_70, %c6] : memref<4x8xf32, #tpu.memory_space<smem>>
    %132 = vector.broadcast %131 : f32 to vector<16x16xf32>
    %133 = arith.mulf %132, %3 : vector<16x16xf32>
    %134 = arith.addf %130, %133 : vector<16x16xf32>
    %c1_71 = arith.constant 1 : index
    %c6_72 = arith.constant 6 : index
    %135 = memref.load %arg2[%c1_71, %c6_72] : memref<4x8xf32, #tpu.memory_space<smem>>
    %136 = vector.broadcast %135 : f32 to vector<16x16xf32>
    %137 = arith.mulf %136, %5 : vector<16x16xf32>
    %138 = arith.addf %134, %137 : vector<16x16xf32>
    %c2_73 = arith.constant 2 : index
    %c6_74 = arith.constant 6 : index
    %139 = memref.load %arg2[%c2_73, %c6_74] : memref<4x8xf32, #tpu.memory_space<smem>>
    %140 = vector.broadcast %139 : f32 to vector<16x16xf32>
    %141 = arith.mulf %140, %7 : vector<16x16xf32>
    %142 = arith.addf %138, %141 : vector<16x16xf32>
    %c3_75 = arith.constant 3 : index
    %c6_76 = arith.constant 6 : index
    %143 = memref.load %arg2[%c3_75, %c6_76] : memref<4x8xf32, #tpu.memory_space<smem>>
    %144 = vector.broadcast %143 : f32 to vector<16x16xf32>
    %145 = arith.mulf %144, %9 : vector<16x16xf32>
    %146 = arith.addf %142, %145 : vector<16x16xf32>
    %c6_77 = arith.constant 6 : index
    %147 = memref.load %arg3[%c6_77] : memref<8xf32, #tpu.memory_space<smem>>
    %148 = vector.broadcast %147 : f32 to vector<16x16xf32>
    %149 = arith.addf %146, %148 : vector<16x16xf32>
    %cst_78 = arith.constant 0.000000e+00 : f32
    %150 = vector.broadcast %cst_78 : f32 to vector<16x16xf32>
    %c0_79 = arith.constant 0 : index
    %c7 = arith.constant 7 : index
    %151 = memref.load %arg2[%c0_79, %c7] : memref<4x8xf32, #tpu.memory_space<smem>>
    %152 = vector.broadcast %151 : f32 to vector<16x16xf32>
    %153 = arith.mulf %152, %3 : vector<16x16xf32>
    %154 = arith.addf %150, %153 : vector<16x16xf32>
    %c1_80 = arith.constant 1 : index
    %c7_81 = arith.constant 7 : index
    %155 = memref.load %arg2[%c1_80, %c7_81] : memref<4x8xf32, #tpu.memory_space<smem>>
    %156 = vector.broadcast %155 : f32 to vector<16x16xf32>
    %157 = arith.mulf %156, %5 : vector<16x16xf32>
    %158 = arith.addf %154, %157 : vector<16x16xf32>
    %c2_82 = arith.constant 2 : index
    %c7_83 = arith.constant 7 : index
    %159 = memref.load %arg2[%c2_82, %c7_83] : memref<4x8xf32, #tpu.memory_space<smem>>
    %160 = vector.broadcast %159 : f32 to vector<16x16xf32>
    %161 = arith.mulf %160, %7 : vector<16x16xf32>
    %162 = arith.addf %158, %161 : vector<16x16xf32>
    %c3_84 = arith.constant 3 : index
    %c7_85 = arith.constant 7 : index
    %163 = memref.load %arg2[%c3_84, %c7_85] : memref<4x8xf32, #tpu.memory_space<smem>>
    %164 = vector.broadcast %163 : f32 to vector<16x16xf32>
    %165 = arith.mulf %164, %9 : vector<16x16xf32>
    %166 = arith.addf %162, %165 : vector<16x16xf32>
    %c7_86 = arith.constant 7 : index
    %167 = memref.load %arg3[%c7_86] : memref<8xf32, #tpu.memory_space<smem>>
    %168 = vector.broadcast %167 : f32 to vector<16x16xf32>
    %169 = arith.addf %166, %168 : vector<16x16xf32>
    %170 = arith.addf %29, %49 : vector<16x16xf32>
    %171 = arith.addf %170, %69 : vector<16x16xf32>
    %172 = arith.addf %171, %89 : vector<16x16xf32>
    %173 = arith.addf %172, %109 : vector<16x16xf32>
    %174 = arith.addf %173, %129 : vector<16x16xf32>
    %175 = arith.addf %174, %149 : vector<16x16xf32>
    %176 = arith.addf %175, %169 : vector<16x16xf32>
    %cst_87 = arith.constant 1.250000e-01 : f32
    %177 = vector.broadcast %cst_87 : f32 to vector<16x16xf32>
    %178 = arith.mulf %176, %177 : vector<16x16xf32>
    %cst_88 = arith.constant 0.000000e+00 : f32
    %179 = vector.broadcast %cst_88 : f32 to vector<16x16xf32>
    %180 = arith.subf %29, %178 : vector<16x16xf32>
    %181 = arith.mulf %180, %180 : vector<16x16xf32>
    %182 = arith.addf %179, %181 : vector<16x16xf32>
    %183 = arith.subf %49, %178 : vector<16x16xf32>
    %184 = arith.mulf %183, %183 : vector<16x16xf32>
    %185 = arith.addf %182, %184 : vector<16x16xf32>
    %186 = arith.subf %69, %178 : vector<16x16xf32>
    %187 = arith.mulf %186, %186 : vector<16x16xf32>
    %188 = arith.addf %185, %187 : vector<16x16xf32>
    %189 = arith.subf %89, %178 : vector<16x16xf32>
    %190 = arith.mulf %189, %189 : vector<16x16xf32>
    %191 = arith.addf %188, %190 : vector<16x16xf32>
    %192 = arith.subf %109, %178 : vector<16x16xf32>
    %193 = arith.mulf %192, %192 : vector<16x16xf32>
    %194 = arith.addf %191, %193 : vector<16x16xf32>
    %195 = arith.subf %129, %178 : vector<16x16xf32>
    %196 = arith.mulf %195, %195 : vector<16x16xf32>
    %197 = arith.addf %194, %196 : vector<16x16xf32>
    %198 = arith.subf %149, %178 : vector<16x16xf32>
    %199 = arith.mulf %198, %198 : vector<16x16xf32>
    %200 = arith.addf %197, %199 : vector<16x16xf32>
    %201 = arith.subf %169, %178 : vector<16x16xf32>
    %202 = arith.mulf %201, %201 : vector<16x16xf32>
    %203 = arith.addf %200, %202 : vector<16x16xf32>
    %cst_89 = arith.constant 1.250000e-01 : f32
    %204 = vector.broadcast %cst_89 : f32 to vector<16x16xf32>
    %205 = arith.mulf %203, %204 : vector<16x16xf32>
    %cst_90 = arith.constant 9.99999997E-7 : f32
    %206 = vector.broadcast %cst_90 : f32 to vector<16x16xf32>
    %207 = arith.addf %205, %206 : vector<16x16xf32>
    %208 = math.rsqrt %207 : vector<16x16xf32>
    %209 = arith.subf %29, %178 : vector<16x16xf32>
    %210 = arith.mulf %209, %208 : vector<16x16xf32>
    %c0_91 = arith.constant 0 : index
    %211 = memref.load %arg4[%c0_91] : memref<8xf32, #tpu.memory_space<smem>>
    %212 = vector.broadcast %211 : f32 to vector<16x16xf32>
    %213 = arith.mulf %210, %212 : vector<16x16xf32>
    %c0_92 = arith.constant 0 : index
    %214 = memref.load %arg5[%c0_92] : memref<8xf32, #tpu.memory_space<smem>>
    %215 = vector.broadcast %214 : f32 to vector<16x16xf32>
    %216 = arith.addf %213, %215 : vector<16x16xf32>
    %217 = arith.subf %49, %178 : vector<16x16xf32>
    %218 = arith.mulf %217, %208 : vector<16x16xf32>
    %c1_93 = arith.constant 1 : index
    %219 = memref.load %arg4[%c1_93] : memref<8xf32, #tpu.memory_space<smem>>
    %220 = vector.broadcast %219 : f32 to vector<16x16xf32>
    %221 = arith.mulf %218, %220 : vector<16x16xf32>
    %c1_94 = arith.constant 1 : index
    %222 = memref.load %arg5[%c1_94] : memref<8xf32, #tpu.memory_space<smem>>
    %223 = vector.broadcast %222 : f32 to vector<16x16xf32>
    %224 = arith.addf %221, %223 : vector<16x16xf32>
    %225 = arith.subf %69, %178 : vector<16x16xf32>
    %226 = arith.mulf %225, %208 : vector<16x16xf32>
    %c2_95 = arith.constant 2 : index
    %227 = memref.load %arg4[%c2_95] : memref<8xf32, #tpu.memory_space<smem>>
    %228 = vector.broadcast %227 : f32 to vector<16x16xf32>
    %229 = arith.mulf %226, %228 : vector<16x16xf32>
    %c2_96 = arith.constant 2 : index
    %230 = memref.load %arg5[%c2_96] : memref<8xf32, #tpu.memory_space<smem>>
    %231 = vector.broadcast %230 : f32 to vector<16x16xf32>
    %232 = arith.addf %229, %231 : vector<16x16xf32>
    %233 = arith.subf %89, %178 : vector<16x16xf32>
    %234 = arith.mulf %233, %208 : vector<16x16xf32>
    %c3_97 = arith.constant 3 : index
    %235 = memref.load %arg4[%c3_97] : memref<8xf32, #tpu.memory_space<smem>>
    %236 = vector.broadcast %235 : f32 to vector<16x16xf32>
    %237 = arith.mulf %234, %236 : vector<16x16xf32>
    %c3_98 = arith.constant 3 : index
    %238 = memref.load %arg5[%c3_98] : memref<8xf32, #tpu.memory_space<smem>>
    %239 = vector.broadcast %238 : f32 to vector<16x16xf32>
    %240 = arith.addf %237, %239 : vector<16x16xf32>
    %241 = arith.subf %109, %178 : vector<16x16xf32>
    %242 = arith.mulf %241, %208 : vector<16x16xf32>
    %c4_99 = arith.constant 4 : index
    %243 = memref.load %arg4[%c4_99] : memref<8xf32, #tpu.memory_space<smem>>
    %244 = vector.broadcast %243 : f32 to vector<16x16xf32>
    %245 = arith.mulf %242, %244 : vector<16x16xf32>
    %c4_100 = arith.constant 4 : index
    %246 = memref.load %arg5[%c4_100] : memref<8xf32, #tpu.memory_space<smem>>
    %247 = vector.broadcast %246 : f32 to vector<16x16xf32>
    %248 = arith.addf %245, %247 : vector<16x16xf32>
    %249 = arith.subf %129, %178 : vector<16x16xf32>
    %250 = arith.mulf %249, %208 : vector<16x16xf32>
    %c5_101 = arith.constant 5 : index
    %251 = memref.load %arg4[%c5_101] : memref<8xf32, #tpu.memory_space<smem>>
    %252 = vector.broadcast %251 : f32 to vector<16x16xf32>
    %253 = arith.mulf %250, %252 : vector<16x16xf32>
    %c5_102 = arith.constant 5 : index
    %254 = memref.load %arg5[%c5_102] : memref<8xf32, #tpu.memory_space<smem>>
    %255 = vector.broadcast %254 : f32 to vector<16x16xf32>
    %256 = arith.addf %253, %255 : vector<16x16xf32>
    %257 = arith.subf %149, %178 : vector<16x16xf32>
    %258 = arith.mulf %257, %208 : vector<16x16xf32>
    %c6_103 = arith.constant 6 : index
    %259 = memref.load %arg4[%c6_103] : memref<8xf32, #tpu.memory_space<smem>>
    %260 = vector.broadcast %259 : f32 to vector<16x16xf32>
    %261 = arith.mulf %258, %260 : vector<16x16xf32>
    %c6_104 = arith.constant 6 : index
    %262 = memref.load %arg5[%c6_104] : memref<8xf32, #tpu.memory_space<smem>>
    %263 = vector.broadcast %262 : f32 to vector<16x16xf32>
    %264 = arith.addf %261, %263 : vector<16x16xf32>
    %265 = arith.subf %169, %178 : vector<16x16xf32>
    %266 = arith.mulf %265, %208 : vector<16x16xf32>
    %c7_105 = arith.constant 7 : index
    %267 = memref.load %arg4[%c7_105] : memref<8xf32, #tpu.memory_space<smem>>
    %268 = vector.broadcast %267 : f32 to vector<16x16xf32>
    %269 = arith.mulf %266, %268 : vector<16x16xf32>
    %c7_106 = arith.constant 7 : index
    %270 = memref.load %arg5[%c7_106] : memref<8xf32, #tpu.memory_space<smem>>
    %271 = vector.broadcast %270 : f32 to vector<16x16xf32>
    %272 = arith.addf %269, %271 : vector<16x16xf32>
    %c1_i32 = arith.constant 1 : i32
    %273 = tpu.dynamic_rotate %216 by %c1_i32 dim 1 : vector<16x16xf32>, i32 -> vector<16x16xf32>
    %c-1_i32 = arith.constant -1 : i32
    %274 = vector.broadcast %c-1_i32 : i32 to vector<16x16xi32>
    %275 = arith.addi %1, %274 : vector<16x16xi32>
    %c0_i32 = arith.constant 0 : i32
    %276 = vector.broadcast %c0_i32 : i32 to vector<16x16xi32>
    %277 = arith.cmpi sge, %275, %276 : vector<16x16xi32>
    %c-1_i32_107 = arith.constant -1 : i32
    %278 = vector.broadcast %c-1_i32_107 : i32 to vector<16x16xi32>
    %279 = arith.addi %1, %278 : vector<16x16xi32>
    %c16_i32 = arith.constant 16 : i32
    %280 = vector.broadcast %c16_i32 : i32 to vector<16x16xi32>
    %281 = arith.cmpi slt, %279, %280 : vector<16x16xi32>
    %282 = arith.andi %277, %281 : vector<16x16xi1>
    %cst_108 = arith.constant 0.000000e+00 : f32
    %283 = vector.broadcast %cst_108 : f32 to vector<16x16xf32>
    %284 = arith.select %282, %273, %283 : vector<16x16xi1>, vector<16x16xf32>
    %c15_i32 = arith.constant 15 : i32
    %285 = tpu.dynamic_rotate %216 by %c15_i32 dim 1 : vector<16x16xf32>, i32 -> vector<16x16xf32>
    %c1_i32_109 = arith.constant 1 : i32
    %286 = vector.broadcast %c1_i32_109 : i32 to vector<16x16xi32>
    %287 = arith.addi %1, %286 : vector<16x16xi32>
    %c0_i32_110 = arith.constant 0 : i32
    %288 = vector.broadcast %c0_i32_110 : i32 to vector<16x16xi32>
    %289 = arith.cmpi sge, %287, %288 : vector<16x16xi32>
    %c1_i32_111 = arith.constant 1 : i32
    %290 = vector.broadcast %c1_i32_111 : i32 to vector<16x16xi32>
    %291 = arith.addi %1, %290 : vector<16x16xi32>
    %c16_i32_112 = arith.constant 16 : i32
    %292 = vector.broadcast %c16_i32_112 : i32 to vector<16x16xi32>
    %293 = arith.cmpi slt, %291, %292 : vector<16x16xi32>
    %294 = arith.andi %289, %293 : vector<16x16xi1>
    %cst_113 = arith.constant 0.000000e+00 : f32
    %295 = vector.broadcast %cst_113 : f32 to vector<16x16xf32>
    %296 = arith.select %294, %285, %295 : vector<16x16xi1>, vector<16x16xf32>
    %cst_114 = arith.constant 0.000000e+00 : f32
    %297 = vector.broadcast %cst_114 : f32 to vector<16x16xf32>
    %c1_i32_115 = arith.constant 1 : i32
    %298 = tpu.dynamic_rotate %284 by %c1_i32_115 dim 0 : vector<16x16xf32>, i32 -> vector<16x16xf32>
    %c-1_i32_116 = arith.constant -1 : i32
    %299 = vector.broadcast %c-1_i32_116 : i32 to vector<16x16xi32>
    %300 = arith.addi %0, %299 : vector<16x16xi32>
    %c0_i32_117 = arith.constant 0 : i32
    %301 = vector.broadcast %c0_i32_117 : i32 to vector<16x16xi32>
    %302 = arith.cmpi sge, %300, %301 : vector<16x16xi32>
    %c-1_i32_118 = arith.constant -1 : i32
    %303 = vector.broadcast %c-1_i32_118 : i32 to vector<16x16xi32>
    %304 = arith.addi %0, %303 : vector<16x16xi32>
    %c16_i32_119 = arith.constant 16 : i32
    %305 = vector.broadcast %c16_i32_119 : i32 to vector<16x16xi32>
    %306 = arith.cmpi slt, %304, %305 : vector<16x16xi32>
    %307 = arith.andi %302, %306 : vector<16x16xi1>
    %cst_120 = arith.constant 0.000000e+00 : f32
    %308 = vector.broadcast %cst_120 : f32 to vector<16x16xf32>
    %309 = arith.select %307, %298, %308 : vector<16x16xi1>, vector<16x16xf32>
    %c0_121 = arith.constant 0 : index
    %c0_122 = arith.constant 0 : index
    %310 = memref.load %arg6[%c0_121, %c0_122] : memref<9x8xf32, #tpu.memory_space<smem>>
    %311 = vector.broadcast %310 : f32 to vector<16x16xf32>
    %312 = arith.mulf %311, %309 : vector<16x16xf32>
    %313 = arith.addf %297, %312 : vector<16x16xf32>
    %c1_i32_123 = arith.constant 1 : i32
    %314 = tpu.dynamic_rotate %216 by %c1_i32_123 dim 0 : vector<16x16xf32>, i32 -> vector<16x16xf32>
    %c-1_i32_124 = arith.constant -1 : i32
    %315 = vector.broadcast %c-1_i32_124 : i32 to vector<16x16xi32>
    %316 = arith.addi %0, %315 : vector<16x16xi32>
    %c0_i32_125 = arith.constant 0 : i32
    %317 = vector.broadcast %c0_i32_125 : i32 to vector<16x16xi32>
    %318 = arith.cmpi sge, %316, %317 : vector<16x16xi32>
    %c-1_i32_126 = arith.constant -1 : i32
    %319 = vector.broadcast %c-1_i32_126 : i32 to vector<16x16xi32>
    %320 = arith.addi %0, %319 : vector<16x16xi32>
    %c16_i32_127 = arith.constant 16 : i32
    %321 = vector.broadcast %c16_i32_127 : i32 to vector<16x16xi32>
    %322 = arith.cmpi slt, %320, %321 : vector<16x16xi32>
    %323 = arith.andi %318, %322 : vector<16x16xi1>
    %cst_128 = arith.constant 0.000000e+00 : f32
    %324 = vector.broadcast %cst_128 : f32 to vector<16x16xf32>
    %325 = arith.select %323, %314, %324 : vector<16x16xi1>, vector<16x16xf32>
    %c1_129 = arith.constant 1 : index
    %c0_130 = arith.constant 0 : index
    %326 = memref.load %arg6[%c1_129, %c0_130] : memref<9x8xf32, #tpu.memory_space<smem>>
    %327 = vector.broadcast %326 : f32 to vector<16x16xf32>
    %328 = arith.mulf %327, %325 : vector<16x16xf32>
    %329 = arith.addf %313, %328 : vector<16x16xf32>
    %c1_i32_131 = arith.constant 1 : i32
    %330 = tpu.dynamic_rotate %296 by %c1_i32_131 dim 0 : vector<16x16xf32>, i32 -> vector<16x16xf32>
    %c-1_i32_132 = arith.constant -1 : i32
    %331 = vector.broadcast %c-1_i32_132 : i32 to vector<16x16xi32>
    %332 = arith.addi %0, %331 : vector<16x16xi32>
    %c0_i32_133 = arith.constant 0 : i32
    %333 = vector.broadcast %c0_i32_133 : i32 to vector<16x16xi32>
    %334 = arith.cmpi sge, %332, %333 : vector<16x16xi32>
    %c-1_i32_134 = arith.constant -1 : i32
    %335 = vector.broadcast %c-1_i32_134 : i32 to vector<16x16xi32>
    %336 = arith.addi %0, %335 : vector<16x16xi32>
    %c16_i32_135 = arith.constant 16 : i32
    %337 = vector.broadcast %c16_i32_135 : i32 to vector<16x16xi32>
    %338 = arith.cmpi slt, %336, %337 : vector<16x16xi32>
    %339 = arith.andi %334, %338 : vector<16x16xi1>
    %cst_136 = arith.constant 0.000000e+00 : f32
    %340 = vector.broadcast %cst_136 : f32 to vector<16x16xf32>
    %341 = arith.select %339, %330, %340 : vector<16x16xi1>, vector<16x16xf32>
    %c2_137 = arith.constant 2 : index
    %c0_138 = arith.constant 0 : index
    %342 = memref.load %arg6[%c2_137, %c0_138] : memref<9x8xf32, #tpu.memory_space<smem>>
    %343 = vector.broadcast %342 : f32 to vector<16x16xf32>
    %344 = arith.mulf %343, %341 : vector<16x16xf32>
    %345 = arith.addf %329, %344 : vector<16x16xf32>
    %c3_139 = arith.constant 3 : index
    %c0_140 = arith.constant 0 : index
    %346 = memref.load %arg6[%c3_139, %c0_140] : memref<9x8xf32, #tpu.memory_space<smem>>
    %347 = vector.broadcast %346 : f32 to vector<16x16xf32>
    %348 = arith.mulf %347, %284 : vector<16x16xf32>
    %349 = arith.addf %345, %348 : vector<16x16xf32>
    %c4_141 = arith.constant 4 : index
    %c0_142 = arith.constant 0 : index
    %350 = memref.load %arg6[%c4_141, %c0_142] : memref<9x8xf32, #tpu.memory_space<smem>>
    %351 = vector.broadcast %350 : f32 to vector<16x16xf32>
    %352 = arith.mulf %351, %216 : vector<16x16xf32>
    %353 = arith.addf %349, %352 : vector<16x16xf32>
    %c5_143 = arith.constant 5 : index
    %c0_144 = arith.constant 0 : index
    %354 = memref.load %arg6[%c5_143, %c0_144] : memref<9x8xf32, #tpu.memory_space<smem>>
    %355 = vector.broadcast %354 : f32 to vector<16x16xf32>
    %356 = arith.mulf %355, %296 : vector<16x16xf32>
    %357 = arith.addf %353, %356 : vector<16x16xf32>
    %c15_i32_145 = arith.constant 15 : i32
    %358 = tpu.dynamic_rotate %284 by %c15_i32_145 dim 0 : vector<16x16xf32>, i32 -> vector<16x16xf32>
    %c1_i32_146 = arith.constant 1 : i32
    %359 = vector.broadcast %c1_i32_146 : i32 to vector<16x16xi32>
    %360 = arith.addi %0, %359 : vector<16x16xi32>
    %c0_i32_147 = arith.constant 0 : i32
    %361 = vector.broadcast %c0_i32_147 : i32 to vector<16x16xi32>
    %362 = arith.cmpi sge, %360, %361 : vector<16x16xi32>
    %c1_i32_148 = arith.constant 1 : i32
    %363 = vector.broadcast %c1_i32_148 : i32 to vector<16x16xi32>
    %364 = arith.addi %0, %363 : vector<16x16xi32>
    %c16_i32_149 = arith.constant 16 : i32
    %365 = vector.broadcast %c16_i32_149 : i32 to vector<16x16xi32>
    %366 = arith.cmpi slt, %364, %365 : vector<16x16xi32>
    %367 = arith.andi %362, %366 : vector<16x16xi1>
    %cst_150 = arith.constant 0.000000e+00 : f32
    %368 = vector.broadcast %cst_150 : f32 to vector<16x16xf32>
    %369 = arith.select %367, %358, %368 : vector<16x16xi1>, vector<16x16xf32>
    %c6_151 = arith.constant 6 : index
    %c0_152 = arith.constant 0 : index
    %370 = memref.load %arg6[%c6_151, %c0_152] : memref<9x8xf32, #tpu.memory_space<smem>>
    %371 = vector.broadcast %370 : f32 to vector<16x16xf32>
    %372 = arith.mulf %371, %369 : vector<16x16xf32>
    %373 = arith.addf %357, %372 : vector<16x16xf32>
    %c15_i32_153 = arith.constant 15 : i32
    %374 = tpu.dynamic_rotate %216 by %c15_i32_153 dim 0 : vector<16x16xf32>, i32 -> vector<16x16xf32>
    %c1_i32_154 = arith.constant 1 : i32
    %375 = vector.broadcast %c1_i32_154 : i32 to vector<16x16xi32>
    %376 = arith.addi %0, %375 : vector<16x16xi32>
    %c0_i32_155 = arith.constant 0 : i32
    %377 = vector.broadcast %c0_i32_155 : i32 to vector<16x16xi32>
    %378 = arith.cmpi sge, %376, %377 : vector<16x16xi32>
    %c1_i32_156 = arith.constant 1 : i32
    %379 = vector.broadcast %c1_i32_156 : i32 to vector<16x16xi32>
    %380 = arith.addi %0, %379 : vector<16x16xi32>
    %c16_i32_157 = arith.constant 16 : i32
    %381 = vector.broadcast %c16_i32_157 : i32 to vector<16x16xi32>
    %382 = arith.cmpi slt, %380, %381 : vector<16x16xi32>
    %383 = arith.andi %378, %382 : vector<16x16xi1>
    %cst_158 = arith.constant 0.000000e+00 : f32
    %384 = vector.broadcast %cst_158 : f32 to vector<16x16xf32>
    %385 = arith.select %383, %374, %384 : vector<16x16xi1>, vector<16x16xf32>
    %c7_159 = arith.constant 7 : index
    %c0_160 = arith.constant 0 : index
    %386 = memref.load %arg6[%c7_159, %c0_160] : memref<9x8xf32, #tpu.memory_space<smem>>
    %387 = vector.broadcast %386 : f32 to vector<16x16xf32>
    %388 = arith.mulf %387, %385 : vector<16x16xf32>
    %389 = arith.addf %373, %388 : vector<16x16xf32>
    %c15_i32_161 = arith.constant 15 : i32
    %390 = tpu.dynamic_rotate %296 by %c15_i32_161 dim 0 : vector<16x16xf32>, i32 -> vector<16x16xf32>
    %c1_i32_162 = arith.constant 1 : i32
    %391 = vector.broadcast %c1_i32_162 : i32 to vector<16x16xi32>
    %392 = arith.addi %0, %391 : vector<16x16xi32>
    %c0_i32_163 = arith.constant 0 : i32
    %393 = vector.broadcast %c0_i32_163 : i32 to vector<16x16xi32>
    %394 = arith.cmpi sge, %392, %393 : vector<16x16xi32>
    %c1_i32_164 = arith.constant 1 : i32
    %395 = vector.broadcast %c1_i32_164 : i32 to vector<16x16xi32>
    %396 = arith.addi %0, %395 : vector<16x16xi32>
    %c16_i32_165 = arith.constant 16 : i32
    %397 = vector.broadcast %c16_i32_165 : i32 to vector<16x16xi32>
    %398 = arith.cmpi slt, %396, %397 : vector<16x16xi32>
    %399 = arith.andi %394, %398 : vector<16x16xi1>
    %cst_166 = arith.constant 0.000000e+00 : f32
    %400 = vector.broadcast %cst_166 : f32 to vector<16x16xf32>
    %401 = arith.select %399, %390, %400 : vector<16x16xi1>, vector<16x16xf32>
    %c8 = arith.constant 8 : index
    %c0_167 = arith.constant 0 : index
    %402 = memref.load %arg6[%c8, %c0_167] : memref<9x8xf32, #tpu.memory_space<smem>>
    %403 = vector.broadcast %402 : f32 to vector<16x16xf32>
    %404 = arith.mulf %403, %401 : vector<16x16xf32>
    %405 = arith.addf %389, %404 : vector<16x16xf32>
    %c0_168 = arith.constant 0 : index
    %406 = memref.load %arg7[%c0_168] : memref<8xf32, #tpu.memory_space<smem>>
    %407 = vector.broadcast %406 : f32 to vector<16x16xf32>
    %408 = arith.addf %405, %407 : vector<16x16xf32>
    %c1_i32_169 = arith.constant 1 : i32
    %409 = tpu.dynamic_rotate %224 by %c1_i32_169 dim 1 : vector<16x16xf32>, i32 -> vector<16x16xf32>
    %c-1_i32_170 = arith.constant -1 : i32
    %410 = vector.broadcast %c-1_i32_170 : i32 to vector<16x16xi32>
    %411 = arith.addi %1, %410 : vector<16x16xi32>
    %c0_i32_171 = arith.constant 0 : i32
    %412 = vector.broadcast %c0_i32_171 : i32 to vector<16x16xi32>
    %413 = arith.cmpi sge, %411, %412 : vector<16x16xi32>
    %c-1_i32_172 = arith.constant -1 : i32
    %414 = vector.broadcast %c-1_i32_172 : i32 to vector<16x16xi32>
    %415 = arith.addi %1, %414 : vector<16x16xi32>
    %c16_i32_173 = arith.constant 16 : i32
    %416 = vector.broadcast %c16_i32_173 : i32 to vector<16x16xi32>
    %417 = arith.cmpi slt, %415, %416 : vector<16x16xi32>
    %418 = arith.andi %413, %417 : vector<16x16xi1>
    %cst_174 = arith.constant 0.000000e+00 : f32
    %419 = vector.broadcast %cst_174 : f32 to vector<16x16xf32>
    %420 = arith.select %418, %409, %419 : vector<16x16xi1>, vector<16x16xf32>
    %c15_i32_175 = arith.constant 15 : i32
    %421 = tpu.dynamic_rotate %224 by %c15_i32_175 dim 1 : vector<16x16xf32>, i32 -> vector<16x16xf32>
    %c1_i32_176 = arith.constant 1 : i32
    %422 = vector.broadcast %c1_i32_176 : i32 to vector<16x16xi32>
    %423 = arith.addi %1, %422 : vector<16x16xi32>
    %c0_i32_177 = arith.constant 0 : i32
    %424 = vector.broadcast %c0_i32_177 : i32 to vector<16x16xi32>
    %425 = arith.cmpi sge, %423, %424 : vector<16x16xi32>
    %c1_i32_178 = arith.constant 1 : i32
    %426 = vector.broadcast %c1_i32_178 : i32 to vector<16x16xi32>
    %427 = arith.addi %1, %426 : vector<16x16xi32>
    %c16_i32_179 = arith.constant 16 : i32
    %428 = vector.broadcast %c16_i32_179 : i32 to vector<16x16xi32>
    %429 = arith.cmpi slt, %427, %428 : vector<16x16xi32>
    %430 = arith.andi %425, %429 : vector<16x16xi1>
    %cst_180 = arith.constant 0.000000e+00 : f32
    %431 = vector.broadcast %cst_180 : f32 to vector<16x16xf32>
    %432 = arith.select %430, %421, %431 : vector<16x16xi1>, vector<16x16xf32>
    %cst_181 = arith.constant 0.000000e+00 : f32
    %433 = vector.broadcast %cst_181 : f32 to vector<16x16xf32>
    %c1_i32_182 = arith.constant 1 : i32
    %434 = tpu.dynamic_rotate %420 by %c1_i32_182 dim 0 : vector<16x16xf32>, i32 -> vector<16x16xf32>
    %c-1_i32_183 = arith.constant -1 : i32
    %435 = vector.broadcast %c-1_i32_183 : i32 to vector<16x16xi32>
    %436 = arith.addi %0, %435 : vector<16x16xi32>
    %c0_i32_184 = arith.constant 0 : i32
    %437 = vector.broadcast %c0_i32_184 : i32 to vector<16x16xi32>
    %438 = arith.cmpi sge, %436, %437 : vector<16x16xi32>
    %c-1_i32_185 = arith.constant -1 : i32
    %439 = vector.broadcast %c-1_i32_185 : i32 to vector<16x16xi32>
    %440 = arith.addi %0, %439 : vector<16x16xi32>
    %c16_i32_186 = arith.constant 16 : i32
    %441 = vector.broadcast %c16_i32_186 : i32 to vector<16x16xi32>
    %442 = arith.cmpi slt, %440, %441 : vector<16x16xi32>
    %443 = arith.andi %438, %442 : vector<16x16xi1>
    %cst_187 = arith.constant 0.000000e+00 : f32
    %444 = vector.broadcast %cst_187 : f32 to vector<16x16xf32>
    %445 = arith.select %443, %434, %444 : vector<16x16xi1>, vector<16x16xf32>
    %c0_188 = arith.constant 0 : index
    %c1_189 = arith.constant 1 : index
    %446 = memref.load %arg6[%c0_188, %c1_189] : memref<9x8xf32, #tpu.memory_space<smem>>
    %447 = vector.broadcast %446 : f32 to vector<16x16xf32>
    %448 = arith.mulf %447, %445 : vector<16x16xf32>
    %449 = arith.addf %433, %448 : vector<16x16xf32>
    %c1_i32_190 = arith.constant 1 : i32
    %450 = tpu.dynamic_rotate %224 by %c1_i32_190 dim 0 : vector<16x16xf32>, i32 -> vector<16x16xf32>
    %c-1_i32_191 = arith.constant -1 : i32
    %451 = vector.broadcast %c-1_i32_191 : i32 to vector<16x16xi32>
    %452 = arith.addi %0, %451 : vector<16x16xi32>
    %c0_i32_192 = arith.constant 0 : i32
    %453 = vector.broadcast %c0_i32_192 : i32 to vector<16x16xi32>
    %454 = arith.cmpi sge, %452, %453 : vector<16x16xi32>
    %c-1_i32_193 = arith.constant -1 : i32
    %455 = vector.broadcast %c-1_i32_193 : i32 to vector<16x16xi32>
    %456 = arith.addi %0, %455 : vector<16x16xi32>
    %c16_i32_194 = arith.constant 16 : i32
    %457 = vector.broadcast %c16_i32_194 : i32 to vector<16x16xi32>
    %458 = arith.cmpi slt, %456, %457 : vector<16x16xi32>
    %459 = arith.andi %454, %458 : vector<16x16xi1>
    %cst_195 = arith.constant 0.000000e+00 : f32
    %460 = vector.broadcast %cst_195 : f32 to vector<16x16xf32>
    %461 = arith.select %459, %450, %460 : vector<16x16xi1>, vector<16x16xf32>
    %c1_196 = arith.constant 1 : index
    %c1_197 = arith.constant 1 : index
    %462 = memref.load %arg6[%c1_196, %c1_197] : memref<9x8xf32, #tpu.memory_space<smem>>
    %463 = vector.broadcast %462 : f32 to vector<16x16xf32>
    %464 = arith.mulf %463, %461 : vector<16x16xf32>
    %465 = arith.addf %449, %464 : vector<16x16xf32>
    %c1_i32_198 = arith.constant 1 : i32
    %466 = tpu.dynamic_rotate %432 by %c1_i32_198 dim 0 : vector<16x16xf32>, i32 -> vector<16x16xf32>
    %c-1_i32_199 = arith.constant -1 : i32
    %467 = vector.broadcast %c-1_i32_199 : i32 to vector<16x16xi32>
    %468 = arith.addi %0, %467 : vector<16x16xi32>
    %c0_i32_200 = arith.constant 0 : i32
    %469 = vector.broadcast %c0_i32_200 : i32 to vector<16x16xi32>
    %470 = arith.cmpi sge, %468, %469 : vector<16x16xi32>
    %c-1_i32_201 = arith.constant -1 : i32
    %471 = vector.broadcast %c-1_i32_201 : i32 to vector<16x16xi32>
    %472 = arith.addi %0, %471 : vector<16x16xi32>
    %c16_i32_202 = arith.constant 16 : i32
    %473 = vector.broadcast %c16_i32_202 : i32 to vector<16x16xi32>
    %474 = arith.cmpi slt, %472, %473 : vector<16x16xi32>
    %475 = arith.andi %470, %474 : vector<16x16xi1>
    %cst_203 = arith.constant 0.000000e+00 : f32
    %476 = vector.broadcast %cst_203 : f32 to vector<16x16xf32>
    %477 = arith.select %475, %466, %476 : vector<16x16xi1>, vector<16x16xf32>
    %c2_204 = arith.constant 2 : index
    %c1_205 = arith.constant 1 : index
    %478 = memref.load %arg6[%c2_204, %c1_205] : memref<9x8xf32, #tpu.memory_space<smem>>
    %479 = vector.broadcast %478 : f32 to vector<16x16xf32>
    %480 = arith.mulf %479, %477 : vector<16x16xf32>
    %481 = arith.addf %465, %480 : vector<16x16xf32>
    %c3_206 = arith.constant 3 : index
    %c1_207 = arith.constant 1 : index
    %482 = memref.load %arg6[%c3_206, %c1_207] : memref<9x8xf32, #tpu.memory_space<smem>>
    %483 = vector.broadcast %482 : f32 to vector<16x16xf32>
    %484 = arith.mulf %483, %420 : vector<16x16xf32>
    %485 = arith.addf %481, %484 : vector<16x16xf32>
    %c4_208 = arith.constant 4 : index
    %c1_209 = arith.constant 1 : index
    %486 = memref.load %arg6[%c4_208, %c1_209] : memref<9x8xf32, #tpu.memory_space<smem>>
    %487 = vector.broadcast %486 : f32 to vector<16x16xf32>
    %488 = arith.mulf %487, %224 : vector<16x16xf32>
    %489 = arith.addf %485, %488 : vector<16x16xf32>
    %c5_210 = arith.constant 5 : index
    %c1_211 = arith.constant 1 : index
    %490 = memref.load %arg6[%c5_210, %c1_211] : memref<9x8xf32, #tpu.memory_space<smem>>
    %491 = vector.broadcast %490 : f32 to vector<16x16xf32>
    %492 = arith.mulf %491, %432 : vector<16x16xf32>
    %493 = arith.addf %489, %492 : vector<16x16xf32>
    %c15_i32_212 = arith.constant 15 : i32
    %494 = tpu.dynamic_rotate %420 by %c15_i32_212 dim 0 : vector<16x16xf32>, i32 -> vector<16x16xf32>
    %c1_i32_213 = arith.constant 1 : i32
    %495 = vector.broadcast %c1_i32_213 : i32 to vector<16x16xi32>
    %496 = arith.addi %0, %495 : vector<16x16xi32>
    %c0_i32_214 = arith.constant 0 : i32
    %497 = vector.broadcast %c0_i32_214 : i32 to vector<16x16xi32>
    %498 = arith.cmpi sge, %496, %497 : vector<16x16xi32>
    %c1_i32_215 = arith.constant 1 : i32
    %499 = vector.broadcast %c1_i32_215 : i32 to vector<16x16xi32>
    %500 = arith.addi %0, %499 : vector<16x16xi32>
    %c16_i32_216 = arith.constant 16 : i32
    %501 = vector.broadcast %c16_i32_216 : i32 to vector<16x16xi32>
    %502 = arith.cmpi slt, %500, %501 : vector<16x16xi32>
    %503 = arith.andi %498, %502 : vector<16x16xi1>
    %cst_217 = arith.constant 0.000000e+00 : f32
    %504 = vector.broadcast %cst_217 : f32 to vector<16x16xf32>
    %505 = arith.select %503, %494, %504 : vector<16x16xi1>, vector<16x16xf32>
    %c6_218 = arith.constant 6 : index
    %c1_219 = arith.constant 1 : index
    %506 = memref.load %arg6[%c6_218, %c1_219] : memref<9x8xf32, #tpu.memory_space<smem>>
    %507 = vector.broadcast %506 : f32 to vector<16x16xf32>
    %508 = arith.mulf %507, %505 : vector<16x16xf32>
    %509 = arith.addf %493, %508 : vector<16x16xf32>
    %c15_i32_220 = arith.constant 15 : i32
    %510 = tpu.dynamic_rotate %224 by %c15_i32_220 dim 0 : vector<16x16xf32>, i32 -> vector<16x16xf32>
    %c1_i32_221 = arith.constant 1 : i32
    %511 = vector.broadcast %c1_i32_221 : i32 to vector<16x16xi32>
    %512 = arith.addi %0, %511 : vector<16x16xi32>
    %c0_i32_222 = arith.constant 0 : i32
    %513 = vector.broadcast %c0_i32_222 : i32 to vector<16x16xi32>
    %514 = arith.cmpi sge, %512, %513 : vector<16x16xi32>
    %c1_i32_223 = arith.constant 1 : i32
    %515 = vector.broadcast %c1_i32_223 : i32 to vector<16x16xi32>
    %516 = arith.addi %0, %515 : vector<16x16xi32>
    %c16_i32_224 = arith.constant 16 : i32
    %517 = vector.broadcast %c16_i32_224 : i32 to vector<16x16xi32>
    %518 = arith.cmpi slt, %516, %517 : vector<16x16xi32>
    %519 = arith.andi %514, %518 : vector<16x16xi1>
    %cst_225 = arith.constant 0.000000e+00 : f32
    %520 = vector.broadcast %cst_225 : f32 to vector<16x16xf32>
    %521 = arith.select %519, %510, %520 : vector<16x16xi1>, vector<16x16xf32>
    %c7_226 = arith.constant 7 : index
    %c1_227 = arith.constant 1 : index
    %522 = memref.load %arg6[%c7_226, %c1_227] : memref<9x8xf32, #tpu.memory_space<smem>>
    %523 = vector.broadcast %522 : f32 to vector<16x16xf32>
    %524 = arith.mulf %523, %521 : vector<16x16xf32>
    %525 = arith.addf %509, %524 : vector<16x16xf32>
    %c15_i32_228 = arith.constant 15 : i32
    %526 = tpu.dynamic_rotate %432 by %c15_i32_228 dim 0 : vector<16x16xf32>, i32 -> vector<16x16xf32>
    %c1_i32_229 = arith.constant 1 : i32
    %527 = vector.broadcast %c1_i32_229 : i32 to vector<16x16xi32>
    %528 = arith.addi %0, %527 : vector<16x16xi32>
    %c0_i32_230 = arith.constant 0 : i32
    %529 = vector.broadcast %c0_i32_230 : i32 to vector<16x16xi32>
    %530 = arith.cmpi sge, %528, %529 : vector<16x16xi32>
    %c1_i32_231 = arith.constant 1 : i32
    %531 = vector.broadcast %c1_i32_231 : i32 to vector<16x16xi32>
    %532 = arith.addi %0, %531 : vector<16x16xi32>
    %c16_i32_232 = arith.constant 16 : i32
    %533 = vector.broadcast %c16_i32_232 : i32 to vector<16x16xi32>
    %534 = arith.cmpi slt, %532, %533 : vector<16x16xi32>
    %535 = arith.andi %530, %534 : vector<16x16xi1>
    %cst_233 = arith.constant 0.000000e+00 : f32
    %536 = vector.broadcast %cst_233 : f32 to vector<16x16xf32>
    %537 = arith.select %535, %526, %536 : vector<16x16xi1>, vector<16x16xf32>
    %c8_234 = arith.constant 8 : index
    %c1_235 = arith.constant 1 : index
    %538 = memref.load %arg6[%c8_234, %c1_235] : memref<9x8xf32, #tpu.memory_space<smem>>
    %539 = vector.broadcast %538 : f32 to vector<16x16xf32>
    %540 = arith.mulf %539, %537 : vector<16x16xf32>
    %541 = arith.addf %525, %540 : vector<16x16xf32>
    %c1_236 = arith.constant 1 : index
    %542 = memref.load %arg7[%c1_236] : memref<8xf32, #tpu.memory_space<smem>>
    %543 = vector.broadcast %542 : f32 to vector<16x16xf32>
    %544 = arith.addf %541, %543 : vector<16x16xf32>
    %c1_i32_237 = arith.constant 1 : i32
    %545 = tpu.dynamic_rotate %232 by %c1_i32_237 dim 1 : vector<16x16xf32>, i32 -> vector<16x16xf32>
    %c-1_i32_238 = arith.constant -1 : i32
    %546 = vector.broadcast %c-1_i32_238 : i32 to vector<16x16xi32>
    %547 = arith.addi %1, %546 : vector<16x16xi32>
    %c0_i32_239 = arith.constant 0 : i32
    %548 = vector.broadcast %c0_i32_239 : i32 to vector<16x16xi32>
    %549 = arith.cmpi sge, %547, %548 : vector<16x16xi32>
    %c-1_i32_240 = arith.constant -1 : i32
    %550 = vector.broadcast %c-1_i32_240 : i32 to vector<16x16xi32>
    %551 = arith.addi %1, %550 : vector<16x16xi32>
    %c16_i32_241 = arith.constant 16 : i32
    %552 = vector.broadcast %c16_i32_241 : i32 to vector<16x16xi32>
    %553 = arith.cmpi slt, %551, %552 : vector<16x16xi32>
    %554 = arith.andi %549, %553 : vector<16x16xi1>
    %cst_242 = arith.constant 0.000000e+00 : f32
    %555 = vector.broadcast %cst_242 : f32 to vector<16x16xf32>
    %556 = arith.select %554, %545, %555 : vector<16x16xi1>, vector<16x16xf32>
    %c15_i32_243 = arith.constant 15 : i32
    %557 = tpu.dynamic_rotate %232 by %c15_i32_243 dim 1 : vector<16x16xf32>, i32 -> vector<16x16xf32>
    %c1_i32_244 = arith.constant 1 : i32
    %558 = vector.broadcast %c1_i32_244 : i32 to vector<16x16xi32>
    %559 = arith.addi %1, %558 : vector<16x16xi32>
    %c0_i32_245 = arith.constant 0 : i32
    %560 = vector.broadcast %c0_i32_245 : i32 to vector<16x16xi32>
    %561 = arith.cmpi sge, %559, %560 : vector<16x16xi32>
    %c1_i32_246 = arith.constant 1 : i32
    %562 = vector.broadcast %c1_i32_246 : i32 to vector<16x16xi32>
    %563 = arith.addi %1, %562 : vector<16x16xi32>
    %c16_i32_247 = arith.constant 16 : i32
    %564 = vector.broadcast %c16_i32_247 : i32 to vector<16x16xi32>
    %565 = arith.cmpi slt, %563, %564 : vector<16x16xi32>
    %566 = arith.andi %561, %565 : vector<16x16xi1>
    %cst_248 = arith.constant 0.000000e+00 : f32
    %567 = vector.broadcast %cst_248 : f32 to vector<16x16xf32>
    %568 = arith.select %566, %557, %567 : vector<16x16xi1>, vector<16x16xf32>
    %cst_249 = arith.constant 0.000000e+00 : f32
    %569 = vector.broadcast %cst_249 : f32 to vector<16x16xf32>
    %c1_i32_250 = arith.constant 1 : i32
    %570 = tpu.dynamic_rotate %556 by %c1_i32_250 dim 0 : vector<16x16xf32>, i32 -> vector<16x16xf32>
    %c-1_i32_251 = arith.constant -1 : i32
    %571 = vector.broadcast %c-1_i32_251 : i32 to vector<16x16xi32>
    %572 = arith.addi %0, %571 : vector<16x16xi32>
    %c0_i32_252 = arith.constant 0 : i32
    %573 = vector.broadcast %c0_i32_252 : i32 to vector<16x16xi32>
    %574 = arith.cmpi sge, %572, %573 : vector<16x16xi32>
    %c-1_i32_253 = arith.constant -1 : i32
    %575 = vector.broadcast %c-1_i32_253 : i32 to vector<16x16xi32>
    %576 = arith.addi %0, %575 : vector<16x16xi32>
    %c16_i32_254 = arith.constant 16 : i32
    %577 = vector.broadcast %c16_i32_254 : i32 to vector<16x16xi32>
    %578 = arith.cmpi slt, %576, %577 : vector<16x16xi32>
    %579 = arith.andi %574, %578 : vector<16x16xi1>
    %cst_255 = arith.constant 0.000000e+00 : f32
    %580 = vector.broadcast %cst_255 : f32 to vector<16x16xf32>
    %581 = arith.select %579, %570, %580 : vector<16x16xi1>, vector<16x16xf32>
    %c0_256 = arith.constant 0 : index
    %c2_257 = arith.constant 2 : index
    %582 = memref.load %arg6[%c0_256, %c2_257] : memref<9x8xf32, #tpu.memory_space<smem>>
    %583 = vector.broadcast %582 : f32 to vector<16x16xf32>
    %584 = arith.mulf %583, %581 : vector<16x16xf32>
    %585 = arith.addf %569, %584 : vector<16x16xf32>
    %c1_i32_258 = arith.constant 1 : i32
    %586 = tpu.dynamic_rotate %232 by %c1_i32_258 dim 0 : vector<16x16xf32>, i32 -> vector<16x16xf32>
    %c-1_i32_259 = arith.constant -1 : i32
    %587 = vector.broadcast %c-1_i32_259 : i32 to vector<16x16xi32>
    %588 = arith.addi %0, %587 : vector<16x16xi32>
    %c0_i32_260 = arith.constant 0 : i32
    %589 = vector.broadcast %c0_i32_260 : i32 to vector<16x16xi32>
    %590 = arith.cmpi sge, %588, %589 : vector<16x16xi32>
    %c-1_i32_261 = arith.constant -1 : i32
    %591 = vector.broadcast %c-1_i32_261 : i32 to vector<16x16xi32>
    %592 = arith.addi %0, %591 : vector<16x16xi32>
    %c16_i32_262 = arith.constant 16 : i32
    %593 = vector.broadcast %c16_i32_262 : i32 to vector<16x16xi32>
    %594 = arith.cmpi slt, %592, %593 : vector<16x16xi32>
    %595 = arith.andi %590, %594 : vector<16x16xi1>
    %cst_263 = arith.constant 0.000000e+00 : f32
    %596 = vector.broadcast %cst_263 : f32 to vector<16x16xf32>
    %597 = arith.select %595, %586, %596 : vector<16x16xi1>, vector<16x16xf32>
    %c1_264 = arith.constant 1 : index
    %c2_265 = arith.constant 2 : index
    %598 = memref.load %arg6[%c1_264, %c2_265] : memref<9x8xf32, #tpu.memory_space<smem>>
    %599 = vector.broadcast %598 : f32 to vector<16x16xf32>
    %600 = arith.mulf %599, %597 : vector<16x16xf32>
    %601 = arith.addf %585, %600 : vector<16x16xf32>
    %c1_i32_266 = arith.constant 1 : i32
    %602 = tpu.dynamic_rotate %568 by %c1_i32_266 dim 0 : vector<16x16xf32>, i32 -> vector<16x16xf32>
    %c-1_i32_267 = arith.constant -1 : i32
    %603 = vector.broadcast %c-1_i32_267 : i32 to vector<16x16xi32>
    %604 = arith.addi %0, %603 : vector<16x16xi32>
    %c0_i32_268 = arith.constant 0 : i32
    %605 = vector.broadcast %c0_i32_268 : i32 to vector<16x16xi32>
    %606 = arith.cmpi sge, %604, %605 : vector<16x16xi32>
    %c-1_i32_269 = arith.constant -1 : i32
    %607 = vector.broadcast %c-1_i32_269 : i32 to vector<16x16xi32>
    %608 = arith.addi %0, %607 : vector<16x16xi32>
    %c16_i32_270 = arith.constant 16 : i32
    %609 = vector.broadcast %c16_i32_270 : i32 to vector<16x16xi32>
    %610 = arith.cmpi slt, %608, %609 : vector<16x16xi32>
    %611 = arith.andi %606, %610 : vector<16x16xi1>
    %cst_271 = arith.constant 0.000000e+00 : f32
    %612 = vector.broadcast %cst_271 : f32 to vector<16x16xf32>
    %613 = arith.select %611, %602, %612 : vector<16x16xi1>, vector<16x16xf32>
    %c2_272 = arith.constant 2 : index
    %c2_273 = arith.constant 2 : index
    %614 = memref.load %arg6[%c2_272, %c2_273] : memref<9x8xf32, #tpu.memory_space<smem>>
    %615 = vector.broadcast %614 : f32 to vector<16x16xf32>
    %616 = arith.mulf %615, %613 : vector<16x16xf32>
    %617 = arith.addf %601, %616 : vector<16x16xf32>
    %c3_274 = arith.constant 3 : index
    %c2_275 = arith.constant 2 : index
    %618 = memref.load %arg6[%c3_274, %c2_275] : memref<9x8xf32, #tpu.memory_space<smem>>
    %619 = vector.broadcast %618 : f32 to vector<16x16xf32>
    %620 = arith.mulf %619, %556 : vector<16x16xf32>
    %621 = arith.addf %617, %620 : vector<16x16xf32>
    %c4_276 = arith.constant 4 : index
    %c2_277 = arith.constant 2 : index
    %622 = memref.load %arg6[%c4_276, %c2_277] : memref<9x8xf32, #tpu.memory_space<smem>>
    %623 = vector.broadcast %622 : f32 to vector<16x16xf32>
    %624 = arith.mulf %623, %232 : vector<16x16xf32>
    %625 = arith.addf %621, %624 : vector<16x16xf32>
    %c5_278 = arith.constant 5 : index
    %c2_279 = arith.constant 2 : index
    %626 = memref.load %arg6[%c5_278, %c2_279] : memref<9x8xf32, #tpu.memory_space<smem>>
    %627 = vector.broadcast %626 : f32 to vector<16x16xf32>
    %628 = arith.mulf %627, %568 : vector<16x16xf32>
    %629 = arith.addf %625, %628 : vector<16x16xf32>
    %c15_i32_280 = arith.constant 15 : i32
    %630 = tpu.dynamic_rotate %556 by %c15_i32_280 dim 0 : vector<16x16xf32>, i32 -> vector<16x16xf32>
    %c1_i32_281 = arith.constant 1 : i32
    %631 = vector.broadcast %c1_i32_281 : i32 to vector<16x16xi32>
    %632 = arith.addi %0, %631 : vector<16x16xi32>
    %c0_i32_282 = arith.constant 0 : i32
    %633 = vector.broadcast %c0_i32_282 : i32 to vector<16x16xi32>
    %634 = arith.cmpi sge, %632, %633 : vector<16x16xi32>
    %c1_i32_283 = arith.constant 1 : i32
    %635 = vector.broadcast %c1_i32_283 : i32 to vector<16x16xi32>
    %636 = arith.addi %0, %635 : vector<16x16xi32>
    %c16_i32_284 = arith.constant 16 : i32
    %637 = vector.broadcast %c16_i32_284 : i32 to vector<16x16xi32>
    %638 = arith.cmpi slt, %636, %637 : vector<16x16xi32>
    %639 = arith.andi %634, %638 : vector<16x16xi1>
    %cst_285 = arith.constant 0.000000e+00 : f32
    %640 = vector.broadcast %cst_285 : f32 to vector<16x16xf32>
    %641 = arith.select %639, %630, %640 : vector<16x16xi1>, vector<16x16xf32>
    %c6_286 = arith.constant 6 : index
    %c2_287 = arith.constant 2 : index
    %642 = memref.load %arg6[%c6_286, %c2_287] : memref<9x8xf32, #tpu.memory_space<smem>>
    %643 = vector.broadcast %642 : f32 to vector<16x16xf32>
    %644 = arith.mulf %643, %641 : vector<16x16xf32>
    %645 = arith.addf %629, %644 : vector<16x16xf32>
    %c15_i32_288 = arith.constant 15 : i32
    %646 = tpu.dynamic_rotate %232 by %c15_i32_288 dim 0 : vector<16x16xf32>, i32 -> vector<16x16xf32>
    %c1_i32_289 = arith.constant 1 : i32
    %647 = vector.broadcast %c1_i32_289 : i32 to vector<16x16xi32>
    %648 = arith.addi %0, %647 : vector<16x16xi32>
    %c0_i32_290 = arith.constant 0 : i32
    %649 = vector.broadcast %c0_i32_290 : i32 to vector<16x16xi32>
    %650 = arith.cmpi sge, %648, %649 : vector<16x16xi32>
    %c1_i32_291 = arith.constant 1 : i32
    %651 = vector.broadcast %c1_i32_291 : i32 to vector<16x16xi32>
    %652 = arith.addi %0, %651 : vector<16x16xi32>
    %c16_i32_292 = arith.constant 16 : i32
    %653 = vector.broadcast %c16_i32_292 : i32 to vector<16x16xi32>
    %654 = arith.cmpi slt, %652, %653 : vector<16x16xi32>
    %655 = arith.andi %650, %654 : vector<16x16xi1>
    %cst_293 = arith.constant 0.000000e+00 : f32
    %656 = vector.broadcast %cst_293 : f32 to vector<16x16xf32>
    %657 = arith.select %655, %646, %656 : vector<16x16xi1>, vector<16x16xf32>
    %c7_294 = arith.constant 7 : index
    %c2_295 = arith.constant 2 : index
    %658 = memref.load %arg6[%c7_294, %c2_295] : memref<9x8xf32, #tpu.memory_space<smem>>
    %659 = vector.broadcast %658 : f32 to vector<16x16xf32>
    %660 = arith.mulf %659, %657 : vector<16x16xf32>
    %661 = arith.addf %645, %660 : vector<16x16xf32>
    %c15_i32_296 = arith.constant 15 : i32
    %662 = tpu.dynamic_rotate %568 by %c15_i32_296 dim 0 : vector<16x16xf32>, i32 -> vector<16x16xf32>
    %c1_i32_297 = arith.constant 1 : i32
    %663 = vector.broadcast %c1_i32_297 : i32 to vector<16x16xi32>
    %664 = arith.addi %0, %663 : vector<16x16xi32>
    %c0_i32_298 = arith.constant 0 : i32
    %665 = vector.broadcast %c0_i32_298 : i32 to vector<16x16xi32>
    %666 = arith.cmpi sge, %664, %665 : vector<16x16xi32>
    %c1_i32_299 = arith.constant 1 : i32
    %667 = vector.broadcast %c1_i32_299 : i32 to vector<16x16xi32>
    %668 = arith.addi %0, %667 : vector<16x16xi32>
    %c16_i32_300 = arith.constant 16 : i32
    %669 = vector.broadcast %c16_i32_300 : i32 to vector<16x16xi32>
    %670 = arith.cmpi slt, %668, %669 : vector<16x16xi32>
    %671 = arith.andi %666, %670 : vector<16x16xi1>
    %cst_301 = arith.constant 0.000000e+00 : f32
    %672 = vector.broadcast %cst_301 : f32 to vector<16x16xf32>
    %673 = arith.select %671, %662, %672 : vector<16x16xi1>, vector<16x16xf32>
    %c8_302 = arith.constant 8 : index
    %c2_303 = arith.constant 2 : index
    %674 = memref.load %arg6[%c8_302, %c2_303] : memref<9x8xf32, #tpu.memory_space<smem>>
    %675 = vector.broadcast %674 : f32 to vector<16x16xf32>
    %676 = arith.mulf %675, %673 : vector<16x16xf32>
    %677 = arith.addf %661, %676 : vector<16x16xf32>
    %c2_304 = arith.constant 2 : index
    %678 = memref.load %arg7[%c2_304] : memref<8xf32, #tpu.memory_space<smem>>
    %679 = vector.broadcast %678 : f32 to vector<16x16xf32>
    %680 = arith.addf %677, %679 : vector<16x16xf32>
    %c1_i32_305 = arith.constant 1 : i32
    %681 = tpu.dynamic_rotate %240 by %c1_i32_305 dim 1 : vector<16x16xf32>, i32 -> vector<16x16xf32>
    %c-1_i32_306 = arith.constant -1 : i32
    %682 = vector.broadcast %c-1_i32_306 : i32 to vector<16x16xi32>
    %683 = arith.addi %1, %682 : vector<16x16xi32>
    %c0_i32_307 = arith.constant 0 : i32
    %684 = vector.broadcast %c0_i32_307 : i32 to vector<16x16xi32>
    %685 = arith.cmpi sge, %683, %684 : vector<16x16xi32>
    %c-1_i32_308 = arith.constant -1 : i32
    %686 = vector.broadcast %c-1_i32_308 : i32 to vector<16x16xi32>
    %687 = arith.addi %1, %686 : vector<16x16xi32>
    %c16_i32_309 = arith.constant 16 : i32
    %688 = vector.broadcast %c16_i32_309 : i32 to vector<16x16xi32>
    %689 = arith.cmpi slt, %687, %688 : vector<16x16xi32>
    %690 = arith.andi %685, %689 : vector<16x16xi1>
    %cst_310 = arith.constant 0.000000e+00 : f32
    %691 = vector.broadcast %cst_310 : f32 to vector<16x16xf32>
    %692 = arith.select %690, %681, %691 : vector<16x16xi1>, vector<16x16xf32>
    %c15_i32_311 = arith.constant 15 : i32
    %693 = tpu.dynamic_rotate %240 by %c15_i32_311 dim 1 : vector<16x16xf32>, i32 -> vector<16x16xf32>
    %c1_i32_312 = arith.constant 1 : i32
    %694 = vector.broadcast %c1_i32_312 : i32 to vector<16x16xi32>
    %695 = arith.addi %1, %694 : vector<16x16xi32>
    %c0_i32_313 = arith.constant 0 : i32
    %696 = vector.broadcast %c0_i32_313 : i32 to vector<16x16xi32>
    %697 = arith.cmpi sge, %695, %696 : vector<16x16xi32>
    %c1_i32_314 = arith.constant 1 : i32
    %698 = vector.broadcast %c1_i32_314 : i32 to vector<16x16xi32>
    %699 = arith.addi %1, %698 : vector<16x16xi32>
    %c16_i32_315 = arith.constant 16 : i32
    %700 = vector.broadcast %c16_i32_315 : i32 to vector<16x16xi32>
    %701 = arith.cmpi slt, %699, %700 : vector<16x16xi32>
    %702 = arith.andi %697, %701 : vector<16x16xi1>
    %cst_316 = arith.constant 0.000000e+00 : f32
    %703 = vector.broadcast %cst_316 : f32 to vector<16x16xf32>
    %704 = arith.select %702, %693, %703 : vector<16x16xi1>, vector<16x16xf32>
    %cst_317 = arith.constant 0.000000e+00 : f32
    %705 = vector.broadcast %cst_317 : f32 to vector<16x16xf32>
    %c1_i32_318 = arith.constant 1 : i32
    %706 = tpu.dynamic_rotate %692 by %c1_i32_318 dim 0 : vector<16x16xf32>, i32 -> vector<16x16xf32>
    %c-1_i32_319 = arith.constant -1 : i32
    %707 = vector.broadcast %c-1_i32_319 : i32 to vector<16x16xi32>
    %708 = arith.addi %0, %707 : vector<16x16xi32>
    %c0_i32_320 = arith.constant 0 : i32
    %709 = vector.broadcast %c0_i32_320 : i32 to vector<16x16xi32>
    %710 = arith.cmpi sge, %708, %709 : vector<16x16xi32>
    %c-1_i32_321 = arith.constant -1 : i32
    %711 = vector.broadcast %c-1_i32_321 : i32 to vector<16x16xi32>
    %712 = arith.addi %0, %711 : vector<16x16xi32>
    %c16_i32_322 = arith.constant 16 : i32
    %713 = vector.broadcast %c16_i32_322 : i32 to vector<16x16xi32>
    %714 = arith.cmpi slt, %712, %713 : vector<16x16xi32>
    %715 = arith.andi %710, %714 : vector<16x16xi1>
    %cst_323 = arith.constant 0.000000e+00 : f32
    %716 = vector.broadcast %cst_323 : f32 to vector<16x16xf32>
    %717 = arith.select %715, %706, %716 : vector<16x16xi1>, vector<16x16xf32>
    %c0_324 = arith.constant 0 : index
    %c3_325 = arith.constant 3 : index
    %718 = memref.load %arg6[%c0_324, %c3_325] : memref<9x8xf32, #tpu.memory_space<smem>>
    %719 = vector.broadcast %718 : f32 to vector<16x16xf32>
    %720 = arith.mulf %719, %717 : vector<16x16xf32>
    %721 = arith.addf %705, %720 : vector<16x16xf32>
    %c1_i32_326 = arith.constant 1 : i32
    %722 = tpu.dynamic_rotate %240 by %c1_i32_326 dim 0 : vector<16x16xf32>, i32 -> vector<16x16xf32>
    %c-1_i32_327 = arith.constant -1 : i32
    %723 = vector.broadcast %c-1_i32_327 : i32 to vector<16x16xi32>
    %724 = arith.addi %0, %723 : vector<16x16xi32>
    %c0_i32_328 = arith.constant 0 : i32
    %725 = vector.broadcast %c0_i32_328 : i32 to vector<16x16xi32>
    %726 = arith.cmpi sge, %724, %725 : vector<16x16xi32>
    %c-1_i32_329 = arith.constant -1 : i32
    %727 = vector.broadcast %c-1_i32_329 : i32 to vector<16x16xi32>
    %728 = arith.addi %0, %727 : vector<16x16xi32>
    %c16_i32_330 = arith.constant 16 : i32
    %729 = vector.broadcast %c16_i32_330 : i32 to vector<16x16xi32>
    %730 = arith.cmpi slt, %728, %729 : vector<16x16xi32>
    %731 = arith.andi %726, %730 : vector<16x16xi1>
    %cst_331 = arith.constant 0.000000e+00 : f32
    %732 = vector.broadcast %cst_331 : f32 to vector<16x16xf32>
    %733 = arith.select %731, %722, %732 : vector<16x16xi1>, vector<16x16xf32>
    %c1_332 = arith.constant 1 : index
    %c3_333 = arith.constant 3 : index
    %734 = memref.load %arg6[%c1_332, %c3_333] : memref<9x8xf32, #tpu.memory_space<smem>>
    %735 = vector.broadcast %734 : f32 to vector<16x16xf32>
    %736 = arith.mulf %735, %733 : vector<16x16xf32>
    %737 = arith.addf %721, %736 : vector<16x16xf32>
    %c1_i32_334 = arith.constant 1 : i32
    %738 = tpu.dynamic_rotate %704 by %c1_i32_334 dim 0 : vector<16x16xf32>, i32 -> vector<16x16xf32>
    %c-1_i32_335 = arith.constant -1 : i32
    %739 = vector.broadcast %c-1_i32_335 : i32 to vector<16x16xi32>
    %740 = arith.addi %0, %739 : vector<16x16xi32>
    %c0_i32_336 = arith.constant 0 : i32
    %741 = vector.broadcast %c0_i32_336 : i32 to vector<16x16xi32>
    %742 = arith.cmpi sge, %740, %741 : vector<16x16xi32>
    %c-1_i32_337 = arith.constant -1 : i32
    %743 = vector.broadcast %c-1_i32_337 : i32 to vector<16x16xi32>
    %744 = arith.addi %0, %743 : vector<16x16xi32>
    %c16_i32_338 = arith.constant 16 : i32
    %745 = vector.broadcast %c16_i32_338 : i32 to vector<16x16xi32>
    %746 = arith.cmpi slt, %744, %745 : vector<16x16xi32>
    %747 = arith.andi %742, %746 : vector<16x16xi1>
    %cst_339 = arith.constant 0.000000e+00 : f32
    %748 = vector.broadcast %cst_339 : f32 to vector<16x16xf32>
    %749 = arith.select %747, %738, %748 : vector<16x16xi1>, vector<16x16xf32>
    %c2_340 = arith.constant 2 : index
    %c3_341 = arith.constant 3 : index
    %750 = memref.load %arg6[%c2_340, %c3_341] : memref<9x8xf32, #tpu.memory_space<smem>>
    %751 = vector.broadcast %750 : f32 to vector<16x16xf32>
    %752 = arith.mulf %751, %749 : vector<16x16xf32>
    %753 = arith.addf %737, %752 : vector<16x16xf32>
    %c3_342 = arith.constant 3 : index
    %c3_343 = arith.constant 3 : index
    %754 = memref.load %arg6[%c3_342, %c3_343] : memref<9x8xf32, #tpu.memory_space<smem>>
    %755 = vector.broadcast %754 : f32 to vector<16x16xf32>
    %756 = arith.mulf %755, %692 : vector<16x16xf32>
    %757 = arith.addf %753, %756 : vector<16x16xf32>
    %c4_344 = arith.constant 4 : index
    %c3_345 = arith.constant 3 : index
    %758 = memref.load %arg6[%c4_344, %c3_345] : memref<9x8xf32, #tpu.memory_space<smem>>
    %759 = vector.broadcast %758 : f32 to vector<16x16xf32>
    %760 = arith.mulf %759, %240 : vector<16x16xf32>
    %761 = arith.addf %757, %760 : vector<16x16xf32>
    %c5_346 = arith.constant 5 : index
    %c3_347 = arith.constant 3 : index
    %762 = memref.load %arg6[%c5_346, %c3_347] : memref<9x8xf32, #tpu.memory_space<smem>>
    %763 = vector.broadcast %762 : f32 to vector<16x16xf32>
    %764 = arith.mulf %763, %704 : vector<16x16xf32>
    %765 = arith.addf %761, %764 : vector<16x16xf32>
    %c15_i32_348 = arith.constant 15 : i32
    %766 = tpu.dynamic_rotate %692 by %c15_i32_348 dim 0 : vector<16x16xf32>, i32 -> vector<16x16xf32>
    %c1_i32_349 = arith.constant 1 : i32
    %767 = vector.broadcast %c1_i32_349 : i32 to vector<16x16xi32>
    %768 = arith.addi %0, %767 : vector<16x16xi32>
    %c0_i32_350 = arith.constant 0 : i32
    %769 = vector.broadcast %c0_i32_350 : i32 to vector<16x16xi32>
    %770 = arith.cmpi sge, %768, %769 : vector<16x16xi32>
    %c1_i32_351 = arith.constant 1 : i32
    %771 = vector.broadcast %c1_i32_351 : i32 to vector<16x16xi32>
    %772 = arith.addi %0, %771 : vector<16x16xi32>
    %c16_i32_352 = arith.constant 16 : i32
    %773 = vector.broadcast %c16_i32_352 : i32 to vector<16x16xi32>
    %774 = arith.cmpi slt, %772, %773 : vector<16x16xi32>
    %775 = arith.andi %770, %774 : vector<16x16xi1>
    %cst_353 = arith.constant 0.000000e+00 : f32
    %776 = vector.broadcast %cst_353 : f32 to vector<16x16xf32>
    %777 = arith.select %775, %766, %776 : vector<16x16xi1>, vector<16x16xf32>
    %c6_354 = arith.constant 6 : index
    %c3_355 = arith.constant 3 : index
    %778 = memref.load %arg6[%c6_354, %c3_355] : memref<9x8xf32, #tpu.memory_space<smem>>
    %779 = vector.broadcast %778 : f32 to vector<16x16xf32>
    %780 = arith.mulf %779, %777 : vector<16x16xf32>
    %781 = arith.addf %765, %780 : vector<16x16xf32>
    %c15_i32_356 = arith.constant 15 : i32
    %782 = tpu.dynamic_rotate %240 by %c15_i32_356 dim 0 : vector<16x16xf32>, i32 -> vector<16x16xf32>
    %c1_i32_357 = arith.constant 1 : i32
    %783 = vector.broadcast %c1_i32_357 : i32 to vector<16x16xi32>
    %784 = arith.addi %0, %783 : vector<16x16xi32>
    %c0_i32_358 = arith.constant 0 : i32
    %785 = vector.broadcast %c0_i32_358 : i32 to vector<16x16xi32>
    %786 = arith.cmpi sge, %784, %785 : vector<16x16xi32>
    %c1_i32_359 = arith.constant 1 : i32
    %787 = vector.broadcast %c1_i32_359 : i32 to vector<16x16xi32>
    %788 = arith.addi %0, %787 : vector<16x16xi32>
    %c16_i32_360 = arith.constant 16 : i32
    %789 = vector.broadcast %c16_i32_360 : i32 to vector<16x16xi32>
    %790 = arith.cmpi slt, %788, %789 : vector<16x16xi32>
    %791 = arith.andi %786, %790 : vector<16x16xi1>
    %cst_361 = arith.constant 0.000000e+00 : f32
    %792 = vector.broadcast %cst_361 : f32 to vector<16x16xf32>
    %793 = arith.select %791, %782, %792 : vector<16x16xi1>, vector<16x16xf32>
    %c7_362 = arith.constant 7 : index
    %c3_363 = arith.constant 3 : index
    %794 = memref.load %arg6[%c7_362, %c3_363] : memref<9x8xf32, #tpu.memory_space<smem>>
    %795 = vector.broadcast %794 : f32 to vector<16x16xf32>
    %796 = arith.mulf %795, %793 : vector<16x16xf32>
    %797 = arith.addf %781, %796 : vector<16x16xf32>
    %c15_i32_364 = arith.constant 15 : i32
    %798 = tpu.dynamic_rotate %704 by %c15_i32_364 dim 0 : vector<16x16xf32>, i32 -> vector<16x16xf32>
    %c1_i32_365 = arith.constant 1 : i32
    %799 = vector.broadcast %c1_i32_365 : i32 to vector<16x16xi32>
    %800 = arith.addi %0, %799 : vector<16x16xi32>
    %c0_i32_366 = arith.constant 0 : i32
    %801 = vector.broadcast %c0_i32_366 : i32 to vector<16x16xi32>
    %802 = arith.cmpi sge, %800, %801 : vector<16x16xi32>
    %c1_i32_367 = arith.constant 1 : i32
    %803 = vector.broadcast %c1_i32_367 : i32 to vector<16x16xi32>
    %804 = arith.addi %0, %803 : vector<16x16xi32>
    %c16_i32_368 = arith.constant 16 : i32
    %805 = vector.broadcast %c16_i32_368 : i32 to vector<16x16xi32>
    %806 = arith.cmpi slt, %804, %805 : vector<16x16xi32>
    %807 = arith.andi %802, %806 : vector<16x16xi1>
    %cst_369 = arith.constant 0.000000e+00 : f32
    %808 = vector.broadcast %cst_369 : f32 to vector<16x16xf32>
    %809 = arith.select %807, %798, %808 : vector<16x16xi1>, vector<16x16xf32>
    %c8_370 = arith.constant 8 : index
    %c3_371 = arith.constant 3 : index
    %810 = memref.load %arg6[%c8_370, %c3_371] : memref<9x8xf32, #tpu.memory_space<smem>>
    %811 = vector.broadcast %810 : f32 to vector<16x16xf32>
    %812 = arith.mulf %811, %809 : vector<16x16xf32>
    %813 = arith.addf %797, %812 : vector<16x16xf32>
    %c3_372 = arith.constant 3 : index
    %814 = memref.load %arg7[%c3_372] : memref<8xf32, #tpu.memory_space<smem>>
    %815 = vector.broadcast %814 : f32 to vector<16x16xf32>
    %816 = arith.addf %813, %815 : vector<16x16xf32>
    %c1_i32_373 = arith.constant 1 : i32
    %817 = tpu.dynamic_rotate %248 by %c1_i32_373 dim 1 : vector<16x16xf32>, i32 -> vector<16x16xf32>
    %c-1_i32_374 = arith.constant -1 : i32
    %818 = vector.broadcast %c-1_i32_374 : i32 to vector<16x16xi32>
    %819 = arith.addi %1, %818 : vector<16x16xi32>
    %c0_i32_375 = arith.constant 0 : i32
    %820 = vector.broadcast %c0_i32_375 : i32 to vector<16x16xi32>
    %821 = arith.cmpi sge, %819, %820 : vector<16x16xi32>
    %c-1_i32_376 = arith.constant -1 : i32
    %822 = vector.broadcast %c-1_i32_376 : i32 to vector<16x16xi32>
    %823 = arith.addi %1, %822 : vector<16x16xi32>
    %c16_i32_377 = arith.constant 16 : i32
    %824 = vector.broadcast %c16_i32_377 : i32 to vector<16x16xi32>
    %825 = arith.cmpi slt, %823, %824 : vector<16x16xi32>
    %826 = arith.andi %821, %825 : vector<16x16xi1>
    %cst_378 = arith.constant 0.000000e+00 : f32
    %827 = vector.broadcast %cst_378 : f32 to vector<16x16xf32>
    %828 = arith.select %826, %817, %827 : vector<16x16xi1>, vector<16x16xf32>
    %c15_i32_379 = arith.constant 15 : i32
    %829 = tpu.dynamic_rotate %248 by %c15_i32_379 dim 1 : vector<16x16xf32>, i32 -> vector<16x16xf32>
    %c1_i32_380 = arith.constant 1 : i32
    %830 = vector.broadcast %c1_i32_380 : i32 to vector<16x16xi32>
    %831 = arith.addi %1, %830 : vector<16x16xi32>
    %c0_i32_381 = arith.constant 0 : i32
    %832 = vector.broadcast %c0_i32_381 : i32 to vector<16x16xi32>
    %833 = arith.cmpi sge, %831, %832 : vector<16x16xi32>
    %c1_i32_382 = arith.constant 1 : i32
    %834 = vector.broadcast %c1_i32_382 : i32 to vector<16x16xi32>
    %835 = arith.addi %1, %834 : vector<16x16xi32>
    %c16_i32_383 = arith.constant 16 : i32
    %836 = vector.broadcast %c16_i32_383 : i32 to vector<16x16xi32>
    %837 = arith.cmpi slt, %835, %836 : vector<16x16xi32>
    %838 = arith.andi %833, %837 : vector<16x16xi1>
    %cst_384 = arith.constant 0.000000e+00 : f32
    %839 = vector.broadcast %cst_384 : f32 to vector<16x16xf32>
    %840 = arith.select %838, %829, %839 : vector<16x16xi1>, vector<16x16xf32>
    %cst_385 = arith.constant 0.000000e+00 : f32
    %841 = vector.broadcast %cst_385 : f32 to vector<16x16xf32>
    %c1_i32_386 = arith.constant 1 : i32
    %842 = tpu.dynamic_rotate %828 by %c1_i32_386 dim 0 : vector<16x16xf32>, i32 -> vector<16x16xf32>
    %c-1_i32_387 = arith.constant -1 : i32
    %843 = vector.broadcast %c-1_i32_387 : i32 to vector<16x16xi32>
    %844 = arith.addi %0, %843 : vector<16x16xi32>
    %c0_i32_388 = arith.constant 0 : i32
    %845 = vector.broadcast %c0_i32_388 : i32 to vector<16x16xi32>
    %846 = arith.cmpi sge, %844, %845 : vector<16x16xi32>
    %c-1_i32_389 = arith.constant -1 : i32
    %847 = vector.broadcast %c-1_i32_389 : i32 to vector<16x16xi32>
    %848 = arith.addi %0, %847 : vector<16x16xi32>
    %c16_i32_390 = arith.constant 16 : i32
    %849 = vector.broadcast %c16_i32_390 : i32 to vector<16x16xi32>
    %850 = arith.cmpi slt, %848, %849 : vector<16x16xi32>
    %851 = arith.andi %846, %850 : vector<16x16xi1>
    %cst_391 = arith.constant 0.000000e+00 : f32
    %852 = vector.broadcast %cst_391 : f32 to vector<16x16xf32>
    %853 = arith.select %851, %842, %852 : vector<16x16xi1>, vector<16x16xf32>
    %c0_392 = arith.constant 0 : index
    %c4_393 = arith.constant 4 : index
    %854 = memref.load %arg6[%c0_392, %c4_393] : memref<9x8xf32, #tpu.memory_space<smem>>
    %855 = vector.broadcast %854 : f32 to vector<16x16xf32>
    %856 = arith.mulf %855, %853 : vector<16x16xf32>
    %857 = arith.addf %841, %856 : vector<16x16xf32>
    %c1_i32_394 = arith.constant 1 : i32
    %858 = tpu.dynamic_rotate %248 by %c1_i32_394 dim 0 : vector<16x16xf32>, i32 -> vector<16x16xf32>
    %c-1_i32_395 = arith.constant -1 : i32
    %859 = vector.broadcast %c-1_i32_395 : i32 to vector<16x16xi32>
    %860 = arith.addi %0, %859 : vector<16x16xi32>
    %c0_i32_396 = arith.constant 0 : i32
    %861 = vector.broadcast %c0_i32_396 : i32 to vector<16x16xi32>
    %862 = arith.cmpi sge, %860, %861 : vector<16x16xi32>
    %c-1_i32_397 = arith.constant -1 : i32
    %863 = vector.broadcast %c-1_i32_397 : i32 to vector<16x16xi32>
    %864 = arith.addi %0, %863 : vector<16x16xi32>
    %c16_i32_398 = arith.constant 16 : i32
    %865 = vector.broadcast %c16_i32_398 : i32 to vector<16x16xi32>
    %866 = arith.cmpi slt, %864, %865 : vector<16x16xi32>
    %867 = arith.andi %862, %866 : vector<16x16xi1>
    %cst_399 = arith.constant 0.000000e+00 : f32
    %868 = vector.broadcast %cst_399 : f32 to vector<16x16xf32>
    %869 = arith.select %867, %858, %868 : vector<16x16xi1>, vector<16x16xf32>
    %c1_400 = arith.constant 1 : index
    %c4_401 = arith.constant 4 : index
    %870 = memref.load %arg6[%c1_400, %c4_401] : memref<9x8xf32, #tpu.memory_space<smem>>
    %871 = vector.broadcast %870 : f32 to vector<16x16xf32>
    %872 = arith.mulf %871, %869 : vector<16x16xf32>
    %873 = arith.addf %857, %872 : vector<16x16xf32>
    %c1_i32_402 = arith.constant 1 : i32
    %874 = tpu.dynamic_rotate %840 by %c1_i32_402 dim 0 : vector<16x16xf32>, i32 -> vector<16x16xf32>
    %c-1_i32_403 = arith.constant -1 : i32
    %875 = vector.broadcast %c-1_i32_403 : i32 to vector<16x16xi32>
    %876 = arith.addi %0, %875 : vector<16x16xi32>
    %c0_i32_404 = arith.constant 0 : i32
    %877 = vector.broadcast %c0_i32_404 : i32 to vector<16x16xi32>
    %878 = arith.cmpi sge, %876, %877 : vector<16x16xi32>
    %c-1_i32_405 = arith.constant -1 : i32
    %879 = vector.broadcast %c-1_i32_405 : i32 to vector<16x16xi32>
    %880 = arith.addi %0, %879 : vector<16x16xi32>
    %c16_i32_406 = arith.constant 16 : i32
    %881 = vector.broadcast %c16_i32_406 : i32 to vector<16x16xi32>
    %882 = arith.cmpi slt, %880, %881 : vector<16x16xi32>
    %883 = arith.andi %878, %882 : vector<16x16xi1>
    %cst_407 = arith.constant 0.000000e+00 : f32
    %884 = vector.broadcast %cst_407 : f32 to vector<16x16xf32>
    %885 = arith.select %883, %874, %884 : vector<16x16xi1>, vector<16x16xf32>
    %c2_408 = arith.constant 2 : index
    %c4_409 = arith.constant 4 : index
    %886 = memref.load %arg6[%c2_408, %c4_409] : memref<9x8xf32, #tpu.memory_space<smem>>
    %887 = vector.broadcast %886 : f32 to vector<16x16xf32>
    %888 = arith.mulf %887, %885 : vector<16x16xf32>
    %889 = arith.addf %873, %888 : vector<16x16xf32>
    %c3_410 = arith.constant 3 : index
    %c4_411 = arith.constant 4 : index
    %890 = memref.load %arg6[%c3_410, %c4_411] : memref<9x8xf32, #tpu.memory_space<smem>>
    %891 = vector.broadcast %890 : f32 to vector<16x16xf32>
    %892 = arith.mulf %891, %828 : vector<16x16xf32>
    %893 = arith.addf %889, %892 : vector<16x16xf32>
    %c4_412 = arith.constant 4 : index
    %c4_413 = arith.constant 4 : index
    %894 = memref.load %arg6[%c4_412, %c4_413] : memref<9x8xf32, #tpu.memory_space<smem>>
    %895 = vector.broadcast %894 : f32 to vector<16x16xf32>
    %896 = arith.mulf %895, %248 : vector<16x16xf32>
    %897 = arith.addf %893, %896 : vector<16x16xf32>
    %c5_414 = arith.constant 5 : index
    %c4_415 = arith.constant 4 : index
    %898 = memref.load %arg6[%c5_414, %c4_415] : memref<9x8xf32, #tpu.memory_space<smem>>
    %899 = vector.broadcast %898 : f32 to vector<16x16xf32>
    %900 = arith.mulf %899, %840 : vector<16x16xf32>
    %901 = arith.addf %897, %900 : vector<16x16xf32>
    %c15_i32_416 = arith.constant 15 : i32
    %902 = tpu.dynamic_rotate %828 by %c15_i32_416 dim 0 : vector<16x16xf32>, i32 -> vector<16x16xf32>
    %c1_i32_417 = arith.constant 1 : i32
    %903 = vector.broadcast %c1_i32_417 : i32 to vector<16x16xi32>
    %904 = arith.addi %0, %903 : vector<16x16xi32>
    %c0_i32_418 = arith.constant 0 : i32
    %905 = vector.broadcast %c0_i32_418 : i32 to vector<16x16xi32>
    %906 = arith.cmpi sge, %904, %905 : vector<16x16xi32>
    %c1_i32_419 = arith.constant 1 : i32
    %907 = vector.broadcast %c1_i32_419 : i32 to vector<16x16xi32>
    %908 = arith.addi %0, %907 : vector<16x16xi32>
    %c16_i32_420 = arith.constant 16 : i32
    %909 = vector.broadcast %c16_i32_420 : i32 to vector<16x16xi32>
    %910 = arith.cmpi slt, %908, %909 : vector<16x16xi32>
    %911 = arith.andi %906, %910 : vector<16x16xi1>
    %cst_421 = arith.constant 0.000000e+00 : f32
    %912 = vector.broadcast %cst_421 : f32 to vector<16x16xf32>
    %913 = arith.select %911, %902, %912 : vector<16x16xi1>, vector<16x16xf32>
    %c6_422 = arith.constant 6 : index
    %c4_423 = arith.constant 4 : index
    %914 = memref.load %arg6[%c6_422, %c4_423] : memref<9x8xf32, #tpu.memory_space<smem>>
    %915 = vector.broadcast %914 : f32 to vector<16x16xf32>
    %916 = arith.mulf %915, %913 : vector<16x16xf32>
    %917 = arith.addf %901, %916 : vector<16x16xf32>
    %c15_i32_424 = arith.constant 15 : i32
    %918 = tpu.dynamic_rotate %248 by %c15_i32_424 dim 0 : vector<16x16xf32>, i32 -> vector<16x16xf32>
    %c1_i32_425 = arith.constant 1 : i32
    %919 = vector.broadcast %c1_i32_425 : i32 to vector<16x16xi32>
    %920 = arith.addi %0, %919 : vector<16x16xi32>
    %c0_i32_426 = arith.constant 0 : i32
    %921 = vector.broadcast %c0_i32_426 : i32 to vector<16x16xi32>
    %922 = arith.cmpi sge, %920, %921 : vector<16x16xi32>
    %c1_i32_427 = arith.constant 1 : i32
    %923 = vector.broadcast %c1_i32_427 : i32 to vector<16x16xi32>
    %924 = arith.addi %0, %923 : vector<16x16xi32>
    %c16_i32_428 = arith.constant 16 : i32
    %925 = vector.broadcast %c16_i32_428 : i32 to vector<16x16xi32>
    %926 = arith.cmpi slt, %924, %925 : vector<16x16xi32>
    %927 = arith.andi %922, %926 : vector<16x16xi1>
    %cst_429 = arith.constant 0.000000e+00 : f32
    %928 = vector.broadcast %cst_429 : f32 to vector<16x16xf32>
    %929 = arith.select %927, %918, %928 : vector<16x16xi1>, vector<16x16xf32>
    %c7_430 = arith.constant 7 : index
    %c4_431 = arith.constant 4 : index
    %930 = memref.load %arg6[%c7_430, %c4_431] : memref<9x8xf32, #tpu.memory_space<smem>>
    %931 = vector.broadcast %930 : f32 to vector<16x16xf32>
    %932 = arith.mulf %931, %929 : vector<16x16xf32>
    %933 = arith.addf %917, %932 : vector<16x16xf32>
    %c15_i32_432 = arith.constant 15 : i32
    %934 = tpu.dynamic_rotate %840 by %c15_i32_432 dim 0 : vector<16x16xf32>, i32 -> vector<16x16xf32>
    %c1_i32_433 = arith.constant 1 : i32
    %935 = vector.broadcast %c1_i32_433 : i32 to vector<16x16xi32>
    %936 = arith.addi %0, %935 : vector<16x16xi32>
    %c0_i32_434 = arith.constant 0 : i32
    %937 = vector.broadcast %c0_i32_434 : i32 to vector<16x16xi32>
    %938 = arith.cmpi sge, %936, %937 : vector<16x16xi32>
    %c1_i32_435 = arith.constant 1 : i32
    %939 = vector.broadcast %c1_i32_435 : i32 to vector<16x16xi32>
    %940 = arith.addi %0, %939 : vector<16x16xi32>
    %c16_i32_436 = arith.constant 16 : i32
    %941 = vector.broadcast %c16_i32_436 : i32 to vector<16x16xi32>
    %942 = arith.cmpi slt, %940, %941 : vector<16x16xi32>
    %943 = arith.andi %938, %942 : vector<16x16xi1>
    %cst_437 = arith.constant 0.000000e+00 : f32
    %944 = vector.broadcast %cst_437 : f32 to vector<16x16xf32>
    %945 = arith.select %943, %934, %944 : vector<16x16xi1>, vector<16x16xf32>
    %c8_438 = arith.constant 8 : index
    %c4_439 = arith.constant 4 : index
    %946 = memref.load %arg6[%c8_438, %c4_439] : memref<9x8xf32, #tpu.memory_space<smem>>
    %947 = vector.broadcast %946 : f32 to vector<16x16xf32>
    %948 = arith.mulf %947, %945 : vector<16x16xf32>
    %949 = arith.addf %933, %948 : vector<16x16xf32>
    %c4_440 = arith.constant 4 : index
    %950 = memref.load %arg7[%c4_440] : memref<8xf32, #tpu.memory_space<smem>>
    %951 = vector.broadcast %950 : f32 to vector<16x16xf32>
    %952 = arith.addf %949, %951 : vector<16x16xf32>
    %c1_i32_441 = arith.constant 1 : i32
    %953 = tpu.dynamic_rotate %256 by %c1_i32_441 dim 1 : vector<16x16xf32>, i32 -> vector<16x16xf32>
    %c-1_i32_442 = arith.constant -1 : i32
    %954 = vector.broadcast %c-1_i32_442 : i32 to vector<16x16xi32>
    %955 = arith.addi %1, %954 : vector<16x16xi32>
    %c0_i32_443 = arith.constant 0 : i32
    %956 = vector.broadcast %c0_i32_443 : i32 to vector<16x16xi32>
    %957 = arith.cmpi sge, %955, %956 : vector<16x16xi32>
    %c-1_i32_444 = arith.constant -1 : i32
    %958 = vector.broadcast %c-1_i32_444 : i32 to vector<16x16xi32>
    %959 = arith.addi %1, %958 : vector<16x16xi32>
    %c16_i32_445 = arith.constant 16 : i32
    %960 = vector.broadcast %c16_i32_445 : i32 to vector<16x16xi32>
    %961 = arith.cmpi slt, %959, %960 : vector<16x16xi32>
    %962 = arith.andi %957, %961 : vector<16x16xi1>
    %cst_446 = arith.constant 0.000000e+00 : f32
    %963 = vector.broadcast %cst_446 : f32 to vector<16x16xf32>
    %964 = arith.select %962, %953, %963 : vector<16x16xi1>, vector<16x16xf32>
    %c15_i32_447 = arith.constant 15 : i32
    %965 = tpu.dynamic_rotate %256 by %c15_i32_447 dim 1 : vector<16x16xf32>, i32 -> vector<16x16xf32>
    %c1_i32_448 = arith.constant 1 : i32
    %966 = vector.broadcast %c1_i32_448 : i32 to vector<16x16xi32>
    %967 = arith.addi %1, %966 : vector<16x16xi32>
    %c0_i32_449 = arith.constant 0 : i32
    %968 = vector.broadcast %c0_i32_449 : i32 to vector<16x16xi32>
    %969 = arith.cmpi sge, %967, %968 : vector<16x16xi32>
    %c1_i32_450 = arith.constant 1 : i32
    %970 = vector.broadcast %c1_i32_450 : i32 to vector<16x16xi32>
    %971 = arith.addi %1, %970 : vector<16x16xi32>
    %c16_i32_451 = arith.constant 16 : i32
    %972 = vector.broadcast %c16_i32_451 : i32 to vector<16x16xi32>
    %973 = arith.cmpi slt, %971, %972 : vector<16x16xi32>
    %974 = arith.andi %969, %973 : vector<16x16xi1>
    %cst_452 = arith.constant 0.000000e+00 : f32
    %975 = vector.broadcast %cst_452 : f32 to vector<16x16xf32>
    %976 = arith.select %974, %965, %975 : vector<16x16xi1>, vector<16x16xf32>
    %cst_453 = arith.constant 0.000000e+00 : f32
    %977 = vector.broadcast %cst_453 : f32 to vector<16x16xf32>
    %c1_i32_454 = arith.constant 1 : i32
    %978 = tpu.dynamic_rotate %964 by %c1_i32_454 dim 0 : vector<16x16xf32>, i32 -> vector<16x16xf32>
    %c-1_i32_455 = arith.constant -1 : i32
    %979 = vector.broadcast %c-1_i32_455 : i32 to vector<16x16xi32>
    %980 = arith.addi %0, %979 : vector<16x16xi32>
    %c0_i32_456 = arith.constant 0 : i32
    %981 = vector.broadcast %c0_i32_456 : i32 to vector<16x16xi32>
    %982 = arith.cmpi sge, %980, %981 : vector<16x16xi32>
    %c-1_i32_457 = arith.constant -1 : i32
    %983 = vector.broadcast %c-1_i32_457 : i32 to vector<16x16xi32>
    %984 = arith.addi %0, %983 : vector<16x16xi32>
    %c16_i32_458 = arith.constant 16 : i32
    %985 = vector.broadcast %c16_i32_458 : i32 to vector<16x16xi32>
    %986 = arith.cmpi slt, %984, %985 : vector<16x16xi32>
    %987 = arith.andi %982, %986 : vector<16x16xi1>
    %cst_459 = arith.constant 0.000000e+00 : f32
    %988 = vector.broadcast %cst_459 : f32 to vector<16x16xf32>
    %989 = arith.select %987, %978, %988 : vector<16x16xi1>, vector<16x16xf32>
    %c0_460 = arith.constant 0 : index
    %c5_461 = arith.constant 5 : index
    %990 = memref.load %arg6[%c0_460, %c5_461] : memref<9x8xf32, #tpu.memory_space<smem>>
    %991 = vector.broadcast %990 : f32 to vector<16x16xf32>
    %992 = arith.mulf %991, %989 : vector<16x16xf32>
    %993 = arith.addf %977, %992 : vector<16x16xf32>
    %c1_i32_462 = arith.constant 1 : i32
    %994 = tpu.dynamic_rotate %256 by %c1_i32_462 dim 0 : vector<16x16xf32>, i32 -> vector<16x16xf32>
    %c-1_i32_463 = arith.constant -1 : i32
    %995 = vector.broadcast %c-1_i32_463 : i32 to vector<16x16xi32>
    %996 = arith.addi %0, %995 : vector<16x16xi32>
    %c0_i32_464 = arith.constant 0 : i32
    %997 = vector.broadcast %c0_i32_464 : i32 to vector<16x16xi32>
    %998 = arith.cmpi sge, %996, %997 : vector<16x16xi32>
    %c-1_i32_465 = arith.constant -1 : i32
    %999 = vector.broadcast %c-1_i32_465 : i32 to vector<16x16xi32>
    %1000 = arith.addi %0, %999 : vector<16x16xi32>
    %c16_i32_466 = arith.constant 16 : i32
    %1001 = vector.broadcast %c16_i32_466 : i32 to vector<16x16xi32>
    %1002 = arith.cmpi slt, %1000, %1001 : vector<16x16xi32>
    %1003 = arith.andi %998, %1002 : vector<16x16xi1>
    %cst_467 = arith.constant 0.000000e+00 : f32
    %1004 = vector.broadcast %cst_467 : f32 to vector<16x16xf32>
    %1005 = arith.select %1003, %994, %1004 : vector<16x16xi1>, vector<16x16xf32>
    %c1_468 = arith.constant 1 : index
    %c5_469 = arith.constant 5 : index
    %1006 = memref.load %arg6[%c1_468, %c5_469] : memref<9x8xf32, #tpu.memory_space<smem>>
    %1007 = vector.broadcast %1006 : f32 to vector<16x16xf32>
    %1008 = arith.mulf %1007, %1005 : vector<16x16xf32>
    %1009 = arith.addf %993, %1008 : vector<16x16xf32>
    %c1_i32_470 = arith.constant 1 : i32
    %1010 = tpu.dynamic_rotate %976 by %c1_i32_470 dim 0 : vector<16x16xf32>, i32 -> vector<16x16xf32>
    %c-1_i32_471 = arith.constant -1 : i32
    %1011 = vector.broadcast %c-1_i32_471 : i32 to vector<16x16xi32>
    %1012 = arith.addi %0, %1011 : vector<16x16xi32>
    %c0_i32_472 = arith.constant 0 : i32
    %1013 = vector.broadcast %c0_i32_472 : i32 to vector<16x16xi32>
    %1014 = arith.cmpi sge, %1012, %1013 : vector<16x16xi32>
    %c-1_i32_473 = arith.constant -1 : i32
    %1015 = vector.broadcast %c-1_i32_473 : i32 to vector<16x16xi32>
    %1016 = arith.addi %0, %1015 : vector<16x16xi32>
    %c16_i32_474 = arith.constant 16 : i32
    %1017 = vector.broadcast %c16_i32_474 : i32 to vector<16x16xi32>
    %1018 = arith.cmpi slt, %1016, %1017 : vector<16x16xi32>
    %1019 = arith.andi %1014, %1018 : vector<16x16xi1>
    %cst_475 = arith.constant 0.000000e+00 : f32
    %1020 = vector.broadcast %cst_475 : f32 to vector<16x16xf32>
    %1021 = arith.select %1019, %1010, %1020 : vector<16x16xi1>, vector<16x16xf32>
    %c2_476 = arith.constant 2 : index
    %c5_477 = arith.constant 5 : index
    %1022 = memref.load %arg6[%c2_476, %c5_477] : memref<9x8xf32, #tpu.memory_space<smem>>
    %1023 = vector.broadcast %1022 : f32 to vector<16x16xf32>
    %1024 = arith.mulf %1023, %1021 : vector<16x16xf32>
    %1025 = arith.addf %1009, %1024 : vector<16x16xf32>
    %c3_478 = arith.constant 3 : index
    %c5_479 = arith.constant 5 : index
    %1026 = memref.load %arg6[%c3_478, %c5_479] : memref<9x8xf32, #tpu.memory_space<smem>>
    %1027 = vector.broadcast %1026 : f32 to vector<16x16xf32>
    %1028 = arith.mulf %1027, %964 : vector<16x16xf32>
    %1029 = arith.addf %1025, %1028 : vector<16x16xf32>
    %c4_480 = arith.constant 4 : index
    %c5_481 = arith.constant 5 : index
    %1030 = memref.load %arg6[%c4_480, %c5_481] : memref<9x8xf32, #tpu.memory_space<smem>>
    %1031 = vector.broadcast %1030 : f32 to vector<16x16xf32>
    %1032 = arith.mulf %1031, %256 : vector<16x16xf32>
    %1033 = arith.addf %1029, %1032 : vector<16x16xf32>
    %c5_482 = arith.constant 5 : index
    %c5_483 = arith.constant 5 : index
    %1034 = memref.load %arg6[%c5_482, %c5_483] : memref<9x8xf32, #tpu.memory_space<smem>>
    %1035 = vector.broadcast %1034 : f32 to vector<16x16xf32>
    %1036 = arith.mulf %1035, %976 : vector<16x16xf32>
    %1037 = arith.addf %1033, %1036 : vector<16x16xf32>
    %c15_i32_484 = arith.constant 15 : i32
    %1038 = tpu.dynamic_rotate %964 by %c15_i32_484 dim 0 : vector<16x16xf32>, i32 -> vector<16x16xf32>
    %c1_i32_485 = arith.constant 1 : i32
    %1039 = vector.broadcast %c1_i32_485 : i32 to vector<16x16xi32>
    %1040 = arith.addi %0, %1039 : vector<16x16xi32>
    %c0_i32_486 = arith.constant 0 : i32
    %1041 = vector.broadcast %c0_i32_486 : i32 to vector<16x16xi32>
    %1042 = arith.cmpi sge, %1040, %1041 : vector<16x16xi32>
    %c1_i32_487 = arith.constant 1 : i32
    %1043 = vector.broadcast %c1_i32_487 : i32 to vector<16x16xi32>
    %1044 = arith.addi %0, %1043 : vector<16x16xi32>
    %c16_i32_488 = arith.constant 16 : i32
    %1045 = vector.broadcast %c16_i32_488 : i32 to vector<16x16xi32>
    %1046 = arith.cmpi slt, %1044, %1045 : vector<16x16xi32>
    %1047 = arith.andi %1042, %1046 : vector<16x16xi1>
    %cst_489 = arith.constant 0.000000e+00 : f32
    %1048 = vector.broadcast %cst_489 : f32 to vector<16x16xf32>
    %1049 = arith.select %1047, %1038, %1048 : vector<16x16xi1>, vector<16x16xf32>
    %c6_490 = arith.constant 6 : index
    %c5_491 = arith.constant 5 : index
    %1050 = memref.load %arg6[%c6_490, %c5_491] : memref<9x8xf32, #tpu.memory_space<smem>>
    %1051 = vector.broadcast %1050 : f32 to vector<16x16xf32>
    %1052 = arith.mulf %1051, %1049 : vector<16x16xf32>
    %1053 = arith.addf %1037, %1052 : vector<16x16xf32>
    %c15_i32_492 = arith.constant 15 : i32
    %1054 = tpu.dynamic_rotate %256 by %c15_i32_492 dim 0 : vector<16x16xf32>, i32 -> vector<16x16xf32>
    %c1_i32_493 = arith.constant 1 : i32
    %1055 = vector.broadcast %c1_i32_493 : i32 to vector<16x16xi32>
    %1056 = arith.addi %0, %1055 : vector<16x16xi32>
    %c0_i32_494 = arith.constant 0 : i32
    %1057 = vector.broadcast %c0_i32_494 : i32 to vector<16x16xi32>
    %1058 = arith.cmpi sge, %1056, %1057 : vector<16x16xi32>
    %c1_i32_495 = arith.constant 1 : i32
    %1059 = vector.broadcast %c1_i32_495 : i32 to vector<16x16xi32>
    %1060 = arith.addi %0, %1059 : vector<16x16xi32>
    %c16_i32_496 = arith.constant 16 : i32
    %1061 = vector.broadcast %c16_i32_496 : i32 to vector<16x16xi32>
    %1062 = arith.cmpi slt, %1060, %1061 : vector<16x16xi32>
    %1063 = arith.andi %1058, %1062 : vector<16x16xi1>
    %cst_497 = arith.constant 0.000000e+00 : f32
    %1064 = vector.broadcast %cst_497 : f32 to vector<16x16xf32>
    %1065 = arith.select %1063, %1054, %1064 : vector<16x16xi1>, vector<16x16xf32>
    %c7_498 = arith.constant 7 : index
    %c5_499 = arith.constant 5 : index
    %1066 = memref.load %arg6[%c7_498, %c5_499] : memref<9x8xf32, #tpu.memory_space<smem>>
    %1067 = vector.broadcast %1066 : f32 to vector<16x16xf32>
    %1068 = arith.mulf %1067, %1065 : vector<16x16xf32>
    %1069 = arith.addf %1053, %1068 : vector<16x16xf32>
    %c15_i32_500 = arith.constant 15 : i32
    %1070 = tpu.dynamic_rotate %976 by %c15_i32_500 dim 0 : vector<16x16xf32>, i32 -> vector<16x16xf32>
    %c1_i32_501 = arith.constant 1 : i32
    %1071 = vector.broadcast %c1_i32_501 : i32 to vector<16x16xi32>
    %1072 = arith.addi %0, %1071 : vector<16x16xi32>
    %c0_i32_502 = arith.constant 0 : i32
    %1073 = vector.broadcast %c0_i32_502 : i32 to vector<16x16xi32>
    %1074 = arith.cmpi sge, %1072, %1073 : vector<16x16xi32>
    %c1_i32_503 = arith.constant 1 : i32
    %1075 = vector.broadcast %c1_i32_503 : i32 to vector<16x16xi32>
    %1076 = arith.addi %0, %1075 : vector<16x16xi32>
    %c16_i32_504 = arith.constant 16 : i32
    %1077 = vector.broadcast %c16_i32_504 : i32 to vector<16x16xi32>
    %1078 = arith.cmpi slt, %1076, %1077 : vector<16x16xi32>
    %1079 = arith.andi %1074, %1078 : vector<16x16xi1>
    %cst_505 = arith.constant 0.000000e+00 : f32
    %1080 = vector.broadcast %cst_505 : f32 to vector<16x16xf32>
    %1081 = arith.select %1079, %1070, %1080 : vector<16x16xi1>, vector<16x16xf32>
    %c8_506 = arith.constant 8 : index
    %c5_507 = arith.constant 5 : index
    %1082 = memref.load %arg6[%c8_506, %c5_507] : memref<9x8xf32, #tpu.memory_space<smem>>
    %1083 = vector.broadcast %1082 : f32 to vector<16x16xf32>
    %1084 = arith.mulf %1083, %1081 : vector<16x16xf32>
    %1085 = arith.addf %1069, %1084 : vector<16x16xf32>
    %c5_508 = arith.constant 5 : index
    %1086 = memref.load %arg7[%c5_508] : memref<8xf32, #tpu.memory_space<smem>>
    %1087 = vector.broadcast %1086 : f32 to vector<16x16xf32>
    %1088 = arith.addf %1085, %1087 : vector<16x16xf32>
    %c1_i32_509 = arith.constant 1 : i32
    %1089 = tpu.dynamic_rotate %264 by %c1_i32_509 dim 1 : vector<16x16xf32>, i32 -> vector<16x16xf32>
    %c-1_i32_510 = arith.constant -1 : i32
    %1090 = vector.broadcast %c-1_i32_510 : i32 to vector<16x16xi32>
    %1091 = arith.addi %1, %1090 : vector<16x16xi32>
    %c0_i32_511 = arith.constant 0 : i32
    %1092 = vector.broadcast %c0_i32_511 : i32 to vector<16x16xi32>
    %1093 = arith.cmpi sge, %1091, %1092 : vector<16x16xi32>
    %c-1_i32_512 = arith.constant -1 : i32
    %1094 = vector.broadcast %c-1_i32_512 : i32 to vector<16x16xi32>
    %1095 = arith.addi %1, %1094 : vector<16x16xi32>
    %c16_i32_513 = arith.constant 16 : i32
    %1096 = vector.broadcast %c16_i32_513 : i32 to vector<16x16xi32>
    %1097 = arith.cmpi slt, %1095, %1096 : vector<16x16xi32>
    %1098 = arith.andi %1093, %1097 : vector<16x16xi1>
    %cst_514 = arith.constant 0.000000e+00 : f32
    %1099 = vector.broadcast %cst_514 : f32 to vector<16x16xf32>
    %1100 = arith.select %1098, %1089, %1099 : vector<16x16xi1>, vector<16x16xf32>
    %c15_i32_515 = arith.constant 15 : i32
    %1101 = tpu.dynamic_rotate %264 by %c15_i32_515 dim 1 : vector<16x16xf32>, i32 -> vector<16x16xf32>
    %c1_i32_516 = arith.constant 1 : i32
    %1102 = vector.broadcast %c1_i32_516 : i32 to vector<16x16xi32>
    %1103 = arith.addi %1, %1102 : vector<16x16xi32>
    %c0_i32_517 = arith.constant 0 : i32
    %1104 = vector.broadcast %c0_i32_517 : i32 to vector<16x16xi32>
    %1105 = arith.cmpi sge, %1103, %1104 : vector<16x16xi32>
    %c1_i32_518 = arith.constant 1 : i32
    %1106 = vector.broadcast %c1_i32_518 : i32 to vector<16x16xi32>
    %1107 = arith.addi %1, %1106 : vector<16x16xi32>
    %c16_i32_519 = arith.constant 16 : i32
    %1108 = vector.broadcast %c16_i32_519 : i32 to vector<16x16xi32>
    %1109 = arith.cmpi slt, %1107, %1108 : vector<16x16xi32>
    %1110 = arith.andi %1105, %1109 : vector<16x16xi1>
    %cst_520 = arith.constant 0.000000e+00 : f32
    %1111 = vector.broadcast %cst_520 : f32 to vector<16x16xf32>
    %1112 = arith.select %1110, %1101, %1111 : vector<16x16xi1>, vector<16x16xf32>
    %cst_521 = arith.constant 0.000000e+00 : f32
    %1113 = vector.broadcast %cst_521 : f32 to vector<16x16xf32>
    %c1_i32_522 = arith.constant 1 : i32
    %1114 = tpu.dynamic_rotate %1100 by %c1_i32_522 dim 0 : vector<16x16xf32>, i32 -> vector<16x16xf32>
    %c-1_i32_523 = arith.constant -1 : i32
    %1115 = vector.broadcast %c-1_i32_523 : i32 to vector<16x16xi32>
    %1116 = arith.addi %0, %1115 : vector<16x16xi32>
    %c0_i32_524 = arith.constant 0 : i32
    %1117 = vector.broadcast %c0_i32_524 : i32 to vector<16x16xi32>
    %1118 = arith.cmpi sge, %1116, %1117 : vector<16x16xi32>
    %c-1_i32_525 = arith.constant -1 : i32
    %1119 = vector.broadcast %c-1_i32_525 : i32 to vector<16x16xi32>
    %1120 = arith.addi %0, %1119 : vector<16x16xi32>
    %c16_i32_526 = arith.constant 16 : i32
    %1121 = vector.broadcast %c16_i32_526 : i32 to vector<16x16xi32>
    %1122 = arith.cmpi slt, %1120, %1121 : vector<16x16xi32>
    %1123 = arith.andi %1118, %1122 : vector<16x16xi1>
    %cst_527 = arith.constant 0.000000e+00 : f32
    %1124 = vector.broadcast %cst_527 : f32 to vector<16x16xf32>
    %1125 = arith.select %1123, %1114, %1124 : vector<16x16xi1>, vector<16x16xf32>
    %c0_528 = arith.constant 0 : index
    %c6_529 = arith.constant 6 : index
    %1126 = memref.load %arg6[%c0_528, %c6_529] : memref<9x8xf32, #tpu.memory_space<smem>>
    %1127 = vector.broadcast %1126 : f32 to vector<16x16xf32>
    %1128 = arith.mulf %1127, %1125 : vector<16x16xf32>
    %1129 = arith.addf %1113, %1128 : vector<16x16xf32>
    %c1_i32_530 = arith.constant 1 : i32
    %1130 = tpu.dynamic_rotate %264 by %c1_i32_530 dim 0 : vector<16x16xf32>, i32 -> vector<16x16xf32>
    %c-1_i32_531 = arith.constant -1 : i32
    %1131 = vector.broadcast %c-1_i32_531 : i32 to vector<16x16xi32>
    %1132 = arith.addi %0, %1131 : vector<16x16xi32>
    %c0_i32_532 = arith.constant 0 : i32
    %1133 = vector.broadcast %c0_i32_532 : i32 to vector<16x16xi32>
    %1134 = arith.cmpi sge, %1132, %1133 : vector<16x16xi32>
    %c-1_i32_533 = arith.constant -1 : i32
    %1135 = vector.broadcast %c-1_i32_533 : i32 to vector<16x16xi32>
    %1136 = arith.addi %0, %1135 : vector<16x16xi32>
    %c16_i32_534 = arith.constant 16 : i32
    %1137 = vector.broadcast %c16_i32_534 : i32 to vector<16x16xi32>
    %1138 = arith.cmpi slt, %1136, %1137 : vector<16x16xi32>
    %1139 = arith.andi %1134, %1138 : vector<16x16xi1>
    %cst_535 = arith.constant 0.000000e+00 : f32
    %1140 = vector.broadcast %cst_535 : f32 to vector<16x16xf32>
    %1141 = arith.select %1139, %1130, %1140 : vector<16x16xi1>, vector<16x16xf32>
    %c1_536 = arith.constant 1 : index
    %c6_537 = arith.constant 6 : index
    %1142 = memref.load %arg6[%c1_536, %c6_537] : memref<9x8xf32, #tpu.memory_space<smem>>
    %1143 = vector.broadcast %1142 : f32 to vector<16x16xf32>
    %1144 = arith.mulf %1143, %1141 : vector<16x16xf32>
    %1145 = arith.addf %1129, %1144 : vector<16x16xf32>
    %c1_i32_538 = arith.constant 1 : i32
    %1146 = tpu.dynamic_rotate %1112 by %c1_i32_538 dim 0 : vector<16x16xf32>, i32 -> vector<16x16xf32>
    %c-1_i32_539 = arith.constant -1 : i32
    %1147 = vector.broadcast %c-1_i32_539 : i32 to vector<16x16xi32>
    %1148 = arith.addi %0, %1147 : vector<16x16xi32>
    %c0_i32_540 = arith.constant 0 : i32
    %1149 = vector.broadcast %c0_i32_540 : i32 to vector<16x16xi32>
    %1150 = arith.cmpi sge, %1148, %1149 : vector<16x16xi32>
    %c-1_i32_541 = arith.constant -1 : i32
    %1151 = vector.broadcast %c-1_i32_541 : i32 to vector<16x16xi32>
    %1152 = arith.addi %0, %1151 : vector<16x16xi32>
    %c16_i32_542 = arith.constant 16 : i32
    %1153 = vector.broadcast %c16_i32_542 : i32 to vector<16x16xi32>
    %1154 = arith.cmpi slt, %1152, %1153 : vector<16x16xi32>
    %1155 = arith.andi %1150, %1154 : vector<16x16xi1>
    %cst_543 = arith.constant 0.000000e+00 : f32
    %1156 = vector.broadcast %cst_543 : f32 to vector<16x16xf32>
    %1157 = arith.select %1155, %1146, %1156 : vector<16x16xi1>, vector<16x16xf32>
    %c2_544 = arith.constant 2 : index
    %c6_545 = arith.constant 6 : index
    %1158 = memref.load %arg6[%c2_544, %c6_545] : memref<9x8xf32, #tpu.memory_space<smem>>
    %1159 = vector.broadcast %1158 : f32 to vector<16x16xf32>
    %1160 = arith.mulf %1159, %1157 : vector<16x16xf32>
    %1161 = arith.addf %1145, %1160 : vector<16x16xf32>
    %c3_546 = arith.constant 3 : index
    %c6_547 = arith.constant 6 : index
    %1162 = memref.load %arg6[%c3_546, %c6_547] : memref<9x8xf32, #tpu.memory_space<smem>>
    %1163 = vector.broadcast %1162 : f32 to vector<16x16xf32>
    %1164 = arith.mulf %1163, %1100 : vector<16x16xf32>
    %1165 = arith.addf %1161, %1164 : vector<16x16xf32>
    %c4_548 = arith.constant 4 : index
    %c6_549 = arith.constant 6 : index
    %1166 = memref.load %arg6[%c4_548, %c6_549] : memref<9x8xf32, #tpu.memory_space<smem>>
    %1167 = vector.broadcast %1166 : f32 to vector<16x16xf32>
    %1168 = arith.mulf %1167, %264 : vector<16x16xf32>
    %1169 = arith.addf %1165, %1168 : vector<16x16xf32>
    %c5_550 = arith.constant 5 : index
    %c6_551 = arith.constant 6 : index
    %1170 = memref.load %arg6[%c5_550, %c6_551] : memref<9x8xf32, #tpu.memory_space<smem>>
    %1171 = vector.broadcast %1170 : f32 to vector<16x16xf32>
    %1172 = arith.mulf %1171, %1112 : vector<16x16xf32>
    %1173 = arith.addf %1169, %1172 : vector<16x16xf32>
    %c15_i32_552 = arith.constant 15 : i32
    %1174 = tpu.dynamic_rotate %1100 by %c15_i32_552 dim 0 : vector<16x16xf32>, i32 -> vector<16x16xf32>
    %c1_i32_553 = arith.constant 1 : i32
    %1175 = vector.broadcast %c1_i32_553 : i32 to vector<16x16xi32>
    %1176 = arith.addi %0, %1175 : vector<16x16xi32>
    %c0_i32_554 = arith.constant 0 : i32
    %1177 = vector.broadcast %c0_i32_554 : i32 to vector<16x16xi32>
    %1178 = arith.cmpi sge, %1176, %1177 : vector<16x16xi32>
    %c1_i32_555 = arith.constant 1 : i32
    %1179 = vector.broadcast %c1_i32_555 : i32 to vector<16x16xi32>
    %1180 = arith.addi %0, %1179 : vector<16x16xi32>
    %c16_i32_556 = arith.constant 16 : i32
    %1181 = vector.broadcast %c16_i32_556 : i32 to vector<16x16xi32>
    %1182 = arith.cmpi slt, %1180, %1181 : vector<16x16xi32>
    %1183 = arith.andi %1178, %1182 : vector<16x16xi1>
    %cst_557 = arith.constant 0.000000e+00 : f32
    %1184 = vector.broadcast %cst_557 : f32 to vector<16x16xf32>
    %1185 = arith.select %1183, %1174, %1184 : vector<16x16xi1>, vector<16x16xf32>
    %c6_558 = arith.constant 6 : index
    %c6_559 = arith.constant 6 : index
    %1186 = memref.load %arg6[%c6_558, %c6_559] : memref<9x8xf32, #tpu.memory_space<smem>>
    %1187 = vector.broadcast %1186 : f32 to vector<16x16xf32>
    %1188 = arith.mulf %1187, %1185 : vector<16x16xf32>
    %1189 = arith.addf %1173, %1188 : vector<16x16xf32>
    %c15_i32_560 = arith.constant 15 : i32
    %1190 = tpu.dynamic_rotate %264 by %c15_i32_560 dim 0 : vector<16x16xf32>, i32 -> vector<16x16xf32>
    %c1_i32_561 = arith.constant 1 : i32
    %1191 = vector.broadcast %c1_i32_561 : i32 to vector<16x16xi32>
    %1192 = arith.addi %0, %1191 : vector<16x16xi32>
    %c0_i32_562 = arith.constant 0 : i32
    %1193 = vector.broadcast %c0_i32_562 : i32 to vector<16x16xi32>
    %1194 = arith.cmpi sge, %1192, %1193 : vector<16x16xi32>
    %c1_i32_563 = arith.constant 1 : i32
    %1195 = vector.broadcast %c1_i32_563 : i32 to vector<16x16xi32>
    %1196 = arith.addi %0, %1195 : vector<16x16xi32>
    %c16_i32_564 = arith.constant 16 : i32
    %1197 = vector.broadcast %c16_i32_564 : i32 to vector<16x16xi32>
    %1198 = arith.cmpi slt, %1196, %1197 : vector<16x16xi32>
    %1199 = arith.andi %1194, %1198 : vector<16x16xi1>
    %cst_565 = arith.constant 0.000000e+00 : f32
    %1200 = vector.broadcast %cst_565 : f32 to vector<16x16xf32>
    %1201 = arith.select %1199, %1190, %1200 : vector<16x16xi1>, vector<16x16xf32>
    %c7_566 = arith.constant 7 : index
    %c6_567 = arith.constant 6 : index
    %1202 = memref.load %arg6[%c7_566, %c6_567] : memref<9x8xf32, #tpu.memory_space<smem>>
    %1203 = vector.broadcast %1202 : f32 to vector<16x16xf32>
    %1204 = arith.mulf %1203, %1201 : vector<16x16xf32>
    %1205 = arith.addf %1189, %1204 : vector<16x16xf32>
    %c15_i32_568 = arith.constant 15 : i32
    %1206 = tpu.dynamic_rotate %1112 by %c15_i32_568 dim 0 : vector<16x16xf32>, i32 -> vector<16x16xf32>
    %c1_i32_569 = arith.constant 1 : i32
    %1207 = vector.broadcast %c1_i32_569 : i32 to vector<16x16xi32>
    %1208 = arith.addi %0, %1207 : vector<16x16xi32>
    %c0_i32_570 = arith.constant 0 : i32
    %1209 = vector.broadcast %c0_i32_570 : i32 to vector<16x16xi32>
    %1210 = arith.cmpi sge, %1208, %1209 : vector<16x16xi32>
    %c1_i32_571 = arith.constant 1 : i32
    %1211 = vector.broadcast %c1_i32_571 : i32 to vector<16x16xi32>
    %1212 = arith.addi %0, %1211 : vector<16x16xi32>
    %c16_i32_572 = arith.constant 16 : i32
    %1213 = vector.broadcast %c16_i32_572 : i32 to vector<16x16xi32>
    %1214 = arith.cmpi slt, %1212, %1213 : vector<16x16xi32>
    %1215 = arith.andi %1210, %1214 : vector<16x16xi1>
    %cst_573 = arith.constant 0.000000e+00 : f32
    %1216 = vector.broadcast %cst_573 : f32 to vector<16x16xf32>
    %1217 = arith.select %1215, %1206, %1216 : vector<16x16xi1>, vector<16x16xf32>
    %c8_574 = arith.constant 8 : index
    %c6_575 = arith.constant 6 : index
    %1218 = memref.load %arg6[%c8_574, %c6_575] : memref<9x8xf32, #tpu.memory_space<smem>>
    %1219 = vector.broadcast %1218 : f32 to vector<16x16xf32>
    %1220 = arith.mulf %1219, %1217 : vector<16x16xf32>
    %1221 = arith.addf %1205, %1220 : vector<16x16xf32>
    %c6_576 = arith.constant 6 : index
    %1222 = memref.load %arg7[%c6_576] : memref<8xf32, #tpu.memory_space<smem>>
    %1223 = vector.broadcast %1222 : f32 to vector<16x16xf32>
    %1224 = arith.addf %1221, %1223 : vector<16x16xf32>
    %c1_i32_577 = arith.constant 1 : i32
    %1225 = tpu.dynamic_rotate %272 by %c1_i32_577 dim 1 : vector<16x16xf32>, i32 -> vector<16x16xf32>
    %c-1_i32_578 = arith.constant -1 : i32
    %1226 = vector.broadcast %c-1_i32_578 : i32 to vector<16x16xi32>
    %1227 = arith.addi %1, %1226 : vector<16x16xi32>
    %c0_i32_579 = arith.constant 0 : i32
    %1228 = vector.broadcast %c0_i32_579 : i32 to vector<16x16xi32>
    %1229 = arith.cmpi sge, %1227, %1228 : vector<16x16xi32>
    %c-1_i32_580 = arith.constant -1 : i32
    %1230 = vector.broadcast %c-1_i32_580 : i32 to vector<16x16xi32>
    %1231 = arith.addi %1, %1230 : vector<16x16xi32>
    %c16_i32_581 = arith.constant 16 : i32
    %1232 = vector.broadcast %c16_i32_581 : i32 to vector<16x16xi32>
    %1233 = arith.cmpi slt, %1231, %1232 : vector<16x16xi32>
    %1234 = arith.andi %1229, %1233 : vector<16x16xi1>
    %cst_582 = arith.constant 0.000000e+00 : f32
    %1235 = vector.broadcast %cst_582 : f32 to vector<16x16xf32>
    %1236 = arith.select %1234, %1225, %1235 : vector<16x16xi1>, vector<16x16xf32>
    %c15_i32_583 = arith.constant 15 : i32
    %1237 = tpu.dynamic_rotate %272 by %c15_i32_583 dim 1 : vector<16x16xf32>, i32 -> vector<16x16xf32>
    %c1_i32_584 = arith.constant 1 : i32
    %1238 = vector.broadcast %c1_i32_584 : i32 to vector<16x16xi32>
    %1239 = arith.addi %1, %1238 : vector<16x16xi32>
    %c0_i32_585 = arith.constant 0 : i32
    %1240 = vector.broadcast %c0_i32_585 : i32 to vector<16x16xi32>
    %1241 = arith.cmpi sge, %1239, %1240 : vector<16x16xi32>
    %c1_i32_586 = arith.constant 1 : i32
    %1242 = vector.broadcast %c1_i32_586 : i32 to vector<16x16xi32>
    %1243 = arith.addi %1, %1242 : vector<16x16xi32>
    %c16_i32_587 = arith.constant 16 : i32
    %1244 = vector.broadcast %c16_i32_587 : i32 to vector<16x16xi32>
    %1245 = arith.cmpi slt, %1243, %1244 : vector<16x16xi32>
    %1246 = arith.andi %1241, %1245 : vector<16x16xi1>
    %cst_588 = arith.constant 0.000000e+00 : f32
    %1247 = vector.broadcast %cst_588 : f32 to vector<16x16xf32>
    %1248 = arith.select %1246, %1237, %1247 : vector<16x16xi1>, vector<16x16xf32>
    %cst_589 = arith.constant 0.000000e+00 : f32
    %1249 = vector.broadcast %cst_589 : f32 to vector<16x16xf32>
    %c1_i32_590 = arith.constant 1 : i32
    %1250 = tpu.dynamic_rotate %1236 by %c1_i32_590 dim 0 : vector<16x16xf32>, i32 -> vector<16x16xf32>
    %c-1_i32_591 = arith.constant -1 : i32
    %1251 = vector.broadcast %c-1_i32_591 : i32 to vector<16x16xi32>
    %1252 = arith.addi %0, %1251 : vector<16x16xi32>
    %c0_i32_592 = arith.constant 0 : i32
    %1253 = vector.broadcast %c0_i32_592 : i32 to vector<16x16xi32>
    %1254 = arith.cmpi sge, %1252, %1253 : vector<16x16xi32>
    %c-1_i32_593 = arith.constant -1 : i32
    %1255 = vector.broadcast %c-1_i32_593 : i32 to vector<16x16xi32>
    %1256 = arith.addi %0, %1255 : vector<16x16xi32>
    %c16_i32_594 = arith.constant 16 : i32
    %1257 = vector.broadcast %c16_i32_594 : i32 to vector<16x16xi32>
    %1258 = arith.cmpi slt, %1256, %1257 : vector<16x16xi32>
    %1259 = arith.andi %1254, %1258 : vector<16x16xi1>
    %cst_595 = arith.constant 0.000000e+00 : f32
    %1260 = vector.broadcast %cst_595 : f32 to vector<16x16xf32>
    %1261 = arith.select %1259, %1250, %1260 : vector<16x16xi1>, vector<16x16xf32>
    %c0_596 = arith.constant 0 : index
    %c7_597 = arith.constant 7 : index
    %1262 = memref.load %arg6[%c0_596, %c7_597] : memref<9x8xf32, #tpu.memory_space<smem>>
    %1263 = vector.broadcast %1262 : f32 to vector<16x16xf32>
    %1264 = arith.mulf %1263, %1261 : vector<16x16xf32>
    %1265 = arith.addf %1249, %1264 : vector<16x16xf32>
    %c1_i32_598 = arith.constant 1 : i32
    %1266 = tpu.dynamic_rotate %272 by %c1_i32_598 dim 0 : vector<16x16xf32>, i32 -> vector<16x16xf32>
    %c-1_i32_599 = arith.constant -1 : i32
    %1267 = vector.broadcast %c-1_i32_599 : i32 to vector<16x16xi32>
    %1268 = arith.addi %0, %1267 : vector<16x16xi32>
    %c0_i32_600 = arith.constant 0 : i32
    %1269 = vector.broadcast %c0_i32_600 : i32 to vector<16x16xi32>
    %1270 = arith.cmpi sge, %1268, %1269 : vector<16x16xi32>
    %c-1_i32_601 = arith.constant -1 : i32
    %1271 = vector.broadcast %c-1_i32_601 : i32 to vector<16x16xi32>
    %1272 = arith.addi %0, %1271 : vector<16x16xi32>
    %c16_i32_602 = arith.constant 16 : i32
    %1273 = vector.broadcast %c16_i32_602 : i32 to vector<16x16xi32>
    %1274 = arith.cmpi slt, %1272, %1273 : vector<16x16xi32>
    %1275 = arith.andi %1270, %1274 : vector<16x16xi1>
    %cst_603 = arith.constant 0.000000e+00 : f32
    %1276 = vector.broadcast %cst_603 : f32 to vector<16x16xf32>
    %1277 = arith.select %1275, %1266, %1276 : vector<16x16xi1>, vector<16x16xf32>
    %c1_604 = arith.constant 1 : index
    %c7_605 = arith.constant 7 : index
    %1278 = memref.load %arg6[%c1_604, %c7_605] : memref<9x8xf32, #tpu.memory_space<smem>>
    %1279 = vector.broadcast %1278 : f32 to vector<16x16xf32>
    %1280 = arith.mulf %1279, %1277 : vector<16x16xf32>
    %1281 = arith.addf %1265, %1280 : vector<16x16xf32>
    %c1_i32_606 = arith.constant 1 : i32
    %1282 = tpu.dynamic_rotate %1248 by %c1_i32_606 dim 0 : vector<16x16xf32>, i32 -> vector<16x16xf32>
    %c-1_i32_607 = arith.constant -1 : i32
    %1283 = vector.broadcast %c-1_i32_607 : i32 to vector<16x16xi32>
    %1284 = arith.addi %0, %1283 : vector<16x16xi32>
    %c0_i32_608 = arith.constant 0 : i32
    %1285 = vector.broadcast %c0_i32_608 : i32 to vector<16x16xi32>
    %1286 = arith.cmpi sge, %1284, %1285 : vector<16x16xi32>
    %c-1_i32_609 = arith.constant -1 : i32
    %1287 = vector.broadcast %c-1_i32_609 : i32 to vector<16x16xi32>
    %1288 = arith.addi %0, %1287 : vector<16x16xi32>
    %c16_i32_610 = arith.constant 16 : i32
    %1289 = vector.broadcast %c16_i32_610 : i32 to vector<16x16xi32>
    %1290 = arith.cmpi slt, %1288, %1289 : vector<16x16xi32>
    %1291 = arith.andi %1286, %1290 : vector<16x16xi1>
    %cst_611 = arith.constant 0.000000e+00 : f32
    %1292 = vector.broadcast %cst_611 : f32 to vector<16x16xf32>
    %1293 = arith.select %1291, %1282, %1292 : vector<16x16xi1>, vector<16x16xf32>
    %c2_612 = arith.constant 2 : index
    %c7_613 = arith.constant 7 : index
    %1294 = memref.load %arg6[%c2_612, %c7_613] : memref<9x8xf32, #tpu.memory_space<smem>>
    %1295 = vector.broadcast %1294 : f32 to vector<16x16xf32>
    %1296 = arith.mulf %1295, %1293 : vector<16x16xf32>
    %1297 = arith.addf %1281, %1296 : vector<16x16xf32>
    %c3_614 = arith.constant 3 : index
    %c7_615 = arith.constant 7 : index
    %1298 = memref.load %arg6[%c3_614, %c7_615] : memref<9x8xf32, #tpu.memory_space<smem>>
    %1299 = vector.broadcast %1298 : f32 to vector<16x16xf32>
    %1300 = arith.mulf %1299, %1236 : vector<16x16xf32>
    %1301 = arith.addf %1297, %1300 : vector<16x16xf32>
    %c4_616 = arith.constant 4 : index
    %c7_617 = arith.constant 7 : index
    %1302 = memref.load %arg6[%c4_616, %c7_617] : memref<9x8xf32, #tpu.memory_space<smem>>
    %1303 = vector.broadcast %1302 : f32 to vector<16x16xf32>
    %1304 = arith.mulf %1303, %272 : vector<16x16xf32>
    %1305 = arith.addf %1301, %1304 : vector<16x16xf32>
    %c5_618 = arith.constant 5 : index
    %c7_619 = arith.constant 7 : index
    %1306 = memref.load %arg6[%c5_618, %c7_619] : memref<9x8xf32, #tpu.memory_space<smem>>
    %1307 = vector.broadcast %1306 : f32 to vector<16x16xf32>
    %1308 = arith.mulf %1307, %1248 : vector<16x16xf32>
    %1309 = arith.addf %1305, %1308 : vector<16x16xf32>
    %c15_i32_620 = arith.constant 15 : i32
    %1310 = tpu.dynamic_rotate %1236 by %c15_i32_620 dim 0 : vector<16x16xf32>, i32 -> vector<16x16xf32>
    %c1_i32_621 = arith.constant 1 : i32
    %1311 = vector.broadcast %c1_i32_621 : i32 to vector<16x16xi32>
    %1312 = arith.addi %0, %1311 : vector<16x16xi32>
    %c0_i32_622 = arith.constant 0 : i32
    %1313 = vector.broadcast %c0_i32_622 : i32 to vector<16x16xi32>
    %1314 = arith.cmpi sge, %1312, %1313 : vector<16x16xi32>
    %c1_i32_623 = arith.constant 1 : i32
    %1315 = vector.broadcast %c1_i32_623 : i32 to vector<16x16xi32>
    %1316 = arith.addi %0, %1315 : vector<16x16xi32>
    %c16_i32_624 = arith.constant 16 : i32
    %1317 = vector.broadcast %c16_i32_624 : i32 to vector<16x16xi32>
    %1318 = arith.cmpi slt, %1316, %1317 : vector<16x16xi32>
    %1319 = arith.andi %1314, %1318 : vector<16x16xi1>
    %cst_625 = arith.constant 0.000000e+00 : f32
    %1320 = vector.broadcast %cst_625 : f32 to vector<16x16xf32>
    %1321 = arith.select %1319, %1310, %1320 : vector<16x16xi1>, vector<16x16xf32>
    %c6_626 = arith.constant 6 : index
    %c7_627 = arith.constant 7 : index
    %1322 = memref.load %arg6[%c6_626, %c7_627] : memref<9x8xf32, #tpu.memory_space<smem>>
    %1323 = vector.broadcast %1322 : f32 to vector<16x16xf32>
    %1324 = arith.mulf %1323, %1321 : vector<16x16xf32>
    %1325 = arith.addf %1309, %1324 : vector<16x16xf32>
    %c15_i32_628 = arith.constant 15 : i32
    %1326 = tpu.dynamic_rotate %272 by %c15_i32_628 dim 0 : vector<16x16xf32>, i32 -> vector<16x16xf32>
    %c1_i32_629 = arith.constant 1 : i32
    %1327 = vector.broadcast %c1_i32_629 : i32 to vector<16x16xi32>
    %1328 = arith.addi %0, %1327 : vector<16x16xi32>
    %c0_i32_630 = arith.constant 0 : i32
    %1329 = vector.broadcast %c0_i32_630 : i32 to vector<16x16xi32>
    %1330 = arith.cmpi sge, %1328, %1329 : vector<16x16xi32>
    %c1_i32_631 = arith.constant 1 : i32
    %1331 = vector.broadcast %c1_i32_631 : i32 to vector<16x16xi32>
    %1332 = arith.addi %0, %1331 : vector<16x16xi32>
    %c16_i32_632 = arith.constant 16 : i32
    %1333 = vector.broadcast %c16_i32_632 : i32 to vector<16x16xi32>
    %1334 = arith.cmpi slt, %1332, %1333 : vector<16x16xi32>
    %1335 = arith.andi %1330, %1334 : vector<16x16xi1>
    %cst_633 = arith.constant 0.000000e+00 : f32
    %1336 = vector.broadcast %cst_633 : f32 to vector<16x16xf32>
    %1337 = arith.select %1335, %1326, %1336 : vector<16x16xi1>, vector<16x16xf32>
    %c7_634 = arith.constant 7 : index
    %c7_635 = arith.constant 7 : index
    %1338 = memref.load %arg6[%c7_634, %c7_635] : memref<9x8xf32, #tpu.memory_space<smem>>
    %1339 = vector.broadcast %1338 : f32 to vector<16x16xf32>
    %1340 = arith.mulf %1339, %1337 : vector<16x16xf32>
    %1341 = arith.addf %1325, %1340 : vector<16x16xf32>
    %c15_i32_636 = arith.constant 15 : i32
    %1342 = tpu.dynamic_rotate %1248 by %c15_i32_636 dim 0 : vector<16x16xf32>, i32 -> vector<16x16xf32>
    %c1_i32_637 = arith.constant 1 : i32
    %1343 = vector.broadcast %c1_i32_637 : i32 to vector<16x16xi32>
    %1344 = arith.addi %0, %1343 : vector<16x16xi32>
    %c0_i32_638 = arith.constant 0 : i32
    %1345 = vector.broadcast %c0_i32_638 : i32 to vector<16x16xi32>
    %1346 = arith.cmpi sge, %1344, %1345 : vector<16x16xi32>
    %c1_i32_639 = arith.constant 1 : i32
    %1347 = vector.broadcast %c1_i32_639 : i32 to vector<16x16xi32>
    %1348 = arith.addi %0, %1347 : vector<16x16xi32>
    %c16_i32_640 = arith.constant 16 : i32
    %1349 = vector.broadcast %c16_i32_640 : i32 to vector<16x16xi32>
    %1350 = arith.cmpi slt, %1348, %1349 : vector<16x16xi32>
    %1351 = arith.andi %1346, %1350 : vector<16x16xi1>
    %cst_641 = arith.constant 0.000000e+00 : f32
    %1352 = vector.broadcast %cst_641 : f32 to vector<16x16xf32>
    %1353 = arith.select %1351, %1342, %1352 : vector<16x16xi1>, vector<16x16xf32>
    %c8_642 = arith.constant 8 : index
    %c7_643 = arith.constant 7 : index
    %1354 = memref.load %arg6[%c8_642, %c7_643] : memref<9x8xf32, #tpu.memory_space<smem>>
    %1355 = vector.broadcast %1354 : f32 to vector<16x16xf32>
    %1356 = arith.mulf %1355, %1353 : vector<16x16xf32>
    %1357 = arith.addf %1341, %1356 : vector<16x16xf32>
    %c7_644 = arith.constant 7 : index
    %1358 = memref.load %arg7[%c7_644] : memref<8xf32, #tpu.memory_space<smem>>
    %1359 = vector.broadcast %1358 : f32 to vector<16x16xf32>
    %1360 = arith.addf %1357, %1359 : vector<16x16xf32>
    %cst_645 = arith.constant 0.000000e+00 : f32
    %1361 = vector.broadcast %cst_645 : f32 to vector<16x16xf32>
    %c0_646 = arith.constant 0 : index
    %c0_647 = arith.constant 0 : index
    %1362 = memref.load %arg8[%c0_646, %c0_647] : memref<8x4xf32, #tpu.memory_space<smem>>
    %1363 = vector.broadcast %1362 : f32 to vector<16x16xf32>
    %1364 = arith.mulf %1363, %408 : vector<16x16xf32>
    %1365 = arith.addf %1361, %1364 : vector<16x16xf32>
    %c1_648 = arith.constant 1 : index
    %c0_649 = arith.constant 0 : index
    %1366 = memref.load %arg8[%c1_648, %c0_649] : memref<8x4xf32, #tpu.memory_space<smem>>
    %1367 = vector.broadcast %1366 : f32 to vector<16x16xf32>
    %1368 = arith.mulf %1367, %544 : vector<16x16xf32>
    %1369 = arith.addf %1365, %1368 : vector<16x16xf32>
    %c2_650 = arith.constant 2 : index
    %c0_651 = arith.constant 0 : index
    %1370 = memref.load %arg8[%c2_650, %c0_651] : memref<8x4xf32, #tpu.memory_space<smem>>
    %1371 = vector.broadcast %1370 : f32 to vector<16x16xf32>
    %1372 = arith.mulf %1371, %680 : vector<16x16xf32>
    %1373 = arith.addf %1369, %1372 : vector<16x16xf32>
    %c3_652 = arith.constant 3 : index
    %c0_653 = arith.constant 0 : index
    %1374 = memref.load %arg8[%c3_652, %c0_653] : memref<8x4xf32, #tpu.memory_space<smem>>
    %1375 = vector.broadcast %1374 : f32 to vector<16x16xf32>
    %1376 = arith.mulf %1375, %816 : vector<16x16xf32>
    %1377 = arith.addf %1373, %1376 : vector<16x16xf32>
    %c4_654 = arith.constant 4 : index
    %c0_655 = arith.constant 0 : index
    %1378 = memref.load %arg8[%c4_654, %c0_655] : memref<8x4xf32, #tpu.memory_space<smem>>
    %1379 = vector.broadcast %1378 : f32 to vector<16x16xf32>
    %1380 = arith.mulf %1379, %952 : vector<16x16xf32>
    %1381 = arith.addf %1377, %1380 : vector<16x16xf32>
    %c5_656 = arith.constant 5 : index
    %c0_657 = arith.constant 0 : index
    %1382 = memref.load %arg8[%c5_656, %c0_657] : memref<8x4xf32, #tpu.memory_space<smem>>
    %1383 = vector.broadcast %1382 : f32 to vector<16x16xf32>
    %1384 = arith.mulf %1383, %1088 : vector<16x16xf32>
    %1385 = arith.addf %1381, %1384 : vector<16x16xf32>
    %c6_658 = arith.constant 6 : index
    %c0_659 = arith.constant 0 : index
    %1386 = memref.load %arg8[%c6_658, %c0_659] : memref<8x4xf32, #tpu.memory_space<smem>>
    %1387 = vector.broadcast %1386 : f32 to vector<16x16xf32>
    %1388 = arith.mulf %1387, %1224 : vector<16x16xf32>
    %1389 = arith.addf %1385, %1388 : vector<16x16xf32>
    %c7_660 = arith.constant 7 : index
    %c0_661 = arith.constant 0 : index
    %1390 = memref.load %arg8[%c7_660, %c0_661] : memref<8x4xf32, #tpu.memory_space<smem>>
    %1391 = vector.broadcast %1390 : f32 to vector<16x16xf32>
    %1392 = arith.mulf %1391, %1360 : vector<16x16xf32>
    %1393 = arith.addf %1389, %1392 : vector<16x16xf32>
    %c0_662 = arith.constant 0 : index
    %1394 = memref.load %arg9[%c0_662] : memref<4xf32, #tpu.memory_space<smem>>
    %1395 = vector.broadcast %1394 : f32 to vector<16x16xf32>
    %1396 = arith.addf %1393, %1395 : vector<16x16xf32>
    %cst_663 = arith.constant 5.000000e-01 : f32
    %1397 = vector.broadcast %cst_663 : f32 to vector<16x16xf32>
    %1398 = arith.mulf %1397, %1396 : vector<16x16xf32>
    %cst_664 = arith.constant 0.707106769 : f32
    %1399 = vector.broadcast %cst_664 : f32 to vector<16x16xf32>
    %1400 = arith.mulf %1396, %1399 : vector<16x16xf32>
    %1401 = math.erf %1400 : vector<16x16xf32>
    %cst_665 = arith.constant 1.000000e+00 : f32
    %1402 = vector.broadcast %cst_665 : f32 to vector<16x16xf32>
    %1403 = arith.addf %1402, %1401 : vector<16x16xf32>
    %1404 = arith.mulf %1398, %1403 : vector<16x16xf32>
    %c0_666 = arith.constant 0 : index
    %c0_667 = arith.constant 0 : index
    %c0_668 = arith.constant 0 : index
    %c0_669 = arith.constant 0 : index
    %1405 = vector.load %arg10[%c0_666, %c0_667, %c0_668, %c0_669] : memref<1x4x16x16xf32, #tpu.memory_space<vmem>>, vector<1x1x16x16xf32>
    %1406 = vector.shape_cast %1405 : vector<1x1x16x16xf32> to vector<16x16xf32>
    %1407 = vector.shape_cast %1404 : vector<16x16xf32> to vector<1x1x16x16xf32>
    tpu.vector_store %arg10[%c0_666, %c0_667, %c0_668, %c0_669], %1407 {strides = array<i32>} : memref<1x4x16x16xf32, #tpu.memory_space<vmem>>, vector<1x1x16x16xf32>,
    %1408 = arith.mulf %1404, %1404 : vector<16x16xf32>
    %cst_670 = arith.constant dense<0.000000e+00> : vector<16xf32>
    %1409 = vector.multi_reduction <add>, %1408, %cst_670 [0] : vector<16x16xf32> to vector<16xf32>
    %1410 = vector.shape_cast %1409 : vector<16xf32> to vector<1x16xf32>
    %cst_671 = arith.constant 0.000000e+00 : f32
    %1411 = vector.broadcast %cst_671 : f32 to vector<16x16xf32>
    %c0_672 = arith.constant 0 : index
    %c1_673 = arith.constant 1 : index
    %1412 = memref.load %arg8[%c0_672, %c1_673] : memref<8x4xf32, #tpu.memory_space<smem>>
    %1413 = vector.broadcast %1412 : f32 to vector<16x16xf32>
    %1414 = arith.mulf %1413, %408 : vector<16x16xf32>
    %1415 = arith.addf %1411, %1414 : vector<16x16xf32>
    %c1_674 = arith.constant 1 : index
    %c1_675 = arith.constant 1 : index
    %1416 = memref.load %arg8[%c1_674, %c1_675] : memref<8x4xf32, #tpu.memory_space<smem>>
    %1417 = vector.broadcast %1416 : f32 to vector<16x16xf32>
    %1418 = arith.mulf %1417, %544 : vector<16x16xf32>
    %1419 = arith.addf %1415, %1418 : vector<16x16xf32>
    %c2_676 = arith.constant 2 : index
    %c1_677 = arith.constant 1 : index
    %1420 = memref.load %arg8[%c2_676, %c1_677] : memref<8x4xf32, #tpu.memory_space<smem>>
    %1421 = vector.broadcast %1420 : f32 to vector<16x16xf32>
    %1422 = arith.mulf %1421, %680 : vector<16x16xf32>
    %1423 = arith.addf %1419, %1422 : vector<16x16xf32>
    %c3_678 = arith.constant 3 : index
    %c1_679 = arith.constant 1 : index
    %1424 = memref.load %arg8[%c3_678, %c1_679] : memref<8x4xf32, #tpu.memory_space<smem>>
    %1425 = vector.broadcast %1424 : f32 to vector<16x16xf32>
    %1426 = arith.mulf %1425, %816 : vector<16x16xf32>
    %1427 = arith.addf %1423, %1426 : vector<16x16xf32>
    %c4_680 = arith.constant 4 : index
    %c1_681 = arith.constant 1 : index
    %1428 = memref.load %arg8[%c4_680, %c1_681] : memref<8x4xf32, #tpu.memory_space<smem>>
    %1429 = vector.broadcast %1428 : f32 to vector<16x16xf32>
    %1430 = arith.mulf %1429, %952 : vector<16x16xf32>
    %1431 = arith.addf %1427, %1430 : vector<16x16xf32>
    %c5_682 = arith.constant 5 : index
    %c1_683 = arith.constant 1 : index
    %1432 = memref.load %arg8[%c5_682, %c1_683] : memref<8x4xf32, #tpu.memory_space<smem>>
    %1433 = vector.broadcast %1432 : f32 to vector<16x16xf32>
    %1434 = arith.mulf %1433, %1088 : vector<16x16xf32>
    %1435 = arith.addf %1431, %1434 : vector<16x16xf32>
    %c6_684 = arith.constant 6 : index
    %c1_685 = arith.constant 1 : index
    %1436 = memref.load %arg8[%c6_684, %c1_685] : memref<8x4xf32, #tpu.memory_space<smem>>
    %1437 = vector.broadcast %1436 : f32 to vector<16x16xf32>
    %1438 = arith.mulf %1437, %1224 : vector<16x16xf32>
    %1439 = arith.addf %1435, %1438 : vector<16x16xf32>
    %c7_686 = arith.constant 7 : index
    %c1_687 = arith.constant 1 : index
    %1440 = memref.load %arg8[%c7_686, %c1_687] : memref<8x4xf32, #tpu.memory_space<smem>>
    %1441 = vector.broadcast %1440 : f32 to vector<16x16xf32>
    %1442 = arith.mulf %1441, %1360 : vector<16x16xf32>
    %1443 = arith.addf %1439, %1442 : vector<16x16xf32>
    %c1_688 = arith.constant 1 : index
    %1444 = memref.load %arg9[%c1_688] : memref<4xf32, #tpu.memory_space<smem>>
    %1445 = vector.broadcast %1444 : f32 to vector<16x16xf32>
    %1446 = arith.addf %1443, %1445 : vector<16x16xf32>
    %cst_689 = arith.constant 5.000000e-01 : f32
    %1447 = vector.broadcast %cst_689 : f32 to vector<16x16xf32>
    %1448 = arith.mulf %1447, %1446 : vector<16x16xf32>
    %cst_690 = arith.constant 0.707106769 : f32
    %1449 = vector.broadcast %cst_690 : f32 to vector<16x16xf32>
    %1450 = arith.mulf %1446, %1449 : vector<16x16xf32>
    %1451 = math.erf %1450 : vector<16x16xf32>
    %cst_691 = arith.constant 1.000000e+00 : f32
    %1452 = vector.broadcast %cst_691 : f32 to vector<16x16xf32>
    %1453 = arith.addf %1452, %1451 : vector<16x16xf32>
    %1454 = arith.mulf %1448, %1453 : vector<16x16xf32>
    %c0_692 = arith.constant 0 : index
    %c1_693 = arith.constant 1 : index
    %c0_694 = arith.constant 0 : index
    %c0_695 = arith.constant 0 : index
    %1455 = vector.load %arg10[%c0_692, %c1_693, %c0_694, %c0_695] : memref<1x4x16x16xf32, #tpu.memory_space<vmem>>, vector<1x1x16x16xf32>
    %1456 = vector.shape_cast %1455 : vector<1x1x16x16xf32> to vector<16x16xf32>
    %1457 = vector.shape_cast %1454 : vector<16x16xf32> to vector<1x1x16x16xf32>
    tpu.vector_store %arg10[%c0_692, %c1_693, %c0_694, %c0_695], %1457 {strides = array<i32>} : memref<1x4x16x16xf32, #tpu.memory_space<vmem>>, vector<1x1x16x16xf32>,
    %1458 = arith.mulf %1454, %1454 : vector<16x16xf32>
    %cst_696 = arith.constant dense<0.000000e+00> : vector<16xf32>
    %1459 = vector.multi_reduction <add>, %1458, %cst_696 [0] : vector<16x16xf32> to vector<16xf32>
    %1460 = vector.shape_cast %1459 : vector<16xf32> to vector<1x16xf32>
    %cst_697 = arith.constant 0.000000e+00 : f32
    %1461 = vector.broadcast %cst_697 : f32 to vector<16x16xf32>
    %c0_698 = arith.constant 0 : index
    %c2_699 = arith.constant 2 : index
    %1462 = memref.load %arg8[%c0_698, %c2_699] : memref<8x4xf32, #tpu.memory_space<smem>>
    %1463 = vector.broadcast %1462 : f32 to vector<16x16xf32>
    %1464 = arith.mulf %1463, %408 : vector<16x16xf32>
    %1465 = arith.addf %1461, %1464 : vector<16x16xf32>
    %c1_700 = arith.constant 1 : index
    %c2_701 = arith.constant 2 : index
    %1466 = memref.load %arg8[%c1_700, %c2_701] : memref<8x4xf32, #tpu.memory_space<smem>>
    %1467 = vector.broadcast %1466 : f32 to vector<16x16xf32>
    %1468 = arith.mulf %1467, %544 : vector<16x16xf32>
    %1469 = arith.addf %1465, %1468 : vector<16x16xf32>
    %c2_702 = arith.constant 2 : index
    %c2_703 = arith.constant 2 : index
    %1470 = memref.load %arg8[%c2_702, %c2_703] : memref<8x4xf32, #tpu.memory_space<smem>>
    %1471 = vector.broadcast %1470 : f32 to vector<16x16xf32>
    %1472 = arith.mulf %1471, %680 : vector<16x16xf32>
    %1473 = arith.addf %1469, %1472 : vector<16x16xf32>
    %c3_704 = arith.constant 3 : index
    %c2_705 = arith.constant 2 : index
    %1474 = memref.load %arg8[%c3_704, %c2_705] : memref<8x4xf32, #tpu.memory_space<smem>>
    %1475 = vector.broadcast %1474 : f32 to vector<16x16xf32>
    %1476 = arith.mulf %1475, %816 : vector<16x16xf32>
    %1477 = arith.addf %1473, %1476 : vector<16x16xf32>
    %c4_706 = arith.constant 4 : index
    %c2_707 = arith.constant 2 : index
    %1478 = memref.load %arg8[%c4_706, %c2_707] : memref<8x4xf32, #tpu.memory_space<smem>>
    %1479 = vector.broadcast %1478 : f32 to vector<16x16xf32>
    %1480 = arith.mulf %1479, %952 : vector<16x16xf32>
    %1481 = arith.addf %1477, %1480 : vector<16x16xf32>
    %c5_708 = arith.constant 5 : index
    %c2_709 = arith.constant 2 : index
    %1482 = memref.load %arg8[%c5_708, %c2_709] : memref<8x4xf32, #tpu.memory_space<smem>>
    %1483 = vector.broadcast %1482 : f32 to vector<16x16xf32>
    %1484 = arith.mulf %1483, %1088 : vector<16x16xf32>
    %1485 = arith.addf %1481, %1484 : vector<16x16xf32>
    %c6_710 = arith.constant 6 : index
    %c2_711 = arith.constant 2 : index
    %1486 = memref.load %arg8[%c6_710, %c2_711] : memref<8x4xf32, #tpu.memory_space<smem>>
    %1487 = vector.broadcast %1486 : f32 to vector<16x16xf32>
    %1488 = arith.mulf %1487, %1224 : vector<16x16xf32>
    %1489 = arith.addf %1485, %1488 : vector<16x16xf32>
    %c7_712 = arith.constant 7 : index
    %c2_713 = arith.constant 2 : index
    %1490 = memref.load %arg8[%c7_712, %c2_713] : memref<8x4xf32, #tpu.memory_space<smem>>
    %1491 = vector.broadcast %1490 : f32 to vector<16x16xf32>
    %1492 = arith.mulf %1491, %1360 : vector<16x16xf32>
    %1493 = arith.addf %1489, %1492 : vector<16x16xf32>
    %c2_714 = arith.constant 2 : index
    %1494 = memref.load %arg9[%c2_714] : memref<4xf32, #tpu.memory_space<smem>>
    %1495 = vector.broadcast %1494 : f32 to vector<16x16xf32>
    %1496 = arith.addf %1493, %1495 : vector<16x16xf32>
    %cst_715 = arith.constant 5.000000e-01 : f32
    %1497 = vector.broadcast %cst_715 : f32 to vector<16x16xf32>
    %1498 = arith.mulf %1497, %1496 : vector<16x16xf32>
    %cst_716 = arith.constant 0.707106769 : f32
    %1499 = vector.broadcast %cst_716 : f32 to vector<16x16xf32>
    %1500 = arith.mulf %1496, %1499 : vector<16x16xf32>
    %1501 = math.erf %1500 : vector<16x16xf32>
    %cst_717 = arith.constant 1.000000e+00 : f32
    %1502 = vector.broadcast %cst_717 : f32 to vector<16x16xf32>
    %1503 = arith.addf %1502, %1501 : vector<16x16xf32>
    %1504 = arith.mulf %1498, %1503 : vector<16x16xf32>
    %c0_718 = arith.constant 0 : index
    %c2_719 = arith.constant 2 : index
    %c0_720 = arith.constant 0 : index
    %c0_721 = arith.constant 0 : index
    %1505 = vector.load %arg10[%c0_718, %c2_719, %c0_720, %c0_721] : memref<1x4x16x16xf32, #tpu.memory_space<vmem>>, vector<1x1x16x16xf32>
    %1506 = vector.shape_cast %1505 : vector<1x1x16x16xf32> to vector<16x16xf32>
    %1507 = vector.shape_cast %1504 : vector<16x16xf32> to vector<1x1x16x16xf32>
    tpu.vector_store %arg10[%c0_718, %c2_719, %c0_720, %c0_721], %1507 {strides = array<i32>} : memref<1x4x16x16xf32, #tpu.memory_space<vmem>>, vector<1x1x16x16xf32>,
    %1508 = arith.mulf %1504, %1504 : vector<16x16xf32>
    %cst_722 = arith.constant dense<0.000000e+00> : vector<16xf32>
    %1509 = vector.multi_reduction <add>, %1508, %cst_722 [0] : vector<16x16xf32> to vector<16xf32>
    %1510 = vector.shape_cast %1509 : vector<16xf32> to vector<1x16xf32>
    %cst_723 = arith.constant 0.000000e+00 : f32
    %1511 = vector.broadcast %cst_723 : f32 to vector<16x16xf32>
    %c0_724 = arith.constant 0 : index
    %c3_725 = arith.constant 3 : index
    %1512 = memref.load %arg8[%c0_724, %c3_725] : memref<8x4xf32, #tpu.memory_space<smem>>
    %1513 = vector.broadcast %1512 : f32 to vector<16x16xf32>
    %1514 = arith.mulf %1513, %408 : vector<16x16xf32>
    %1515 = arith.addf %1511, %1514 : vector<16x16xf32>
    %c1_726 = arith.constant 1 : index
    %c3_727 = arith.constant 3 : index
    %1516 = memref.load %arg8[%c1_726, %c3_727] : memref<8x4xf32, #tpu.memory_space<smem>>
    %1517 = vector.broadcast %1516 : f32 to vector<16x16xf32>
    %1518 = arith.mulf %1517, %544 : vector<16x16xf32>
    %1519 = arith.addf %1515, %1518 : vector<16x16xf32>
    %c2_728 = arith.constant 2 : index
    %c3_729 = arith.constant 3 : index
    %1520 = memref.load %arg8[%c2_728, %c3_729] : memref<8x4xf32, #tpu.memory_space<smem>>
    %1521 = vector.broadcast %1520 : f32 to vector<16x16xf32>
    %1522 = arith.mulf %1521, %680 : vector<16x16xf32>
    %1523 = arith.addf %1519, %1522 : vector<16x16xf32>
    %c3_730 = arith.constant 3 : index
    %c3_731 = arith.constant 3 : index
    %1524 = memref.load %arg8[%c3_730, %c3_731] : memref<8x4xf32, #tpu.memory_space<smem>>
    %1525 = vector.broadcast %1524 : f32 to vector<16x16xf32>
    %1526 = arith.mulf %1525, %816 : vector<16x16xf32>
    %1527 = arith.addf %1523, %1526 : vector<16x16xf32>
    %c4_732 = arith.constant 4 : index
    %c3_733 = arith.constant 3 : index
    %1528 = memref.load %arg8[%c4_732, %c3_733] : memref<8x4xf32, #tpu.memory_space<smem>>
    %1529 = vector.broadcast %1528 : f32 to vector<16x16xf32>
    %1530 = arith.mulf %1529, %952 : vector<16x16xf32>
    %1531 = arith.addf %1527, %1530 : vector<16x16xf32>
    %c5_734 = arith.constant 5 : index
    %c3_735 = arith.constant 3 : index
    %1532 = memref.load %arg8[%c5_734, %c3_735] : memref<8x4xf32, #tpu.memory_space<smem>>
    %1533 = vector.broadcast %1532 : f32 to vector<16x16xf32>
    %1534 = arith.mulf %1533, %1088 : vector<16x16xf32>
    %1535 = arith.addf %1531, %1534 : vector<16x16xf32>
    %c6_736 = arith.constant 6 : index
    %c3_737 = arith.constant 3 : index
    %1536 = memref.load %arg8[%c6_736, %c3_737] : memref<8x4xf32, #tpu.memory_space<smem>>
    %1537 = vector.broadcast %1536 : f32 to vector<16x16xf32>
    %1538 = arith.mulf %1537, %1224 : vector<16x16xf32>
    %1539 = arith.addf %1535, %1538 : vector<16x16xf32>
    %c7_738 = arith.constant 7 : index
    %c3_739 = arith.constant 3 : index
    %1540 = memref.load %arg8[%c7_738, %c3_739] : memref<8x4xf32, #tpu.memory_space<smem>>
    %1541 = vector.broadcast %1540 : f32 to vector<16x16xf32>
    %1542 = arith.mulf %1541, %1360 : vector<16x16xf32>
    %1543 = arith.addf %1539, %1542 : vector<16x16xf32>
    %c3_740 = arith.constant 3 : index
    %1544 = memref.load %arg9[%c3_740] : memref<4xf32, #tpu.memory_space<smem>>
    %1545 = vector.broadcast %1544 : f32 to vector<16x16xf32>
    %1546 = arith.addf %1543, %1545 : vector<16x16xf32>
    %cst_741 = arith.constant 5.000000e-01 : f32
    %1547 = vector.broadcast %cst_741 : f32 to vector<16x16xf32>
    %1548 = arith.mulf %1547, %1546 : vector<16x16xf32>
    %cst_742 = arith.constant 0.707106769 : f32
    %1549 = vector.broadcast %cst_742 : f32 to vector<16x16xf32>
    %1550 = arith.mulf %1546, %1549 : vector<16x16xf32>
    %1551 = math.erf %1550 : vector<16x16xf32>
    %cst_743 = arith.constant 1.000000e+00 : f32
    %1552 = vector.broadcast %cst_743 : f32 to vector<16x16xf32>
    %1553 = arith.addf %1552, %1551 : vector<16x16xf32>
    %1554 = arith.mulf %1548, %1553 : vector<16x16xf32>
    %c0_744 = arith.constant 0 : index
    %c3_745 = arith.constant 3 : index
    %c0_746 = arith.constant 0 : index
    %c0_747 = arith.constant 0 : index
    %1555 = vector.load %arg10[%c0_744, %c3_745, %c0_746, %c0_747] : memref<1x4x16x16xf32, #tpu.memory_space<vmem>>, vector<1x1x16x16xf32>
    %1556 = vector.shape_cast %1555 : vector<1x1x16x16xf32> to vector<16x16xf32>
    %1557 = vector.shape_cast %1554 : vector<16x16xf32> to vector<1x1x16x16xf32>
    tpu.vector_store %arg10[%c0_744, %c3_745, %c0_746, %c0_747], %1557 {strides = array<i32>} : memref<1x4x16x16xf32, #tpu.memory_space<vmem>>, vector<1x1x16x16xf32>,
    %1558 = arith.mulf %1554, %1554 : vector<16x16xf32>
    %cst_748 = arith.constant dense<0.000000e+00> : vector<16xf32>
    %1559 = vector.multi_reduction <add>, %1558, %cst_748 [0] : vector<16x16xf32> to vector<16xf32>
    %1560 = vector.shape_cast %1559 : vector<16xf32> to vector<1x16xf32>
    %1561 = tpu.concatenate %1410, %1460, %1510, %1560 in 0 : vector<1x16xf32>, vector<1x16xf32>, vector<1x16xf32>, vector<1x16xf32> -> vector<4x16xf32>
    %c0_749 = arith.constant 0 : index
    %c0_750 = arith.constant 0 : index
    %c0_751 = arith.constant 0 : index
    %1562 = vector.load %arg11[%c0_749, %c0_750, %c0_751] : memref<1x4x16xf32, #tpu.memory_space<vmem>>, vector<1x4x16xf32>
    %1563 = vector.shape_cast %1562 : vector<1x4x16xf32> to vector<4x16xf32>
    %1564 = vector.shape_cast %1561 : vector<4x16xf32> to vector<1x4x16xf32>
    tpu.vector_store %arg11[%c0_749, %c0_750, %c0_751], %1564 {strides = array<i32>} : memref<1x4x16xf32, #tpu.memory_space<vmem>>, vector<1x4x16xf32>,
    return
  }
  func.func @transform_0(%arg0: i32) -> (i32, i32, i32, i32) {
    %c0_i32 = arith.constant 0 : i32
    %c0_i32_0 = arith.constant 0 : i32
    %c0_i32_1 = arith.constant 0 : i32
    %c0_i32_2 = arith.constant 0 : i32
    return %arg0, %c0_i32, %c0_i32_0, %c0_i32_1 : i32, i32, i32, i32
  }
  func.func @transform_1(%arg0: i32) -> (i32, i32) {
    %c0_i32 = arith.constant 0 : i32
    %c0_i32_0 = arith.constant 0 : i32
    %c0_i32_1 = arith.constant 0 : i32
    return %c0_i32, %c0_i32_0 : i32, i32
  }
  func.func @transform_2(%arg0: i32) -> i32 {
    %c0_i32 = arith.constant 0 : i32
    %c0_i32_0 = arith.constant 0 : i32
    return %c0_i32 : i32
  }
  func.func @transform_3(%arg0: i32) -> i32 {
    %c0_i32 = arith.constant 0 : i32
    %c0_i32_0 = arith.constant 0 : i32
    return %c0_i32 : i32
  }
  func.func @transform_4(%arg0: i32) -> i32 {
    %c0_i32 = arith.constant 0 : i32
    %c0_i32_0 = arith.constant 0 : i32
    return %c0_i32 : i32
  }
  func.func @transform_5(%arg0: i32) -> (i32, i32) {
    %c0_i32 = arith.constant 0 : i32
    %c0_i32_0 = arith.constant 0 : i32
    %c0_i32_1 = arith.constant 0 : i32
    return %c0_i32, %c0_i32_0 : i32, i32
  }
  func.func @transform_6(%arg0: i32) -> i32 {
    %c0_i32 = arith.constant 0 : i32
    %c0_i32_0 = arith.constant 0 : i32
    return %c0_i32 : i32
  }
  func.func @transform_7(%arg0: i32) -> (i32, i32) {
    %c0_i32 = arith.constant 0 : i32
    %c0_i32_0 = arith.constant 0 : i32
    %c0_i32_1 = arith.constant 0 : i32
    return %c0_i32, %c0_i32_0 : i32, i32
  }
  func.func @transform_8(%arg0: i32) -> i32 {
    %c0_i32 = arith.constant 0 : i32
    %c0_i32_0 = arith.constant 0 : i32
    return %c0_i32 : i32
  }
  func.func @transform_9(%arg0: i32) -> (i32, i32, i32, i32) {
    %c0_i32 = arith.constant 0 : i32
    %c0_i32_0 = arith.constant 0 : i32
    %c0_i32_1 = arith.constant 0 : i32
    %c0_i32_2 = arith.constant 0 : i32
    return %arg0, %c0_i32, %c0_i32_0, %c0_i32_1 : i32, i32, i32, i32
  }
  func.func @transform_10(%arg0: i32) -> (i32, i32, i32) {
    %c0_i32 = arith.constant 0 : i32
    %c0_i32_0 = arith.constant 0 : i32
    %c0_i32_1 = arith.constant 0 : i32
    return %arg0, %c0_i32, %c0_i32_0 : i32, i32, i32
  }
}

</mosaic_0001>

<llo_original>
// kernel: depthwise_block_forward.3
$region0: #{depthwise_block_forward.3}
  #allocation0 [shape = 'u32[]', space=smem, size = 0x4, offset = 0x4, fixed_abs, tag = 'smem constant byte address 0x4 - core index']
  #allocation1 [shape = 'u32[72,128]{1,0:T(1,128)}', space=vmem, size = 0x9000, scoped, tag = 'internal scratch']
  %s0 = inlined_call_operand.hbm [shape: f32[2,4,16,16], index: 0, kind: input, shape index: {}, may-alias: {0,4}]
  %s1 = inlined_call_operand.hbm [shape: f32[2,4,16,16], index: 1, kind: input, shape index: {}]
  %s2 = inlined_call_operand.vmem [shape: f32[4], index: 2, kind: input, shape index: {}]
  %s3 = inlined_call_operand.vmem [shape: f32[4], index: 3, kind: input, shape index: {}]
  %s4 = inlined_call_operand.hbm [shape: f32[2,4,16,16], index: 4, kind: output, shape index: {}, may-alias: {0,4}]
  %s5 = sld [smem:[#allocation0]]
  $region65: #{depthwise_block_forward.3} parent=0
    _
  %s7 = ssub.s32 1, %s5
  %s8 = scalar_select 0, %s7, %s5
  $region1: #{depthwise_block_forward.3} parent=0
    #allocation2 [shape = 'u8[65536]{0}', space=vmem, size = 0x10000, scoped, tag = 'input window, operand 0']
    #allocation3 [shape = 's32[2]{0}', space=sflag, size = 0x8, scoped, tag = 'scoped memory for depthwise_block_forward.3']
    #allocation4 [shape = 's32[2]{0}', space=sflag, size = 0x8, scoped, tag = 'scoped memory for depthwise_block_forward.3']
    #allocation5 [shape = 's32[2]{0}', space=sflag, size = 0x8, scoped, tag = 'scoped memory for depthwise_block_forward.3']
    #allocation6 [shape = 'u8[65536]{0}', space=vmem, size = 0x10000, scoped, tag = 'input window, operand 1']
    #allocation7 [shape = 's32[2]{0}', space=sflag, size = 0x8, scoped, tag = 'scoped memory for depthwise_block_forward.3']
    #allocation8 [shape = 'u8[512]{0}', space=smem, size = 0x200, scoped, tag = 'input window, operand 2, single buffered']
    #allocation9 [shape = 'u8[512]{0}', space=smem, size = 0x200, scoped, tag = 'input window, operand 3, single buffered']
    #allocation10 [shape = 's32[1]{0}', space=sflag, size = 0x4, scoped, tag = 'scoped memory for depthwise_block_forward.3']
    #allocation11 [shape = 'u8[65536]{0}', space=vmem, size = 0x10000, scoped, tag = 'output window, operand 0']
    %9 = vsyncpa [#allocation3], 0
    %s10 = scalar_lea.sflag [#allocation3], 1
    %11 = vsyncpa %s10, 0
    %12 = vsyncpa [#allocation7], 0
    %s13 = scalar_lea.sflag [#allocation7], 1
    %14 = vsyncpa %s13, 0
    %15 = vsyncpa [#allocation5], 0
    %16 = vsyncpa [#allocation10], 0
    %17 = vsyncpa [#allocation4], 0
    %s18 = scalar_lea.sflag [#allocation4], 1
    %19 = vsyncpa %s18, 0
    loop: start=0, step=1, limit=4
    $region2: #{depthwise_block_forward.3} parent=1 // loop_pre_header
      _
    $region3: #{depthwise_block_forward.3} parent=1 // loop_header
      %s21 = sphi 0, %s25
      %p22 = scmp.ge.s32.totalorder %s21, 4
      %s31 = sphi 0, %s33
      %s34 = sphi 0, %s31
      %s35 = sphi 0, %s34
      %s51 = sphi 0, %s35
      %s57 = sphi 0, %s59
      %s60 = sphi 0, %s57
      %s61 = sphi 0, %s60
      %s77 = sphi 0, %s61
      %s81 = sphi 0, %s81
      %s83 = sphi 0, %s81
      %s84 = sphi 0, %s83
      %s98 = sphi 0, %s84
      %s102 = sphi 0, %s102
      %s104 = sphi 0, %s102
      %s105 = sphi 0, %s104
      %s119 = sphi 0, %s105
      %s125 = sphi 0, %s127
      %s128 = sphi 0, %s125
      %s129 = sphi 0, %s128
      %s145 = sphi 0, %s129
    $region4: #{depthwise_block_forward.3} parent=1 // loop_header_branch
      %24 = sbr.rel (%p22) target = $region8
    $region5: #{depthwise_block_forward.3} parent=1 // loop_body
      %s26 = ssub.s32 %s21, 1
      %s27 = ssub.s32 %s21, 2
      %s28 = sadd.s32 %s21, 1
      %s29 = ssub.s32 %s21, %s28
      %p30 = scmp.eq.s32.totalorder %s29, 0
      %s32 = sadd.s32 %s31, 1
      %s33 = scalar_select %p30, %s31, %s32
      %p36 = pneg %p30
      %p37 = scmp.eq.s32.totalorder %s21, 1
      %p38 = por %p36, %p37
      %p39 = scmp.ne.s32.totalorder %s31, %s34
      %p40 = scmp.eq.s32.totalorder %s21, 0
      %p41 = por %p39, %p40
      %p42 = scmp.ne.s32.totalorder %s31, %s34
      %p43 = scmp.eq.s32.totalorder %s26, 1
      %p44 = por %p42, %p43
      %p45 = scmp.ne.s32.totalorder %s34, %s35
      %p46 = scmp.eq.s32.totalorder %s26, 0
      %p47 = por %p45, %p46
      %p48 = scmp.ne.s32.totalorder %s34, %s35
      %p49 = scmp.eq.s32.totalorder %s27, 1
      %p50 = por %p48, %p49
      %p52 = scmp.ne.s32.totalorder %s35, %s51
      %p53 = scmp.eq.s32.totalorder %s27, 0
      %p54 = por %p52, %p53
      %s55 = ssub.s32 %s21, %s28
      %p56 = scmp.eq.s32.totalorder %s55, 0
      %s58 = sadd.s32 %s57, 1
      %s59 = scalar_select %p56, %s57, %s58
      %p62 = pneg %p56
      %p63 = scmp.eq.s32.totalorder %s21, 1
      %p64 = por %p62, %p63
      %p65 = scmp.ne.s32.totalorder %s57, %s60
      %p66 = scmp.eq.s32.totalorder %s21, 0
      %p67 = por %p65, %p66
      %p68 = scmp.ne.s32.totalorder %s57, %s60
      %p69 = scmp.eq.s32.totalorder %s26, 1
      %p70 = por %p68, %p69
      %p71 = scmp.ne.s32.totalorder %s60, %s61
      %p72 = scmp.eq.s32.totalorder %s26, 0
      %p73 = por %p71, %p72
      %p74 = scmp.ne.s32.totalorder %s60, %s61
      %p75 = scmp.eq.s32.totalorder %s27, 1
      %p76 = por %p74, %p75
      %p78 = scmp.ne.s32.totalorder %s61, %s77
      %p79 = scmp.eq.s32.totalorder %s27, 0
      %p80 = por %p78, %p79
      %s82 = sadd.s32 %s81, 1
      %p85 = scmp.eq.s32.totalorder %s21, 1
      %p86 = scmp.ne.s32.totalorder %s81, %s83
      %p87 = scmp.eq.s32.totalorder %s21, 0
      %p88 = por %p86, %p87
      %p89 = scmp.ne.s32.totalorder %s81, %s83
      %p90 = scmp.eq.s32.totalorder %s26, 1
      %p91 = por %p89, %p90
      %p92 = scmp.ne.s32.totalorder %s83, %s84
      %p93 = scmp.eq.s32.totalorder %s26, 0
      %p94 = por %p92, %p93
      %p95 = scmp.ne.s32.totalorder %s83, %s84
      %p96 = scmp.eq.s32.totalorder %s27, 1
      %p97 = por %p95, %p96
      %p99 = scmp.ne.s32.totalorder %s84, %s98
      %p100 = scmp.eq.s32.totalorder %s27, 0
      %p101 = por %p99, %p100
      %s103 = sadd.s32 %s102, 1
      %p106 = scmp.eq.s32.totalorder %s21, 1
      %p107 = scmp.ne.s32.totalorder %s102, %s104
      %p108 = scmp.eq.s32.totalorder %s21, 0
      %p109 = por %p107, %p108
      %p110 = scmp.ne.s32.totalorder %s102, %s104
      %p111 = scmp.eq.s32.totalorder %s26, 1
      %p112 = por %p110, %p111
      %p113 = scmp.ne.s32.totalorder %s104, %s105
      %p114 = scmp.eq.s32.totalorder %s26, 0
      %p115 = por %p113, %p114
      %p116 = scmp.ne.s32.totalorder %s104, %s105
      %p117 = scmp.eq.s32.totalorder %s27, 1
      %p118 = por %p116, %p117
      %p120 = scmp.ne.s32.totalorder %s105, %s119
      %p121 = scmp.eq.s32.totalorder %s27, 0
      %p122 = por %p120, %p121
      %s123 = ssub.s32 %s21, %s28
      %p124 = scmp.eq.s32.totalorder %s123, 0
      %s126 = sadd.s32 %s125, 1
      %s127 = scalar_select %p124, %s125, %s126
      %p130 = pneg %p124
      %p131 = scmp.eq.s32.totalorder %s21, 1
      %p132 = por %p130, %p131
      %p133 = scmp.ne.s32.totalorder %s125, %s128
      %p134 = scmp.eq.s32.totalorder %s21, 0
      %p135 = por %p133, %p134
      %p136 = scmp.ne.s32.totalorder %s125, %s128
      %p137 = scmp.eq.s32.totalorder %s26, 1
      %p138 = por %p136, %p137
      %p139 = scmp.ne.s32.totalorder %s128, %s129
      %p140 = scmp.eq.s32.totalorder %s26, 0
      %p141 = por %p139, %p140
      %p142 = scmp.ne.s32.totalorder %s128, %s129
      %p143 = scmp.eq.s32.totalorder %s27, 1
      %p144 = por %p142, %p143
      %p146 = scmp.ne.s32.totalorder %s129, %s145
      %p147 = scmp.eq.s32.totalorder %s27, 0
      %p148 = por %p146, %p147
      %p149 = scmp.le.s32.totalorder 1, %s21
      %p150 = scmp.lt.s32.totalorder %s21, 3
      %p151 = pnand %p149, %p150
      %p152 = pneg %p151
      // Predicated region
      $region9: #{depthwise_block_forward.3} parent=5 // pred_check
        _
      $region10: #{depthwise_block_forward.3} parent=5 // pred_check_branch
        %154 = sbr.rel (%p151) target = $region12
      $region11: #{depthwise_block_forward.3} parent=5 // pred_region
        %s155 = ssub.s32 %s21, 1
        // Predicated region
        $region13: #{depthwise_block_forward.3} parent=11 // pred_check
          %p156 = pneg %p94
        $region14: #{depthwise_block_forward.3} parent=11 // pred_check_branch
          %158 = sbr.rel (%p156) target = $region16
        $region15: #{depthwise_block_forward.3} parent=11 // pred_region
          %160 = vsyncadd [#allocation5], 0
          %s162 = sshll.u32 %s2, 4
          %s163 = int_to_ptr.vmem [resolvable:$true] %s162
          %165 = dma.vmem_to_smem %s163, 16, [#allocation8], [#allocation5]
        $region16: #{depthwise_block_forward.3} parent=11 // pred_fallthru
          _
        // Predicated region
        $region17: #{depthwise_block_forward.3} parent=11 // pred_check
          %p166 = pneg %p115
        $region18: #{depthwise_block_forward.3} parent=11 // pred_check_branch
          %168 = sbr.rel (%p166) target = $region20
        $region19: #{depthwise_block_forward.3} parent=11 // pred_region
          %170 = vsyncadd [#allocation10], 0
          %s172 = sshll.u32 %s3, 4
          %s173 = int_to_ptr.vmem [resolvable:$true] %s172
          %175 = dma.vmem_to_smem %s173, 16, [#allocation9], [#allocation10]
        $region20: #{depthwise_block_forward.3} parent=11 // pred_fallthru
          _
      $region12: #{depthwise_block_forward.3} parent=5 // pred_fallthru
        _
      %p176 = scmp.lt.s32.totalorder %s21, 2
      // Predicated region
      $region21: #{depthwise_block_forward.3} parent=5 // pred_check
        %p177 = pneg %p176
      $region22: #{depthwise_block_forward.3} parent=5 // pred_check_branch
        %179 = sbr.rel (%p177) target = $region24
      $region23: #{depthwise_block_forward.3} parent=5 // pred_region
        // Predicated region
        $region25: #{depthwise_block_forward.3} parent=23 // pred_check
          %p180 = pneg %p41
        $region26: #{depthwise_block_forward.3} parent=23 // pred_check_branch
          %182 = sbr.rel (%p180) target = $region28
        $region27: #{depthwise_block_forward.3} parent=23 // pred_region
          %s183 = sand.u32 %s31, 1
          %s184 = scalar_lea.sflag [#allocation3], %s183
          %s185 = sand.u32 %s31, 1
          %s186 = smul.addr %s185, 64
          %s187 = scalar_lea.vmem [#allocation2], %s186
          %189 = vsyncadd %s184, 0
          %s190 = smul.addr %s21, 8
          %s191 = smul.addr %s190, 8
          %s192 = scalar_lea.hbm %s0, %s191
          %s193 = sshll.u32 %s192, 4
          %s194 = int_to_ptr.hbm [resolvable:$true] %s193
          %s195 = sshll.u32 %s187, 4
          %s196 = int_to_ptr.vmem [resolvable:$true] %s195
          %201 = dma.hbm_to_vmem [thread:$0]  %s194, 1024, %s196, %s184, 128, 128, 8
        $region28: #{depthwise_block_forward.3} parent=23 // pred_fallthru
          _
        // Predicated region
        $region29: #{depthwise_block_forward.3} parent=23 // pred_check
          %p202 = pneg %p67
        $region30: #{depthwise_block_forward.3} parent=23 // pred_check_branch
          %204 = sbr.rel (%p202) target = $region32
        $region31: #{depthwise_block_forward.3} parent=23 // pred_region
          %s205 = sand.u32 %s57, 1
          %s206 = scalar_lea.sflag [#allocation7], %s205
          %s207 = sand.u32 %s57, 1
          %s208 = smul.addr %s207, 64
          %s209 = scalar_lea.vmem [#allocation6], %s208
          %211 = vsyncadd %s206, 0
          %s212 = smul.addr %s21, 8
          %s213 = smul.addr %s212, 8
          %s214 = scalar_lea.hbm %s1, %s213
          %s215 = sshll.u32 %s214, 4
          %s216 = int_to_ptr.hbm [resolvable:$true] %s215
          %s217 = sshll.u32 %s209, 4
          %s218 = int_to_ptr.vmem [resolvable:$true] %s217
          %223 = dma.hbm_to_vmem [thread:$0]  %s216, 1024, %s218, %s206, 128, 128, 8
        $region32: #{depthwise_block_forward.3} parent=23 // pred_fallthru
          _
      $region24: #{depthwise_block_forward.3} parent=5 // pred_fallthru
        _
      %p224 = scmp.le.s32.totalorder 1, %s21
      %p225 = scmp.lt.s32.totalorder %s21, 3
      %p226 = pnand %p224, %p225
      %p227 = pneg %p226
      // Predicated region
      $region33: #{depthwise_block_forward.3} parent=5 // pred_check
        _
      $region34: #{depthwise_block_forward.3} parent=5 // pred_check_branch
        %229 = sbr.rel (%p226) target = $region36
      $region35: #{depthwise_block_forward.3} parent=5 // pred_region
        %s230 = ssub.s32 %s21, 1
        %s231 = sand.u32 %s34, 1
        %s232 = scalar_lea.sflag [#allocation3], %s231
        %s233 = sand.u32 %s34, 1
        %s234 = smul.addr %s233, 64
        %s235 = scalar_lea.vmem [#allocation2], %s234
        // Predicated region
        $region37: #{depthwise_block_forward.3} parent=35 // pred_check
          %p236 = pneg %p47
        $region38: #{depthwise_block_forward.3} parent=35 // pred_check_branch
          %238 = sbr.rel (%p236) target = $region40
        $region39: #{depthwise_block_forward.3} parent=35 // pred_region
          %240 = dma.done %s232, 1024
        $region40: #{depthwise_block_forward.3} parent=35 // pred_fallthru
          _
        %s241 = sand.u32 %s60, 1
        %s242 = scalar_lea.sflag [#allocation7], %s241
        %s243 = sand.u32 %s60, 1
        %s244 = smul.addr %s243, 64
        %s245 = scalar_lea.vmem [#allocation6], %s244
        // Predicated region
        $region41: #{depthwise_block_forward.3} parent=35 // pred_check
          %p246 = pneg %p73
        $region42: #{depthwise_block_forward.3} parent=35 // pred_check_branch
          %248 = sbr.rel (%p246) target = $region44
        $region43: #{depthwise_block_forward.3} parent=35 // pred_region
          %250 = dma.done %s242, 1024
        $region44: #{depthwise_block_forward.3} parent=35 // pred_fallthru
          _
        // Predicated region
        $region45: #{depthwise_block_forward.3} parent=35 // pred_check
          %p251 = pneg %p94
        $region46: #{depthwise_block_forward.3} parent=35 // pred_check_branch
          %253 = sbr.rel (%p251) target = $region48
        $region47: #{depthwise_block_forward.3} parent=35 // pred_region
          %255 = dma.done [#allocation5], 16
        $region48: #{depthwise_block_forward.3} parent=35 // pred_fallthru
          _
        // Predicated region
        $region49: #{depthwise_block_forward.3} parent=35 // pred_check
          %p256 = pneg %p115
        $region50: #{depthwise_block_forward.3} parent=35 // pred_check_branch
          %258 = sbr.rel (%p256) target = $region52
        $region51: #{depthwise_block_forward.3} parent=35 // pred_region
          %260 = dma.done [#allocation10], 16
        $region52: #{depthwise_block_forward.3} parent=35 // pred_fallthru
          _
        %261 = sfence
        %s262 = sand.u32 %s34, 1
        %s263 = scalar_lea.sflag [#allocation3], %s262
        %s264 = sand.u32 %s34, 1
        %s265 = smul.addr %s264, 64
        %s266 = scalar_lea.vmem [#allocation2], %s265
        %p267 = pneg %p47
        %p268 = pneg %p44
        %s269 = sand.u32 %s60, 1
        %s270 = scalar_lea.sflag [#allocation7], %s269
        %s271 = sand.u32 %s60, 1
        %s272 = smul.addr %s271, 64
        %s273 = scalar_lea.vmem [#allocation6], %s272
        %p274 = pneg %p73
        %p275 = pneg %p70
        %p276 = pneg %p94
        %p277 = pneg %p91
        %p278 = pneg %p115
        %p279 = pneg %p112
        %p280 = pneg %p141
        %p281 = pneg %p138
        %s282 = sand.u32 %s128, 1
        %s283 = scalar_lea.sflag [#allocation4], %s282
        %s284 = sand.u32 %s128, 1
        %s285 = smul.addr %s284, 64
        %s286 = scalar_lea.vmem [#allocation11], %s285
        %v287 = vld [vmem:[%s235] sm:$0xff]
        %v288 = vld [vmem:[%s235 + $0x8] sm:$0xff]
        %v289 = vld [vmem:[%s245] sm:$0xff]
        %v290 = vld [vmem:[%s245 + $0x8] sm:$0xff]
        %v291 = vadd.f32 %v289, %v287
        %v292 = vadd.f32 %v290, %v288
        %s293 = sld [smem:[#allocation8]]
        %v294 = vstv %s293
        %v295 = vmul.f32 %v294, %v287
        %v296 = vmul.f32 %v294, %v288
        %v297 = vadd.f32 %v291, %v295
        %v298 = vadd.f32 %v292, %v296
        %s299 = sld [smem:[#allocation9]]
        %v300 = vstv %s299
        %v301 = vadd.f32 %v297, %v300
        %v302 = vadd.f32 %v298, %v300
        %vm303 = vcmask 130048
        %304 = vst.msk [vmem:[%s286] sm:$0xff] %vm303, %v301
        %305 = vst.msk [vmem:[%s286 + $0x8] sm:$0xff] %vm303, %v302
        %s306 = scalar_lea.vmem %s235, 16 [#allocation2]
        %v307 = vld [vmem:[%s306] sm:$0xff]
        %v308 = vld [vmem:[%s306 + $0x8] sm:$0xff]
        %s309 = scalar_lea.vmem %s245, 16 [#allocation6]
        %v310 = vld [vmem:[%s309] sm:$0xff]
        %v311 = vld [vmem:[%s309 + $0x8] sm:$0xff]
        %v312 = vadd.f32 %v310, %v307
        %v313 = vadd.f32 %v311, %v308
        %s314 = sld [smem:[#allocation8 + $0x1]]
        %v315 = vstv %s314
        %v316 = vmul.f32 %v315, %v307
        %v317 = vmul.f32 %v315, %v308
        %v318 = vadd.f32 %v312, %v316
        %v319 = vadd.f32 %v313, %v317
        %s320 = sld [smem:[#allocation9 + $0x1]]
        %v321 = vstv %s320
        %v322 = vadd.f32 %v318, %v321
        %v323 = vadd.f32 %v319, %v321
        %s324 = scalar_lea.vmem %s286, 16 [#allocation11]
        %325 = vst.msk [vmem:[%s324] sm:$0xff] %vm303, %v322
        %326 = vst.msk [vmem:[%s324 + $0x8] sm:$0xff] %vm303, %v323
        %s327 = scalar_lea.vmem %s235, 32 [#allocation2]
        %v328 = vld [vmem:[%s327] sm:$0xff]
        %v329 = vld [vmem:[%s327 + $0x8] sm:$0xff]
        %s330 = scalar_lea.vmem %s245, 32 [#allocation6]
        %v331 = vld [vmem:[%s330] sm:$0xff]
        %v332 = vld [vmem:[%s330 + $0x8] sm:$0xff]
        %v333 = vadd.f32 %v331, %v328
        %v334 = vadd.f32 %v332, %v329
        %s335 = sld [smem:[#allocation8 + $0x2]]
        %v336 = vstv %s335
        %v337 = vmul.f32 %v336, %v328
        %v338 = vmul.f32 %v336, %v329
        %v339 = vadd.f32 %v333, %v337
        %v340 = vadd.f32 %v334, %v338
        %s341 = sld [smem:[#allocation9 + $0x2]]
        %v342 = vstv %s341
        %v343 = vadd.f32 %v339, %v342
        %v344 = vadd.f32 %v340, %v342
        %s345 = scalar_lea.vmem %s286, 32 [#allocation11]
        %346 = vst.msk [vmem:[%s345] sm:$0xff] %vm303, %v343
        %347 = vst.msk [vmem:[%s345 + $0x8] sm:$0xff] %vm303, %v344
        %s348 = scalar_lea.vmem %s235, 48 [#allocation2]
        %v349 = vld [vmem:[%s348] sm:$0xff]
        %v350 = vld [vmem:[%s348 + $0x8] sm:$0xff]
        %s351 = scalar_lea.vmem %s245, 48 [#allocation6]
        %v352 = vld [vmem:[%s351] sm:$0xff]
        %v353 = vld [vmem:[%s351 + $0x8] sm:$0xff]
        %v354 = vadd.f32 %v352, %v349
        %v355 = vadd.f32 %v353, %v350
        %s356 = sld [smem:[#allocation8 + $0x3]]
        %v357 = vstv %s356
        %v358 = vmul.f32 %v357, %v349
        %v359 = vmul.f32 %v357, %v350
        %v360 = vadd.f32 %v354, %v358
        %v361 = vadd.f32 %v355, %v359
        %s362 = sld [smem:[#allocation9 + $0x3]]
        %v363 = vstv %s362
        %v364 = vadd.f32 %v360, %v363
        %v365 = vadd.f32 %v361, %v363
        %s366 = scalar_lea.vmem %s286, 48 [#allocation11]
        %367 = vst.msk [vmem:[%s366] sm:$0xff] %vm303, %v364
        %368 = vst.msk [vmem:[%s366 + $0x8] sm:$0xff] %vm303, %v365
        %s369 = sand.u32 %s128, 1
        %s370 = scalar_lea.sflag [#allocation4], %s369
        %s371 = sand.u32 %s128, 1
        %s372 = smul.addr %s371, 64
        %s373 = scalar_lea.vmem [#allocation11], %s372
        // Predicated region
        $region53: #{depthwise_block_forward.3} parent=35 // pred_check
          %p374 = pneg %p138
        $region54: #{depthwise_block_forward.3} parent=35 // pred_check_branch
          %376 = sbr.rel (%p374) target = $region56
        $region55: #{depthwise_block_forward.3} parent=35 // pred_region
          %378 = vsyncadd %s370, 0
          %s379 = smul.addr %s26, 8
          %s380 = smul.addr %s379, 8
          %s381 = scalar_lea.hbm %s4, %s380
          %s382 = sshll.u32 %s373, 4
          %s383 = int_to_ptr.vmem [resolvable:$true] %s382
          %s384 = sshll.u32 %s381, 4
          %s385 = int_to_ptr.hbm [resolvable:$true] %s384
          %390 = dma.vmem_to_hbm [thread:$0]  %s383, 1024, %s385, %s370, 128, 128, 8
        $region56: #{depthwise_block_forward.3} parent=35 // pred_fallthru
          _
      $region36: #{depthwise_block_forward.3} parent=5 // pred_fallthru
        _
      %p391 = scmp.le.s32.totalorder 2, %s21
      // Predicated region
      $region57: #{depthwise_block_forward.3} parent=5 // pred_check
        %p392 = pneg %p391
      $region58: #{depthwise_block_forward.3} parent=5 // pred_check_branch
        %394 = sbr.rel (%p392) target = $region60
      $region59: #{depthwise_block_forward.3} parent=5 // pred_region
        %s395 = ssub.s32 %s21, 2
        // Predicated region
        $region61: #{depthwise_block_forward.3} parent=59 // pred_check
          %p396 = pneg %p144
        $region62: #{depthwise_block_forward.3} parent=59 // pred_check_branch
          %398 = sbr.rel (%p396) target = $region64
        $region63: #{depthwise_block_forward.3} parent=59 // pred_region
          %s399 = sand.u32 %s129, 1
          %s400 = scalar_lea.sflag [#allocation4], %s399
          %s401 = sand.u32 %s129, 1
          %s402 = smul.addr %s401, 64
          %s403 = scalar_lea.vmem [#allocation11], %s402
          %405 = dma.done %s400, 1024
        $region64: #{depthwise_block_forward.3} parent=59 // pred_fallthru
          _
      $region60: #{depthwise_block_forward.3} parent=5 // pred_fallthru
        _
    $region6: #{depthwise_block_forward.3} parent=1 // loop_footer
      %s25 = sadd.s32 1, %s21
    $region7: #{depthwise_block_forward.3} parent=1 // loop_footer_branch
      %20 = sbr.rel target = $region3
    $region8: #{depthwise_block_forward.3} parent=1 // loop_exit
      _
    %406 = vsyncpa [#allocation3], 1
    %s407 = scalar_lea.sflag [#allocation3], 1
    %408 = vsyncpa %s407, 1
    %409 = vsyncpa [#allocation7], 1
    %s410 = scalar_lea.sflag [#allocation7], 1
    %411 = vsyncpa %s410, 1
    %412 = vsyncpa [#allocation4], 1
    %s413 = scalar_lea.sflag [#allocation4], 1
    %414 = vsyncpa %s413, 1
    %415 = vsyncpa [#allocation5], 1
    %s416 = scalar_lea.sflag [#allocation5], 1
    %417 = vsyncpa %s416, 1
    %418 = vsyncpa [#allocation10], 1

// kernel: depthwise_block_forward.2
$region0: #{depthwise_block_forward.2}
  #allocation0 [shape = 'u32[]', space=smem, size = 0x4, offset = 0x4, fixed_abs, tag = 'smem constant byte address 0x4 - core index']
  #allocation1 [shape = 'u32[72,128]{1,0:T(1,128)}', space=vmem, size = 0x9000, scoped, tag = 'internal scratch']
  %s0 = inlined_call_operand.hbm [shape: f32[2,4,16,16], index: 0, kind: input, shape index: {}]
  %s1 = inlined_call_operand.vmem [shape: f32[4,8], index: 1, kind: input, shape index: {}]
  %s2 = inlined_call_operand.vmem [shape: f32[8], index: 2, kind: input, shape index: {}]
  %s3 = inlined_call_operand.vmem [shape: f32[8], index: 3, kind: input, shape index: {}]
  %s4 = inlined_call_operand.vmem [shape: f32[8], index: 4, kind: input, shape index: {}]
  %s5 = inlined_call_operand.vmem [shape: f32[9,8], index: 5, kind: input, shape index: {}]
  %s6 = inlined_call_operand.vmem [shape: f32[8], index: 6, kind: input, shape index: {}]
  %s7 = inlined_call_operand.vmem [shape: f32[8,4], index: 7, kind: input, shape index: {}]
  %s8 = inlined_call_operand.vmem [shape: f32[4], index: 8, kind: input, shape index: {}]
  %s9 = inlined_call_operand.hbm [shape: f32[2,4,16,16], index: 9, kind: output, shape index: {0}]
  %s10 = inlined_call_operand.vmem [shape: f32[2,4,16], index: 10, kind: output, shape index: {1}]
  %11 = xla_tuple %s9, %s10
  %s12 = sld [smem:[#allocation0]]
  $region113: #{depthwise_block_forward.2} parent=0
    _
  %s14 = ssub.s32 1, %s12
  %s15 = scalar_select 0, %s14, %s12
  $region1: #{depthwise_block_forward.2} parent=0
    #allocation2 [shape = 'u8[65536]{0}', space=vmem, size = 0x10000, scoped, tag = 'input window, operand 0']
    #allocation3 [shape = 's32[2]{0}', space=sflag, size = 0x8, scoped, tag = 'scoped memory for depthwise_block_forward.2']
    #allocation4 [shape = 's32[2]{0}', space=sflag, size = 0x8, scoped, tag = 'scoped memory for depthwise_block_forward.2']
    #allocation5 [shape = 's32[2]{0}', space=sflag, size = 0x8, scoped, tag = 'scoped memory for depthwise_block_forward.2']
    #allocation6 [shape = 'u8[2048]{0}', space=smem, size = 0x800, scoped, tag = 'input window, operand 1, single buffered']
    #allocation7 [shape = 'u8[512]{0}', space=smem, size = 0x200, scoped, tag = 'input window, operand 2, single buffered']
    #allocation8 [shape = 's32[1]{0}', space=sflag, size = 0x4, scoped, tag = 'scoped memory for depthwise_block_forward.2']
    #allocation9 [shape = 'u8[512]{0}', space=smem, size = 0x200, scoped, tag = 'input window, operand 3, single buffered']
    #allocation10 [shape = 'u8[512]{0}', space=smem, size = 0x200, scoped, tag = 'input window, operand 4, single buffered']
    #allocation11 [shape = 's32[1]{0}', space=sflag, size = 0x4, scoped, tag = 'scoped memory for depthwise_block_forward.2']
    #allocation12 [shape = 'u8[8192]{0}', space=smem, size = 0x2000, scoped, tag = 'input window, operand 5, single buffered']
    #allocation13 [shape = 'u8[512]{0}', space=smem, size = 0x200, scoped, tag = 'input window, operand 6, single buffered']
    #allocation14 [shape = 's32[1]{0}', space=sflag, size = 0x4, scoped, tag = 'scoped memory for depthwise_block_forward.2']
    #allocation15 [shape = 'u8[4096]{0}', space=smem, size = 0x1000, scoped, tag = 'input window, operand 7, single buffered']
    #allocation16 [shape = 'u8[512]{0}', space=smem, size = 0x200, scoped, tag = 'input window, operand 8, single buffered']
    #allocation17 [shape = 's32[1]{0}', space=sflag, size = 0x4, scoped, tag = 'scoped memory for depthwise_block_forward.2']
    #allocation18 [shape = 'u8[65536]{0}', space=vmem, size = 0x10000, scoped, tag = 'output window, operand 0']
    %16 = vsyncpa [#allocation3], 0
    %s17 = scalar_lea.sflag [#allocation3], 1
    %18 = vsyncpa %s17, 0
    %19 = vsyncpa [#allocation5], 0
    %20 = vsyncpa [#allocation8], 0
    %21 = vsyncpa [#allocation11], 0
    %22 = vsyncpa [#allocation14], 0
    %23 = vsyncpa [#allocation17], 0
    %24 = vsyncpa [#allocation4], 0
    %s25 = scalar_lea.sflag [#allocation4], 1
    %26 = vsyncpa %s25, 0
    loop: start=0, step=1, limit=4
    $region2: #{depthwise_block_forward.2} parent=1 // loop_pre_header
      _
    $region3: #{depthwise_block_forward.2} parent=1 // loop_header
      %s28 = sphi 0, %s32
      %p29 = scmp.ge.s32.totalorder %s28, 4
      %s38 = sphi 0, %s40
      %s41 = sphi 0, %s38
      %s42 = sphi 0, %s41
      %s58 = sphi 0, %s42
      %s62 = sphi 0, %s62
      %s64 = sphi 0, %s62
      %s65 = sphi 0, %s64
      %s79 = sphi 0, %s65
      %s83 = sphi 0, %s83
      %s85 = sphi 0, %s83
      %s86 = sphi 0, %s85
      %s100 = sphi 0, %s86
      %s104 = sphi 0, %s104
      %s106 = sphi 0, %s104
      %s107 = sphi 0, %s106
      %s121 = sphi 0, %s107
      %s125 = sphi 0, %s125
      %s127 = sphi 0, %s125
      %s128 = sphi 0, %s127
      %s142 = sphi 0, %s128
      %s146 = sphi 0, %s146
      %s148 = sphi 0, %s146
      %s149 = sphi 0, %s148
      %s163 = sphi 0, %s149
      %s167 = sphi 0, %s167
      %s169 = sphi 0, %s167
      %s170 = sphi 0, %s169
      %s184 = sphi 0, %s170
      %s188 = sphi 0, %s188
      %s190 = sphi 0, %s188
      %s191 = sphi 0, %s190
      %s205 = sphi 0, %s191
      %s209 = sphi 0, %s209
      %s211 = sphi 0, %s209
      %s212 = sphi 0, %s211
      %s226 = sphi 0, %s212
      %s232 = sphi 0, %s234
      %s235 = sphi 0, %s232
      %s236 = sphi 0, %s235
      %s252 = sphi 0, %s236
      %s258 = sphi 0, %s260
      %s261 = sphi 0, %s258
      %s262 = sphi 0, %s261
      %s278 = sphi 0, %s262
    $region4: #{depthwise_block_forward.2} parent=1 // loop_header_branch
      %31 = sbr.rel (%p29) target = $region8
    $region5: #{depthwise_block_forward.2} parent=1 // loop_body
      %s33 = ssub.s32 %s28, 1
      %s34 = ssub.s32 %s28, 2
      %s35 = sadd.s32 %s28, 1
      %s36 = ssub.s32 %s28, %s35
      %p37 = scmp.eq.s32.totalorder %s36, 0
      %s39 = sadd.s32 %s38, 1
      %s40 = scalar_select %p37, %s38, %s39
      %p43 = pneg %p37
      %p44 = scmp.eq.s32.totalorder %s28, 1
      %p45 = por %p43, %p44
      %p46 = scmp.ne.s32.totalorder %s38, %s41
      %p47 = scmp.eq.s32.totalorder %s28, 0
      %p48 = por %p46, %p47
      %p49 = scmp.ne.s32.totalorder %s38, %s41
      %p50 = scmp.eq.s32.totalorder %s33, 1
      %p51 = por %p49, %p50
      %p52 = scmp.ne.s32.totalorder %s41, %s42
      %p53 = scmp.eq.s32.totalorder %s33, 0
      %p54 = por %p52, %p53
      %p55 = scmp.ne.s32.totalorder %s41, %s42
      %p56 = scmp.eq.s32.totalorder %s34, 1
      %p57 = por %p55, %p56
      %p59 = scmp.ne.s32.totalorder %s42, %s58
      %p60 = scmp.eq.s32.totalorder %s34, 0
      %p61 = por %p59, %p60
      %s63 = sadd.s32 %s62, 1
      %p66 = scmp.eq.s32.totalorder %s28, 1
      %p67 = scmp.ne.s32.totalorder %s62, %s64
      %p68 = scmp.eq.s32.totalorder %s28, 0
      %p69 = por %p67, %p68
      %p70 = scmp.ne.s32.totalorder %s62, %s64
      %p71 = scmp.eq.s32.totalorder %s33, 1
      %p72 = por %p70, %p71
      %p73 = scmp.ne.s32.totalorder %s64, %s65
      %p74 = scmp.eq.s32.totalorder %s33, 0
      %p75 = por %p73, %p74
      %p76 = scmp.ne.s32.totalorder %s64, %s65
      %p77 = scmp.eq.s32.totalorder %s34, 1
      %p78 = por %p76, %p77
      %p80 = scmp.ne.s32.totalorder %s65, %s79
      %p81 = scmp.eq.s32.totalorder %s34, 0
      %p82 = por %p80, %p81
      %s84 = sadd.s32 %s83, 1
      %p87 = scmp.eq.s32.totalorder %s28, 1
      %p88 = scmp.ne.s32.totalorder %s83, %s85
      %p89 = scmp.eq.s32.totalorder %s28, 0
      %p90 = por %p88, %p89
      %p91 = scmp.ne.s32.totalorder %s83, %s85
      %p92 = scmp.eq.s32.totalorder %s33, 1
      %p93 = por %p91, %p92
      %p94 = scmp.ne.s32.totalorder %s85, %s86
      %p95 = scmp.eq.s32.totalorder %s33, 0
      %p96 = por %p94, %p95
      %p97 = scmp.ne.s32.totalorder %s85, %s86
      %p98 = scmp.eq.s32.totalorder %s34, 1
      %p99 = por %p97, %p98
      %p101 = scmp.ne.s32.totalorder %s86, %s100
      %p102 = scmp.eq.s32.totalorder %s34, 0
      %p103 = por %p101, %p102
      %s105 = sadd.s32 %s104, 1
      %p108 = scmp.eq.s32.totalorder %s28, 1
      %p109 = scmp.ne.s32.totalorder %s104, %s106
      %p110 = scmp.eq.s32.totalorder %s28, 0
      %p111 = por %p109, %p110
      %p112 = scmp.ne.s32.totalorder %s104, %s106
      %p113 = scmp.eq.s32.totalorder %s33, 1
      %p114 = por %p112, %p113
      %p115 = scmp.ne.s32.totalorder %s106, %s107
      %p116 = scmp.eq.s32.totalorder %s33, 0
      %p117 = por %p115, %p116
      %p118 = scmp.ne.s32.totalorder %s106, %s107
      %p119 = scmp.eq.s32.totalorder %s34, 1
      %p120 = por %p118, %p119
      %p122 = scmp.ne.s32.totalorder %s107, %s121
      %p123 = scmp.eq.s32.totalorder %s34, 0
      %p124 = por %p122, %p123
      %s126 = sadd.s32 %s125, 1
      %p129 = scmp.eq.s32.totalorder %s28, 1
      %p130 = scmp.ne.s32.totalorder %s125, %s127
      %p131 = scmp.eq.s32.totalorder %s28, 0
      %p132 = por %p130, %p131
      %p133 = scmp.ne.s32.totalorder %s125, %s127
      %p134 = scmp.eq.s32.totalorder %s33, 1
      %p135 = por %p133, %p134
      %p136 = scmp.ne.s32.totalorder %s127, %s128
      %p137 = scmp.eq.s32.totalorder %s33, 0
      %p138 = por %p136, %p137
      %p139 = scmp.ne.s32.totalorder %s127, %s128
      %p140 = scmp.eq.s32.totalorder %s34, 1
      %p141 = por %p139, %p140
      %p143 = scmp.ne.s32.totalorder %s128, %s142
      %p144 = scmp.eq.s32.totalorder %s34, 0
      %p145 = por %p143, %p144
      %s147 = sadd.s32 %s146, 1
      %p150 = scmp.eq.s32.totalorder %s28, 1
      %p151 = scmp.ne.s32.totalorder %s146, %s148
      %p152 = scmp.eq.s32.totalorder %s28, 0
      %p153 = por %p151, %p152
      %p154 = scmp.ne.s32.totalorder %s146, %s148
      %p155 = scmp.eq.s32.totalorder %s33, 1
      %p156 = por %p154, %p155
      %p157 = scmp.ne.s32.totalorder %s148, %s149
      %p158 = scmp.eq.s32.totalorder %s33, 0
      %p159 = por %p157, %p158
      %p160 = scmp.ne.s32.totalorder %s148, %s149
      %p161 = scmp.eq.s32.totalorder %s34, 1
      %p162 = por %p160, %p161
      %p164 = scmp.ne.s32.totalorder %s149, %s163
      %p165 = scmp.eq.s32.totalorder %s34, 0
      %p166 = por %p164, %p165
      %s168 = sadd.s32 %s167, 1
      %p171 = scmp.eq.s32.totalorder %s28, 1
      %p172 = scmp.ne.s32.totalorder %s167, %s169
      %p173 = scmp.eq.s32.totalorder %s28, 0
      %p174 = por %p172, %p173
      %p175 = scmp.ne.s32.totalorder %s167, %s169
      %p176 = scmp.eq.s32.totalorder %s33, 1
      %p177 = por %p175, %p176
      %p178 = scmp.ne.s32.totalorder %s169, %s170
      %p179 = scmp.eq.s32.totalorder %s33, 0
      %p180 = por %p178, %p179
      %p181 = scmp.ne.s32.totalorder %s169, %s170
      %p182 = scmp.eq.s32.totalorder %s34, 1
      %p183 = por %p181, %p182
      %p185 = scmp.ne.s32.totalorder %s170, %s184
      %p186 = scmp.eq.s32.totalorder %s34, 0
      %p187 = por %p185, %p186
      %s189 = sadd.s32 %s188, 1
      %p192 = scmp.eq.s32.totalorder %s28, 1
      %p193 = scmp.ne.s32.totalorder %s188, %s190
      %p194 = scmp.eq.s32.totalorder %s28, 0
      %p195 = por %p193, %p194
      %p196 = scmp.ne.s32.totalorder %s188, %s190
      %p197 = scmp.eq.s32.totalorder %s33, 1
      %p198 = por %p196, %p197
      %p199 = scmp.ne.s32.totalorder %s190, %s191
      %p200 = scmp.eq.s32.totalorder %s33, 0
      %p201 = por %p199, %p200
      %p202 = scmp.ne.s32.totalorder %s190, %s191
      %p203 = scmp.eq.s32.totalorder %s34, 1
      %p204 = por %p202, %p203
      %p206 = scmp.ne.s32.totalorder %s191, %s205
      %p207 = scmp.eq.s32.totalorder %s34, 0
      %p208 = por %p206, %p207
      %s210 = sadd.s32 %s209, 1
      %p213 = scmp.eq.s32.totalorder %s28, 1
      %p214 = scmp.ne.s32.totalorder %s209, %s211
      %p215 = scmp.eq.s32.totalorder %s28, 0
      %p216 = por %p214, %p215
      %p217 = scmp.ne.s32.totalorder %s209, %s211
      %p218 = scmp.eq.s32.totalorder %s33, 1
      %p219 = por %p217, %p218
      %p220 = scmp.ne.s32.totalorder %s211, %s212
      %p221 = scmp.eq.s32.totalorder %s33, 0
      %p222 = por %p220, %p221
      %p223 = scmp.ne.s32.totalorder %s211, %s212
      %p224 = scmp.eq.s32.totalorder %s34, 1
      %p225 = por %p223, %p224
      %p227 = scmp.ne.s32.totalorder %s212, %s226
      %p228 = scmp.eq.s32.totalorder %s34, 0
      %p229 = por %p227, %p228
      %s230 = ssub.s32 %s28, %s35
      %p231 = scmp.eq.s32.totalorder %s230, 0
      %s233 = sadd.s32 %s232, 1
      %s234 = scalar_select %p231, %s232, %s233
      %p237 = pneg %p231
      %p238 = scmp.eq.s32.totalorder %s28, 1
      %p239 = por %p237, %p238
      %p240 = scmp.ne.s32.totalorder %s232, %s235
      %p241 = scmp.eq.s32.totalorder %s28, 0
      %p242 = por %p240, %p241
      %p243 = scmp.ne.s32.totalorder %s232, %s235
      %p244 = scmp.eq.s32.totalorder %s33, 1
      %p245 = por %p243, %p244
      %p246 = scmp.ne.s32.totalorder %s235, %s236
      %p247 = scmp.eq.s32.totalorder %s33, 0
      %p248 = por %p246, %p247
      %p249 = scmp.ne.s32.totalorder %s235, %s236
      %p250 = scmp.eq.s32.totalorder %s34, 1
      %p251 = por %p249, %p250
      %p253 = scmp.ne.s32.totalorder %s236, %s252
      %p254 = scmp.eq.s32.totalorder %s34, 0
      %p255 = por %p253, %p254
      %s256 = ssub.s32 %s28, %s35
      %p257 = scmp.eq.s32.totalorder %s256, 0
      %s259 = sadd.s32 %s258, 1
      %s260 = scalar_select %p257, %s258, %s259
      %p263 = pneg %p257
      %p264 = scmp.eq.s32.totalorder %s28, 1
      %p265 = por %p263, %p264
      %p266 = scmp.ne.s32.totalorder %s258, %s261
      %p267 = scmp.eq.s32.totalorder %s28, 0
      %p268 = por %p266, %p267
      %p269 = scmp.ne.s32.totalorder %s258, %s261
      %p270 = scmp.eq.s32.totalorder %s33, 1
      %p271 = por %p269, %p270
      %p272 = scmp.ne.s32.totalorder %s261, %s262
      %p273 = scmp.eq.s32.totalorder %s33, 0
      %p274 = por %p272, %p273
      %p275 = scmp.ne.s32.totalorder %s261, %s262
      %p276 = scmp.eq.s32.totalorder %s34, 1
      %p277 = por %p275, %p276
      %p279 = scmp.ne.s32.totalorder %s262, %s278
      %p280 = scmp.eq.s32.totalorder %s34, 0
      %p281 = por %p279, %p280
      %p282 = scmp.le.s32.totalorder 1, %s28
      %p283 = scmp.lt.s32.totalorder %s28, 3
      %p284 = pnand %p282, %p283
      %p285 = pneg %p284
      // Predicated region
      $region9: #{depthwise_block_forward.2} parent=5 // pred_check
        _
      $region10: #{depthwise_block_forward.2} parent=5 // pred_check_branch
        %287 = sbr.rel (%p284) target = $region12
      $region11: #{depthwise_block_forward.2} parent=5 // pred_region
        %s288 = ssub.s32 %s28, 1
        // Predicated region
        $region13: #{depthwise_block_forward.2} parent=11 // pred_check
          %p289 = pneg %p75
        $region14: #{depthwise_block_forward.2} parent=11 // pred_check_branch
          %291 = sbr.rel (%p289) target = $region16
        $region15: #{depthwise_block_forward.2} parent=11 // pred_region
          %293 = vsyncadd [#allocation5], 0
          %s295 = sshll.u32 %s1, 4
          %s296 = int_to_ptr.vmem [resolvable:$true] %s295
          %298 = dma.vmem_to_smem %s296, 64, [#allocation6], [#allocation5]
        $region16: #{depthwise_block_forward.2} parent=11 // pred_fallthru
          _
        // Predicated region
        $region17: #{depthwise_block_forward.2} parent=11 // pred_check
          %p299 = pneg %p96
        $region18: #{depthwise_block_forward.2} parent=11 // pred_check_branch
          %301 = sbr.rel (%p299) target = $region20
        $region19: #{depthwise_block_forward.2} parent=11 // pred_region
          %303 = vsyncadd [#allocation8], 0
          %s305 = sshll.u32 %s2, 4
          %s306 = int_to_ptr.vmem [resolvable:$true] %s305
          %308 = dma.vmem_to_smem %s306, 16, [#allocation7], [#allocation8]
        $region20: #{depthwise_block_forward.2} parent=11 // pred_fallthru
          _
        // Predicated region
        $region21: #{depthwise_block_forward.2} parent=11 // pred_check
          %p309 = pneg %p117
        $region22: #{depthwise_block_forward.2} parent=11 // pred_check_branch
          %311 = sbr.rel (%p309) target = $region24
        $region23: #{depthwise_block_forward.2} parent=11 // pred_region
          %313 = vsyncadd [#allocation8], 0
          %s315 = sshll.u32 %s3, 4
          %s316 = int_to_ptr.vmem [resolvable:$true] %s315
          %318 = dma.vmem_to_smem %s316, 16, [#allocation9], [#allocation8]
        $region24: #{depthwise_block_forward.2} parent=11 // pred_fallthru
          _
        // Predicated region
        $region25: #{depthwise_block_forward.2} parent=11 // pred_check
          %p319 = pneg %p138
        $region26: #{depthwise_block_forward.2} parent=11 // pred_check_branch
          %321 = sbr.rel (%p319) target = $region28
        $region27: #{depthwise_block_forward.2} parent=11 // pred_region
          %323 = vsyncadd [#allocation11], 0
          %s325 = sshll.u32 %s4, 4
          %s326 = int_to_ptr.vmem [resolvable:$true] %s325
          %328 = dma.vmem_to_smem %s326, 16, [#allocation10], [#allocation11]
        $region28: #{depthwise_block_forward.2} parent=11 // pred_fallthru
          _
        // Predicated region
        $region29: #{depthwise_block_forward.2} parent=11 // pred_check
          %p329 = pneg %p159
        $region30: #{depthwise_block_forward.2} parent=11 // pred_check_branch
          %331 = sbr.rel (%p329) target = $region32
        $region31: #{depthwise_block_forward.2} parent=11 // pred_region
          %333 = vsyncadd [#allocation11], 0
          %s334 = sshll.u32 %s5, 4
          %s335 = int_to_ptr.vmem [resolvable:$true] %s334
          %340 = dma.vmem_to_smem %s335, 256, [#allocation12], [#allocation11], 128, 128, 8
        $region32: #{depthwise_block_forward.2} parent=11 // pred_fallthru
          _
        // Predicated region
        $region33: #{depthwise_block_forward.2} parent=11 // pred_check
          %p341 = pneg %p180
        $region34: #{depthwise_block_forward.2} parent=11 // pred_check_branch
          %343 = sbr.rel (%p341) target = $region36
        $region35: #{depthwise_block_forward.2} parent=11 // pred_region
          %345 = vsyncadd [#allocation14], 0
          %s347 = sshll.u32 %s6, 4
          %s348 = int_to_ptr.vmem [resolvable:$true] %s347
          %350 = dma.vmem_to_smem %s348, 16, [#allocation13], [#allocation14]
        $region36: #{depthwise_block_forward.2} parent=11 // pred_fallthru
          _
        // Predicated region
        $region37: #{depthwise_block_forward.2} parent=11 // pred_check
          %p351 = pneg %p201
        $region38: #{depthwise_block_forward.2} parent=11 // pred_check_branch
          %353 = sbr.rel (%p351) target = $region40
        $region39: #{depthwise_block_forward.2} parent=11 // pred_region
          %355 = vsyncadd [#allocation14], 0
          %s357 = sshll.u32 %s7, 4
          %s358 = int_to_ptr.vmem [resolvable:$true] %s357
          %360 = dma.vmem_to_smem %s358, 128, [#allocation15], [#allocation14]
        $region40: #{depthwise_block_forward.2} parent=11 // pred_fallthru
          _
        // Predicated region
        $region41: #{depthwise_block_forward.2} parent=11 // pred_check
          %p361 = pneg %p222
        $region42: #{depthwise_block_forward.2} parent=11 // pred_check_branch
          %363 = sbr.rel (%p361) target = $region44
        $region43: #{depthwise_block_forward.2} parent=11 // pred_region
          %365 = vsyncadd [#allocation17], 0
          %s367 = sshll.u32 %s8, 4
          %s368 = int_to_ptr.vmem [resolvable:$true] %s367
          %370 = dma.vmem_to_smem %s368, 16, [#allocation16], [#allocation17]
        $region44: #{depthwise_block_forward.2} parent=11 // pred_fallthru
          _
      $region12: #{depthwise_block_forward.2} parent=5 // pred_fallthru
        _
      %p371 = scmp.lt.s32.totalorder %s28, 2
      // Predicated region
      $region45: #{depthwise_block_forward.2} parent=5 // pred_check
        %p372 = pneg %p371
      $region46: #{depthwise_block_forward.2} parent=5 // pred_check_branch
        %374 = sbr.rel (%p372) target = $region48
      $region47: #{depthwise_block_forward.2} parent=5 // pred_region
        // Predicated region
        $region49: #{depthwise_block_forward.2} parent=47 // pred_check
          %p375 = pneg %p48
        $region50: #{depthwise_block_forward.2} parent=47 // pred_check_branch
          %377 = sbr.rel (%p375) target = $region52
        $region51: #{depthwise_block_forward.2} parent=47 // pred_region
          %s378 = sand.u32 %s38, 1
          %s379 = scalar_lea.sflag [#allocation3], %s378
          %s380 = sand.u32 %s38, 1
          %s381 = smul.addr %s380, 64
          %s382 = scalar_lea.vmem [#allocation2], %s381
          %384 = vsyncadd %s379, 0
          %s385 = smul.addr %s28, 8
          %s386 = smul.addr %s385, 8
          %s387 = scalar_lea.hbm %s0, %s386
          %s388 = sshll.u32 %s387, 4
          %s389 = int_to_ptr.hbm [resolvable:$true] %s388
          %s390 = sshll.u32 %s382, 4
          %s391 = int_to_ptr.vmem [resolvable:$true] %s390
          %396 = dma.hbm_to_vmem [thread:$0]  %s389, 1024, %s391, %s379, 128, 128, 8
        $region52: #{depthwise_block_forward.2} parent=47 // pred_fallthru
          _
      $region48: #{depthwise_block_forward.2} parent=5 // pred_fallthru
        _
      %p397 = scmp.le.s32.totalorder 1, %s28
      %p398 = scmp.lt.s32.totalorder %s28, 3
      %p399 = pnand %p397, %p398
      %p400 = pneg %p399
      // Predicated region
      $region53: #{depthwise_block_forward.2} parent=5 // pred_check
        _
      $region54: #{depthwise_block_forward.2} parent=5 // pred_check_branch
        %402 = sbr.rel (%p399) target = $region56
      $region55: #{depthwise_block_forward.2} parent=5 // pred_region
        %s403 = ssub.s32 %s28, 1
        %s404 = sand.u32 %s41, 1
        %s405 = scalar_lea.sflag [#allocation3], %s404
        %s406 = sand.u32 %s41, 1
        %s407 = smul.addr %s406, 64
        %s408 = scalar_lea.vmem [#allocation2], %s407
        // Predicated region
        $region57: #{depthwise_block_forward.2} parent=55 // pred_check
          %p409 = pneg %p54
        $region58: #{depthwise_block_forward.2} parent=55 // pred_check_branch
          %411 = sbr.rel (%p409) target = $region60
        $region59: #{depthwise_block_forward.2} parent=55 // pred_region
          %413 = dma.done %s405, 1024
        $region60: #{depthwise_block_forward.2} parent=55 // pred_fallthru
          _
        // Predicated region
        $region61: #{depthwise_block_forward.2} parent=55 // pred_check
          %p414 = pneg %p75
        $region62: #{depthwise_block_forward.2} parent=55 // pred_check_branch
          %416 = sbr.rel (%p414) target = $region64
        $region63: #{depthwise_block_forward.2} parent=55 // pred_region
          %418 = dma.done [#allocation5], 64
        $region64: #{depthwise_block_forward.2} parent=55 // pred_fallthru
          _
        // Predicated region
        $region65: #{depthwise_block_forward.2} parent=55 // pred_check
          %p419 = pneg %p96
        $region66: #{depthwise_block_forward.2} parent=55 // pred_check_branch
          %421 = sbr.rel (%p419) target = $region68
        $region67: #{depthwise_block_forward.2} parent=55 // pred_region
          %423 = dma.done [#allocation8], 16
        $region68: #{depthwise_block_forward.2} parent=55 // pred_fallthru
          _
        // Predicated region
        $region69: #{depthwise_block_forward.2} parent=55 // pred_check
          %p424 = pneg %p117
        $region70: #{depthwise_block_forward.2} parent=55 // pred_check_branch
          %426 = sbr.rel (%p424) target = $region72
        $region71: #{depthwise_block_forward.2} parent=55 // pred_region
          %428 = dma.done [#allocation8], 16
        $region72: #{depthwise_block_forward.2} parent=55 // pred_fallthru
          _
        // Predicated region
        $region73: #{depthwise_block_forward.2} parent=55 // pred_check
          %p429 = pneg %p138
        $region74: #{depthwise_block_forward.2} parent=55 // pred_check_branch
          %431 = sbr.rel (%p429) target = $region76
        $region75: #{depthwise_block_forward.2} parent=55 // pred_region
          %433 = dma.done [#allocation11], 16
        $region76: #{depthwise_block_forward.2} parent=55 // pred_fallthru
          _
        // Predicated region
        $region77: #{depthwise_block_forward.2} parent=55 // pred_check
          %p434 = pneg %p159
        $region78: #{depthwise_block_forward.2} parent=55 // pred_check_branch
          %436 = sbr.rel (%p434) target = $region80
        $region79: #{depthwise_block_forward.2} parent=55 // pred_region
          %438 = dma.done [#allocation11], 256
        $region80: #{depthwise_block_forward.2} parent=55 // pred_fallthru
          _
        // Predicated region
        $region81: #{depthwise_block_forward.2} parent=55 // pred_check
          %p439 = pneg %p180
        $region82: #{depthwise_block_forward.2} parent=55 // pred_check_branch
          %441 = sbr.rel (%p439) target = $region84
        $region83: #{depthwise_block_forward.2} parent=55 // pred_region
          %443 = dma.done [#allocation14], 16
        $region84: #{depthwise_block_forward.2} parent=55 // pred_fallthru
          _
        // Predicated region
        $region85: #{depthwise_block_forward.2} parent=55 // pred_check
          %p444 = pneg %p201
        $region86: #{depthwise_block_forward.2} parent=55 // pred_check_branch
          %446 = sbr.rel (%p444) target = $region88
        $region87: #{depthwise_block_forward.2} parent=55 // pred_region
          %448 = dma.done [#allocation14], 128
        $region88: #{depthwise_block_forward.2} parent=55 // pred_fallthru
          _
        // Predicated region
        $region89: #{depthwise_block_forward.2} parent=55 // pred_check
          %p449 = pneg %p222
        $region90: #{depthwise_block_forward.2} parent=55 // pred_check_branch
          %451 = sbr.rel (%p449) target = $region92
        $region91: #{depthwise_block_forward.2} parent=55 // pred_region
          %453 = dma.done [#allocation17], 16
        $region92: #{depthwise_block_forward.2} parent=55 // pred_fallthru
          _
        %454 = sfence
        %s455 = sand.u32 %s41, 1
        %s456 = scalar_lea.sflag [#allocation3], %s455
        %s457 = sand.u32 %s41, 1
        %s458 = smul.addr %s457, 64
        %s459 = scalar_lea.vmem [#allocation2], %s458
        %p460 = pneg %p54
        %p461 = pneg %p51
        %p462 = pneg %p75
        %p463 = pneg %p72
        %p464 = pneg %p96
        %p465 = pneg %p93
        %p466 = pneg %p117
        %p467 = pneg %p114
        %p468 = pneg %p138
        %p469 = pneg %p135
        %p470 = pneg %p159
        %p471 = pneg %p156
        %p472 = pneg %p180
        %p473 = pneg %p177
        %p474 = pneg %p201
        %p475 = pneg %p198
        %p476 = pneg %p222
        %p477 = pneg %p219
        %p478 = pneg %p248
        %p479 = pneg %p245
        %s480 = sand.u32 %s235, 1
        %s481 = scalar_lea.sflag [#allocation4], %s480
        %s482 = sand.u32 %s235, 1
        %s483 = smul.addr %s482, 64
        %s484 = scalar_lea.vmem [#allocation18], %s483
        %p485 = pneg %p274
        %p486 = pneg %p271
        %p487 = scmp.lt.s32.totalorder %s33, 1
        %s488 = scalar_select %p487, %s33, 1
        %s489 = smul.addr %s488, 4
        %s490 = scalar_lea.vmem %s10, %s489
        %p491 = scmp.lt.s32.totalorder %s33, 1
        %s492 = scalar_select %p491, %s33, 1
        %s493 = smul.addr %s492, 4
        %s494 = scalar_lea.vmem %s10, %s493
        %v495 = vlaneseq
        %v496 = vshrl.u32 %v495, 7
        %v497 = vadd.s32 %v496, 8
        %v498 = vlaneseq
        %v499 = vand.u32 %v498, 127
        %v500 = vld [vmem:[%s408] sm:$0xff]
        %v501 = vld [vmem:[%s408 + $0x8] sm:$0xff]
        %s502 = scalar_lea.vmem %s408, 16 [#allocation2]
        %v503 = vld [vmem:[%s502] sm:$0xff]
        %v504 = vld [vmem:[%s502 + $0x8] sm:$0xff]
        %s505 = scalar_lea.vmem %s408, 32 [#allocation2]
        %v506 = vld [vmem:[%s505] sm:$0xff]
        %v507 = vld [vmem:[%s505 + $0x8] sm:$0xff]
        %s508 = scalar_lea.vmem %s408, 48 [#allocation2]
        %v509 = vld [vmem:[%s508] sm:$0xff]
        %v510 = vld [vmem:[%s508 + $0x8] sm:$0xff]
        %s511 = sld [smem:[#allocation6]]
        %v512 = vstv %s511
        %v513 = vmul.f32 %v512, %v500
        %v514 = vmul.f32 %v512, %v501
        %v515 = vadd.f32 %v513, 0.0
        %v516 = vadd.f32 %v514, 0.0
        %s517 = sld [smem:[#allocation6 + $0x80]]
        %v518 = vstv %s517
        %v519 = vmul.f32 %v518, %v503
        %v520 = vmul.f32 %v518, %v504
        %v521 = vadd.f32 %v515, %v519
        %v522 = vadd.f32 %v516, %v520
        %s523 = sld [smem:[#allocation6 + $0x100]]
        %v524 = vstv %s523
        %v525 = vmul.f32 %v524, %v506
        %v526 = vmul.f32 %v524, %v507
        %v527 = vadd.f32 %v521, %v525
        %v528 = vadd.f32 %v522, %v526
        %s529 = sld [smem:[#allocation6 + $0x180]]
        %v530 = vstv %s529
        %v531 = vmul.f32 %v530, %v509
        %v532 = vmul.f32 %v530, %v510
        %v533 = vadd.f32 %v527, %v531
        %v534 = vadd.f32 %v528, %v532
        %s535 = sld [smem:[#allocation7]]
        %v536 = vstv %s535
        %v537 = vadd.f32 %v533, %v536
        %v538 = vadd.f32 %v534, %v536
        %s539 = sld [smem:[#allocation6 + $0x1]]
        %v540 = vstv %s539
        %v541 = vmul.f32 %v540, %v500
        %v542 = vmul.f32 %v540, %v501
        %v543 = vadd.f32 %v541, 0.0
        %v544 = vadd.f32 %v542, 0.0
        %s545 = sld [smem:[#allocation6 + $0x81]]
        %v546 = vstv %s545
        %v547 = vmul.f32 %v546, %v503
        %v548 = vmul.f32 %v546, %v504
        %v549 = vadd.f32 %v543, %v547
        %v550 = vadd.f32 %v544, %v548
        %s551 = sld [smem:[#allocation6 + $0x101]]
        %v552 = vstv %s551
        %v553 = vmul.f32 %v552, %v506
        %v554 = vmul.f32 %v552, %v507
        %v555 = vadd.f32 %v549, %v553
        %v556 = vadd.f32 %v550, %v554
        %s557 = sld [smem:[#allocation6 + $0x181]]
        %v558 = vstv %s557
        %v559 = vmul.f32 %v558, %v509
        %v560 = vmul.f32 %v558, %v510
        %v561 = vadd.f32 %v555, %v559
        %v562 = vadd.f32 %v556, %v560
        %s563 = sld [smem:[#allocation7 + $0x1]]
        %v564 = vstv %s563
        %v565 = vadd.f32 %v561, %v564
        %v566 = vadd.f32 %v562, %v564
        %s567 = sld [smem:[#allocation6 + $0x2]]
        %v568 = vstv %s567
        %v569 = vmul.f32 %v568, %v500
        %v570 = vmul.f32 %v568, %v501
        %v571 = vadd.f32 %v569, 0.0
        %v572 = vadd.f32 %v570, 0.0
        %s573 = sld [smem:[#allocation6 + $0x82]]
        %v574 = vstv %s573
        %v575 = vmul.f32 %v574, %v503
        %v576 = vmul.f32 %v574, %v504
        %v577 = vadd.f32 %v571, %v575
        %v578 = vadd.f32 %v572, %v576
        %s579 = sld [smem:[#allocation6 + $0x102]]
        %v580 = vstv %s579
        %v581 = vmul.f32 %v580, %v506
        %v582 = vmul.f32 %v580, %v507
        %v583 = vadd.f32 %v577, %v581
        %v584 = vadd.f32 %v578, %v582
        %s585 = sld [smem:[#allocation6 + $0x182]]
        %v586 = vstv %s585
        %v587 = vmul.f32 %v586, %v509
        %v588 = vmul.f32 %v586, %v510
        %v589 = vadd.f32 %v583, %v587
        %v590 = vadd.f32 %v584, %v588
        %s591 = sld [smem:[#allocation7 + $0x2]]
        %v592 = vstv %s591
        %v593 = vadd.f32 %v589, %v592
        %v594 = vadd.f32 %v590, %v592
        %s595 = sld [smem:[#allocation6 + $0x3]]
        %v596 = vstv %s595
        %v597 = vmul.f32 %v596, %v500
        %v598 = vmul.f32 %v596, %v501
        %v599 = vadd.f32 %v597, 0.0
        %v600 = vadd.f32 %v598, 0.0
        %s601 = sld [smem:[#allocation6 + $0x83]]
        %v602 = vstv %s601
        %v603 = vmul.f32 %v602, %v503
        %v604 = vmul.f32 %v602, %v504
        %v605 = vadd.f32 %v599, %v603
        %v606 = vadd.f32 %v600, %v604
        %s607 = sld [smem:[#allocation6 + $0x103]]
        %v608 = vstv %s607
        %v609 = vmul.f32 %v608, %v506
        %v610 = vmul.f32 %v608, %v507
        %v611 = vadd.f32 %v605, %v609
        %v612 = vadd.f32 %v606, %v610
        %s613 = sld [smem:[#allocation6 + $0x183]]
        %v614 = vstv %s613
        %v615 = vmul.f32 %v614, %v509
        %v616 = vmul.f32 %v614, %v510
        %v617 = vadd.f32 %v611, %v615
        %v618 = vadd.f32 %v612, %v616
        %s619 = sld [smem:[#allocation7 + $0x3]]
        %v620 = vstv %s619
        %v621 = vadd.f32 %v617, %v620
        %v622 = vadd.f32 %v618, %v620
        %s623 = sld [smem:[#allocation6 + $0x4]]
        %v624 = vstv %s623
        %v625 = vmul.f32 %v624, %v500
        %v626 = vmul.f32 %v624, %v501
        %v627 = vadd.f32 %v625, 0.0
        %v628 = vadd.f32 %v626, 0.0
        %s629 = sld [smem:[#allocation6 + $0x84]]
        %v630 = vstv %s629
        %v631 = vmul.f32 %v630, %v503
        %v632 = vmul.f32 %v630, %v504
        %v633 = vadd.f32 %v627, %v631
        %v634 = vadd.f32 %v628, %v632
        %s635 = sld [smem:[#allocation6 + $0x104]]
        %v636 = vstv %s635
        %v637 = vmul.f32 %v636, %v506
        %v638 = vmul.f32 %v636, %v507
        %v639 = vadd.f32 %v633, %v637
        %v640 = vadd.f32 %v634, %v638
        %s641 = sld [smem:[#allocation6 + $0x184]]
        %v642 = vstv %s641
        %v643 = vmul.f32 %v642, %v509
        %v644 = vmul.f32 %v642, %v510
        %v645 = vadd.f32 %v639, %v643
        %v646 = vadd.f32 %v640, %v644
        %s647 = sld [smem:[#allocation7 + $0x4]]
        %v648 = vstv %s647
        %v649 = vadd.f32 %v645, %v648
        %v650 = vadd.f32 %v646, %v648
        %s651 = sld [smem:[#allocation6 + $0x5]]
        %v652 = vstv %s651
        %v653 = vmul.f32 %v652, %v500
        %v654 = vmul.f32 %v652, %v501
        %v655 = vadd.f32 %v653, 0.0
        %v656 = vadd.f32 %v654, 0.0
        %s657 = sld [smem:[#allocation6 + $0x85]]
        %v658 = vstv %s657
        %v659 = vmul.f32 %v658, %v503
        %v660 = vmul.f32 %v658, %v504
        %v661 = vadd.f32 %v655, %v659
        %v662 = vadd.f32 %v656, %v660
        %s663 = sld [smem:[#allocation6 + $0x105]]
        %v664 = vstv %s663
        %v665 = vmul.f32 %v664, %v506
        %v666 = vmul.f32 %v664, %v507
        %v667 = vadd.f32 %v661, %v665
        %v668 = vadd.f32 %v662, %v666
        %s669 = sld [smem:[#allocation6 + $0x185]]
        %v670 = vstv %s669
        %v671 = vmul.f32 %v670, %v509
        %v672 = vmul.f32 %v670, %v510
        %v673 = vadd.f32 %v667, %v671
        %v674 = vadd.f32 %v668, %v672
        %s675 = sld [smem:[#allocation7 + $0x5]]
        %v676 = vstv %s675
        %v677 = vadd.f32 %v673, %v676
        %v678 = vadd.f32 %v674, %v676
        %s679 = sld [smem:[#allocation6 + $0x6]]
        %v680 = vstv %s679
        %v681 = vmul.f32 %v680, %v500
        %v682 = vmul.f32 %v680, %v501
        %v683 = vadd.f32 %v681, 0.0
        %v684 = vadd.f32 %v682, 0.0
        %s685 = sld [smem:[#allocation6 + $0x86]]
        %v686 = vstv %s685
        %v687 = vmul.f32 %v686, %v503
        %v688 = vmul.f32 %v686, %v504
        %v689 = vadd.f32 %v683, %v687
        %v690 = vadd.f32 %v684, %v688
        %s691 = sld [smem:[#allocation6 + $0x106]]
        %v692 = vstv %s691
        %v693 = vmul.f32 %v692, %v506
        %v694 = vmul.f32 %v692, %v507
        %v695 = vadd.f32 %v689, %v693
        %v696 = vadd.f32 %v690, %v694
        %s697 = sld [smem:[#allocation6 + $0x186]]
        %v698 = vstv %s697
        %v699 = vmul.f32 %v698, %v509
        %v700 = vmul.f32 %v698, %v510
        %v701 = vadd.f32 %v695, %v699
        %v702 = vadd.f32 %v696, %v700
        %s703 = sld [smem:[#allocation7 + $0x6]]
        %v704 = vstv %s703
        %v705 = vadd.f32 %v701, %v704
        %v706 = vadd.f32 %v702, %v704
        %s707 = sld [smem:[#allocation6 + $0x7]]
        %v708 = vstv %s707
        %v709 = vmul.f32 %v708, %v500
        %v710 = vmul.f32 %v708, %v501
        %v711 = vadd.f32 %v709, 0.0
        %v712 = vadd.f32 %v710, 0.0
        %s713 = sld [smem:[#allocation6 + $0x87]]
        %v714 = vstv %s713
        %v715 = vmul.f32 %v714, %v503
        %v716 = vmul.f32 %v714, %v504
        %v717 = vadd.f32 %v711, %v715
        %v718 = vadd.f32 %v712, %v716
        %s719 = sld [smem:[#allocation6 + $0x107]]
        %v720 = vstv %s719
        %v721 = vmul.f32 %v720, %v506
        %v722 = vmul.f32 %v720, %v507
        %v723 = vadd.f32 %v717, %v721
        %v724 = vadd.f32 %v718, %v722
        %s725 = sld [smem:[#allocation6 + $0x187]]
        %v726 = vstv %s725
        %v727 = vmul.f32 %v726, %v509
        %v728 = vmul.f32 %v726, %v510
        %v729 = vadd.f32 %v723, %v727
        %v730 = vadd.f32 %v724, %v728
        %s731 = sld [smem:[#allocation7 + $0x7]]
        %v732 = vstv %s731
        %v733 = vadd.f32 %v729, %v732
        %v734 = vadd.f32 %v730, %v732
        %v735 = vadd.f32 %v537, %v565
        %v736 = vadd.f32 %v538, %v566
        %v737 = vadd.f32 %v735, %v593
        %v738 = vadd.f32 %v736, %v594
        %v739 = vadd.f32 %v737, %v621
        %v740 = vadd.f32 %v738, %v622
        %v741 = vadd.f32 %v739, %v649
        %v742 = vadd.f32 %v740, %v650
        %v743 = vadd.f32 %v741, %v677
        %v744 = vadd.f32 %v742, %v678
        %v745 = vadd.f32 %v743, %v705
        %v746 = vadd.f32 %v744, %v706
        %v747 = vadd.f32 %v745, %v733
        %v748 = vadd.f32 %v746, %v734
        %v749 = vmul.f32 %v747, 0.125
        %v750 = vmul.f32 %v748, 0.125
        %v751 = vsub.f32 %v537, %v749
        %v752 = vsub.f32 %v538, %v750
        %v753 = vmul.f32 %v751, %v751
        %v754 = vmul.f32 %v752, %v752
        %v755 = vadd.f32 %v753, 0.0
        %v756 = vadd.f32 %v754, 0.0
        %v757 = vsub.f32 %v565, %v749
        %v758 = vsub.f32 %v566, %v750
        %v759 = vmul.f32 %v757, %v757
        %v760 = vmul.f32 %v758, %v758
        %v761 = vadd.f32 %v755, %v759
        %v762 = vadd.f32 %v756, %v760
        %v763 = vsub.f32 %v593, %v749
        %v764 = vsub.f32 %v594, %v750
        %v765 = vmul.f32 %v763, %v763
        %v766 = vmul.f32 %v764, %v764
        %v767 = vadd.f32 %v761, %v765
        %v768 = vadd.f32 %v762, %v766
        %v769 = vsub.f32 %v621, %v749
        %v770 = vsub.f32 %v622, %v750
        %v771 = vmul.f32 %v769, %v769
        %v772 = vmul.f32 %v770, %v770
        %v773 = vadd.f32 %v767, %v771
        %v774 = vadd.f32 %v768, %v772
        %v775 = vsub.f32 %v649, %v749
        %v776 = vsub.f32 %v650, %v750
        %v777 = vmul.f32 %v775, %v775
        %v778 = vmul.f32 %v776, %v776
        %v779 = vadd.f32 %v773, %v777
        %v780 = vadd.f32 %v774, %v778
        %v781 = vsub.f32 %v677, %v749
        %v782 = vsub.f32 %v678, %v750
        %v783 = vmul.f32 %v781, %v781
        %v784 = vmul.f32 %v782, %v782
        %v785 = vadd.f32 %v779, %v783
        %v786 = vadd.f32 %v780, %v784
        %v787 = vsub.f32 %v705, %v749
        %v788 = vsub.f32 %v706, %v750
        %v789 = vmul.f32 %v787, %v787
        %v790 = vmul.f32 %v788, %v788
        %v791 = vadd.f32 %v785, %v789
        %v792 = vadd.f32 %v786, %v790
        %v793 = vsub.f32 %v733, %v749
        %v794 = vsub.f32 %v734, %v750
        %v795 = vmul.f32 %v793, %v793
        %v796 = vmul.f32 %v794, %v794
        %v797 = vadd.f32 %v791, %v795
        %v798 = vadd.f32 %v792, %v796
        %v799 = vmul.f32 %v797, 0.125
        %v800 = vmul.f32 %v798, 0.125
        %v801 = vadd.f32 %v799, 1e-06
        %v802 = vadd.f32 %v800, 1e-06
        %v803 = vrsqrt.pop %v801
        %v804 = vmul.f32 %v803, %v801
        %v805 = vmul.f32 %v804, %v803
        %v806 = vmul.f32 0.5, %v805
        %v807 = vsub.f32 1.5, %v806
        %v808 = vmul.f32 %v803, %v807
        %vm809 = vweird.f32 %v801
        %vm810 = vweird.f32 %v803
        %vm811 = vmor %vm809, %vm810
        %v812 = vsel %vm811, %v803, %v808
        %v813 = vrsqrt.pop %v802
        %v814 = vmul.f32 %v813, %v802
        %v815 = vmul.f32 %v814, %v813
        %v816 = vmul.f32 0.5, %v815
        %v817 = vsub.f32 1.5, %v816
        %v818 = vmul.f32 %v813, %v817
        %vm819 = vweird.f32 %v802
        %vm820 = vweird.f32 %v813
        %vm821 = vmor %vm819, %vm820
        %v822 = vsel %vm821, %v813, %v818
        %v823 = vmul.f32 %v751, %v812
        %v824 = vmul.f32 %v752, %v822
        %s825 = sld [smem:[#allocation9]]
        %v826 = vstv %s825
        %v827 = vmul.f32 %v823, %v826
        %v828 = vmul.f32 %v824, %v826
        %s829 = sld [smem:[#allocation10]]
        %v830 = vstv %s829
        %v831 = vadd.f32 %v827, %v830
        %v832 = vadd.f32 %v828, %v830
        %v833 = vmul.f32 %v757, %v812
        %v834 = vmul.f32 %v758, %v822
        %s835 = sld [smem:[#allocation9 + $0x1]]
        %v836 = vstv %s835
        %v837 = vmul.f32 %v833, %v836
        %v838 = vmul.f32 %v834, %v836
        %s839 = sld [smem:[#allocation10 + $0x1]]
        %v840 = vstv %s839
        %v841 = vadd.f32 %v837, %v840
        %v842 = vadd.f32 %v838, %v840
        %v843 = vmul.f32 %v763, %v812
        %v844 = vmul.f32 %v764, %v822
        %s845 = sld [smem:[#allocation9 + $0x2]]
        %v846 = vstv %s845
        %v847 = vmul.f32 %v843, %v846
        %v848 = vmul.f32 %v844, %v846
        %s849 = sld [smem:[#allocation10 + $0x2]]
        %v850 = vstv %s849
        %v851 = vadd.f32 %v847, %v850
        %v852 = vadd.f32 %v848, %v850
        %v853 = vmul.f32 %v769, %v812
        %v854 = vmul.f32 %v770, %v822
        %s855 = sld [smem:[#allocation9 + $0x3]]
        %v856 = vstv %s855
        %v857 = vmul.f32 %v853, %v856
        %v858 = vmul.f32 %v854, %v856
        %s859 = sld [smem:[#allocation10 + $0x3]]
        %v860 = vstv %s859
        %v861 = vadd.f32 %v857, %v860
        %v862 = vadd.f32 %v858, %v860
        %v863 = vmul.f32 %v775, %v812
        %v864 = vmul.f32 %v776, %v822
        %s865 = sld [smem:[#allocation9 + $0x4]]
        %v866 = vstv %s865
        %v867 = vmul.f32 %v863, %v866
        %v868 = vmul.f32 %v864, %v866
        %s869 = sld [smem:[#allocation10 + $0x4]]
        %v870 = vstv %s869
        %v871 = vadd.f32 %v867, %v870
        %v872 = vadd.f32 %v868, %v870
        %v873 = vmul.f32 %v781, %v812
        %v874 = vmul.f32 %v782, %v822
        %s875 = sld [smem:[#allocation9 + $0x5]]
        %v876 = vstv %s875
        %v877 = vmul.f32 %v873, %v876
        %v878 = vmul.f32 %v874, %v876
        %s879 = sld [smem:[#allocation10 + $0x5]]
        %v880 = vstv %s879
        %v881 = vadd.f32 %v877, %v880
        %v882 = vadd.f32 %v878, %v880
        %v883 = vmul.f32 %v787, %v812
        %v884 = vmul.f32 %v788, %v822
        %s885 = sld [smem:[#allocation9 + $0x6]]
        %v886 = vstv %s885
        %v887 = vmul.f32 %v883, %v886
        %v888 = vmul.f32 %v884, %v886
        %s889 = sld [smem:[#allocation10 + $0x6]]
        %v890 = vstv %s889
        %v891 = vadd.f32 %v887, %v890
        %v892 = vadd.f32 %v888, %v890
        %v893 = vmul.f32 %v793, %v812
        %v894 = vmul.f32 %v794, %v822
        %s895 = sld [smem:[#allocation9 + $0x7]]
        %v896 = vstv %s895
        %v897 = vmul.f32 %v893, %v896
        %v898 = vmul.f32 %v894, %v896
        %s899 = sld [smem:[#allocation10 + $0x7]]
        %v900 = vstv %s899
        %v901 = vadd.f32 %v897, %v900
        %v902 = vadd.f32 %v898, %v900
        %vm903 = vcmask 1047680
        %904 = vrot.lane.b32.xlu0 %v831, 16
        %v905 = vpop.permute.xlu0 %904
        %v906 = vsel %vm903, %v905, %v831
        %907 = vrot.lane.b32.xlu0 %v832, 16
        %v908 = vpop.permute.xlu0 %907
        %v909 = vsel %vm903, %v908, %v832
        %910 = vrot.lane.b32.xlu0 %v906, 16
        %v911 = vpop.permute.xlu0 %910
        %912 = vrot.lane.b32.xlu0 %v909, 16
        %v913 = vpop.permute.xlu0 %912
        %v914 = vsel %vm903, %v911, %v831
        %v915 = vsel %vm903, %v913, %v832
        %v916 = vadd.s32 %v499, 4294967295
        %vm917 = vcmp.ge.s32.totalorder %v916, 0
        %vm918 = vcmp.lt.s32.totalorder %v916, 16
        %vm919 = vmand %vm917, %vm918
        %922 = vrot.lane.b32.xlu0 %v914, 113
        %v923 = vpop.permute.xlu0 %922
        %924 = vrot.lane.b32.xlu0 %v915, 113
        %v925 = vpop.permute.xlu0 %924
        %v928 = vsel %vm919, %v923, 0.0
        %v929 = vsel %vm919, %v925, 0.0
        %v930 = vadd.s32 %v499, 1
        %vm931 = vcmp.ge.s32.totalorder %v930, 0
        %vm932 = vcmp.lt.s32.totalorder %v930, 16
        %vm933 = vmand %vm931, %vm932
        %934 = vrot.lane.b32.xlu0 %v914, 127
        %v935 = vpop.permute.xlu0 %934
        %936 = vrot.lane.b32.xlu0 %v915, 127
        %v937 = vpop.permute.xlu0 %936
        %v940 = vsel %vm933, %v935, 0.0
        %v941 = vsel %vm933, %v937, 0.0
        %v942 = vrot.slane %v928, 7
        %v943 = vrot.slane %v929, 7
        %vm944 = vcmp.lt.s32.totalorder %v496, 1
        %v945 = vsel %vm944, %v942, %v943
        %v946 = vsel %vm944, %v943, %v942
        %v947 = vadd.s32 %v496, 4294967295
        %v948 = vadd.s32 %v497, 4294967295
        %vm949 = vcmp.ge.s32.totalorder %v947, 0
        %vm950 = vcmp.ge.s32.totalorder %v948, 0
        %vm951 = vcmp.lt.s32.totalorder %v947, 16
        %vm952 = vcmp.lt.s32.totalorder %v948, 16
        %vm953 = vmand %vm949, %vm951
        %vm954 = vmand %vm950, %vm952
        %v955 = vsel %vm953, %v946, 0.0
        %v956 = vsel %vm954, %v945, 0.0
        %s957 = sld [smem:[#allocation12]]
        %v958 = vstv %s957
        %v959 = vmul.f32 %v958, %v955
        %v960 = vmul.f32 %v958, %v956
        %v961 = vadd.f32 %v959, 0.0
        %v962 = vadd.f32 %v960, 0.0
        %v963 = vrot.slane %v831, 7
        %v964 = vrot.slane %v832, 7
        %v965 = vsel %vm944, %v963, %v964
        %v966 = vsel %vm944, %v964, %v963
        %v967 = vsel %vm953, %v966, 0.0
        %v968 = vsel %vm954, %v965, 0.0
        %s969 = sld [smem:[#allocation12 + $0x80]]
        %v970 = vstv %s969
        %v971 = vmul.f32 %v970, %v967
        %v972 = vmul.f32 %v970, %v968
        %v973 = vadd.f32 %v961, %v971
        %v974 = vadd.f32 %v962, %v972
        %v975 = vrot.slane %v940, 7
        %v976 = vrot.slane %v941, 7
        %v977 = vsel %vm944, %v975, %v976
        %v978 = vsel %vm944, %v976, %v975
        %v979 = vsel %vm953, %v978, 0.0
        %v980 = vsel %vm954, %v977, 0.0
        %s981 = sld [smem:[#allocation12 + $0x100]]
        %v982 = vstv %s981
        %v983 = vmul.f32 %v982, %v979
        %v984 = vmul.f32 %v982, %v980
        %v985 = vadd.f32 %v973, %v983
        %v986 = vadd.f32 %v974, %v984
        %s987 = sld [smem:[#allocation12 + $0x180]]
        %v988 = vstv %s987
        %v989 = vmul.f32 %v988, %v928
        %v990 = vmul.f32 %v988, %v929
        %v991 = vadd.f32 %v985, %v989
        %v992 = vadd.f32 %v986, %v990
        %s993 = sld [smem:[#allocation12 + $0x200]]
        %v994 = vstv %s993
        %v995 = vmul.f32 %v994, %v831
        %v996 = vmul.f32 %v994, %v832
        %v997 = vadd.f32 %v991, %v995
        %v998 = vadd.f32 %v992, %v996
        %s999 = sld [smem:[#allocation12 + $0x280]]
        %v1000 = vstv %s999
        %v1001 = vmul.f32 %v1000, %v940
        %v1002 = vmul.f32 %v1000, %v941
        %v1003 = vadd.f32 %v997, %v1001
        %v1004 = vadd.f32 %v998, %v1002
        %v1005 = vrot.slane %v928, 1
        %v1006 = vrot.slane %v929, 1
        %vm1007 = vcmp.lt.s32.totalorder %v496, 7
        %v1008 = vsel %vm1007, %v1005, %v1006
        %v1009 = vsel %vm1007, %v1006, %v1005
        %v1010 = vadd.s32 %v496, 1
        %v1011 = vadd.s32 %v497, 1
        %vm1012 = vcmp.ge.s32.totalorder %v1010, 0
        %vm1013 = vcmp.ge.s32.totalorder %v1011, 0
        %vm1014 = vcmp.lt.s32.totalorder %v1010, 16
        %vm1015 = vcmp.lt.s32.totalorder %v1011, 16
        %vm1016 = vmand %vm1012, %vm1014
        %vm1017 = vmand %vm1013, %vm1015
        %v1018 = vsel %vm1016, %v1008, 0.0
        %v1019 = vsel %vm1017, %v1009, 0.0
        %s1020 = sld [smem:[#allocation12 + $0x300]]
        %v1021 = vstv %s1020
        %v1022 = vmul.f32 %v1021, %v1018
        %v1023 = vmul.f32 %v1021, %v1019
        %v1024 = vadd.f32 %v1003, %v1022
        %v1025 = vadd.f32 %v1004, %v1023
        %v1026 = vrot.slane %v831, 1
        %v1027 = vrot.slane %v832, 1
        %v1028 = vsel %vm1007, %v1026, %v1027
        %v1029 = vsel %vm1007, %v1027, %v1026
        %v1030 = vsel %vm1016, %v1028, 0.0
        %v1031 = vsel %vm1017, %v1029, 0.0
        %s1032 = sld [smem:[#allocation12 + $0x380]]
        %v1033 = vstv %s1032
        %v1034 = vmul.f32 %v1033, %v1030
        %v1035 = vmul.f32 %v1033, %v1031
        %v1036 = vadd.f32 %v1024, %v1034
        %v1037 = vadd.f32 %v1025, %v1035
        %v1038 = vrot.slane %v940, 1
        %v1039 = vrot.slane %v941, 1
        %v1040 = vsel %vm1007, %v1038, %v1039
        %v1041 = vsel %vm1007, %v1039, %v1038
        %v1042 = vsel %vm1016, %v1040, 0.0
        %v1043 = vsel %vm1017, %v1041, 0.0
        %s1044 = sld [smem:[#allocation12 + $0x400]]
        %v1045 = vstv %s1044
        %v1046 = vmul.f32 %v1045, %v1042
        %v1047 = vmul.f32 %v1045, %v1043
        %v1048 = vadd.f32 %v1036, %v1046
        %v1049 = vadd.f32 %v1037, %v1047
        %s1050 = sld [smem:[#allocation13]]
        %v1051 = vstv %s1050
        %v1052 = vadd.f32 %v1048, %v1051
        %v1053 = vadd.f32 %v1049, %v1051
        %1054 = vrot.lane.b32.xlu0 %v841, 16
        %v1055 = vpop.permute.xlu0 %1054
        %v1056 = vsel %vm903, %v1055, %v841
        %1057 = vrot.lane.b32.xlu0 %v842, 16
        %v1058 = vpop.permute.xlu0 %1057
        %v1059 = vsel %vm903, %v1058, %v842
        %1060 = vrot.lane.b32.xlu0 %v1056, 16
        %v1061 = vpop.permute.xlu0 %1060
        %1062 = vrot.lane.b32.xlu0 %v1059, 16
        %v1063 = vpop.permute.xlu0 %1062
        %v1064 = vsel %vm903, %v1061, %v841
        %v1065 = vsel %vm903, %v1063, %v842
        %1068 = vrot.lane.b32.xlu0 %v1064, 113
        %v1069 = vpop.permute.xlu0 %1068
        %1070 = vrot.lane.b32.xlu0 %v1065, 113
        %v1071 = vpop.permute.xlu0 %1070
        %v1074 = vsel %vm919, %v1069, 0.0
        %v1075 = vsel %vm919, %v1071, 0.0
        %1076 = vrot.lane.b32.xlu0 %v1064, 127
        %v1077 = vpop.permute.xlu0 %1076
        %1078 = vrot.lane.b32.xlu0 %v1065, 127
        %v1079 = vpop.permute.xlu0 %1078
        %v1082 = vsel %vm933, %v1077, 0.0
        %v1083 = vsel %vm933, %v1079, 0.0
        %v1084 = vrot.slane %v1074, 7
        %v1085 = vrot.slane %v1075, 7
        %v1086 = vsel %vm944, %v1084, %v1085
        %v1087 = vsel %vm944, %v1085, %v1084
        %v1088 = vsel %vm953, %v1087, 0.0
        %v1089 = vsel %vm954, %v1086, 0.0
        %s1090 = sld [smem:[#allocation12 + $0x1]]
        %v1091 = vstv %s1090
        %v1092 = vmul.f32 %v1091, %v1088
        %v1093 = vmul.f32 %v1091, %v1089
        %v1094 = vadd.f32 %v1092, 0.0
        %v1095 = vadd.f32 %v1093, 0.0
        %v1096 = vrot.slane %v841, 7
        %v1097 = vrot.slane %v842, 7
        %v1098 = vsel %vm944, %v1096, %v1097
        %v1099 = vsel %vm944, %v1097, %v1096
        %v1100 = vsel %vm953, %v1099, 0.0
        %v1101 = vsel %vm954, %v1098, 0.0
        %s1102 = sld [smem:[#allocation12 + $0x81]]
        %v1103 = vstv %s1102
        %v1104 = vmul.f32 %v1103, %v1100
        %v1105 = vmul.f32 %v1103, %v1101
        %v1106 = vadd.f32 %v1094, %v1104
        %v1107 = vadd.f32 %v1095, %v1105
        %v1108 = vrot.slane %v1082, 7
        %v1109 = vrot.slane %v1083, 7
        %v1110 = vsel %vm944, %v1108, %v1109
        %v1111 = vsel %vm944, %v1109, %v1108
        %v1112 = vsel %vm953, %v1111, 0.0
        %v1113 = vsel %vm954, %v1110, 0.0
        %s1114 = sld [smem:[#allocation12 + $0x101]]
        %v1115 = vstv %s1114
        %v1116 = vmul.f32 %v1115, %v1112
        %v1117 = vmul.f32 %v1115, %v1113
        %v1118 = vadd.f32 %v1106, %v1116
        %v1119 = vadd.f32 %v1107, %v1117
        %s1120 = sld [smem:[#allocation12 + $0x181]]
        %v1121 = vstv %s1120
        %v1122 = vmul.f32 %v1121, %v1074
        %v1123 = vmul.f32 %v1121, %v1075
        %v1124 = vadd.f32 %v1118, %v1122
        %v1125 = vadd.f32 %v1119, %v1123
        %s1126 = sld [smem:[#allocation12 + $0x201]]
        %v1127 = vstv %s1126
        %v1128 = vmul.f32 %v1127, %v841
        %v1129 = vmul.f32 %v1127, %v842
        %v1130 = vadd.f32 %v1124, %v1128
        %v1131 = vadd.f32 %v1125, %v1129
        %s1132 = sld [smem:[#allocation12 + $0x281]]
        %v1133 = vstv %s1132
        %v1134 = vmul.f32 %v1133, %v1082
        %v1135 = vmul.f32 %v1133, %v1083
        %v1136 = vadd.f32 %v1130, %v1134
        %v1137 = vadd.f32 %v1131, %v1135
        %v1138 = vrot.slane %v1074, 1
        %v1139 = vrot.slane %v1075, 1
        %v1140 = vsel %vm1007, %v1138, %v1139
        %v1141 = vsel %vm1007, %v1139, %v1138
        %v1142 = vsel %vm1016, %v1140, 0.0
        %v1143 = vsel %vm1017, %v1141, 0.0
        %s1144 = sld [smem:[#allocation12 + $0x301]]
        %v1145 = vstv %s1144
        %v1146 = vmul.f32 %v1145, %v1142
        %v1147 = vmul.f32 %v1145, %v1143
        %v1148 = vadd.f32 %v1136, %v1146
        %v1149 = vadd.f32 %v1137, %v1147
        %v1150 = vrot.slane %v841, 1
        %v1151 = vrot.slane %v842, 1
        %v1152 = vsel %vm1007, %v1150, %v1151
        %v1153 = vsel %vm1007, %v1151, %v1150
        %v1154 = vsel %vm1016, %v1152, 0.0
        %v1155 = vsel %vm1017, %v1153, 0.0
        %s1156 = sld [smem:[#allocation12 + $0x381]]
        %v1157 = vstv %s1156
        %v1158 = vmul.f32 %v1157, %v1154
        %v1159 = vmul.f32 %v1157, %v1155
        %v1160 = vadd.f32 %v1148, %v1158
        %v1161 = vadd.f32 %v1149, %v1159
        %v1162 = vrot.slane %v1082, 1
        %v1163 = vrot.slane %v1083, 1
        %v1164 = vsel %vm1007, %v1162, %v1163
        %v1165 = vsel %vm1007, %v1163, %v1162
        %v1166 = vsel %vm1016, %v1164, 0.0
        %v1167 = vsel %vm1017, %v1165, 0.0
        %s1168 = sld [smem:[#allocation12 + $0x401]]
        %v1169 = vstv %s1168
        %v1170 = vmul.f32 %v1169, %v1166
        %v1171 = vmul.f32 %v1169, %v1167
        %v1172 = vadd.f32 %v1160, %v1170
        %v1173 = vadd.f32 %v1161, %v1171
        %s1174 = sld [smem:[#allocation13 + $0x1]]
        %v1175 = vstv %s1174
        %v1176 = vadd.f32 %v1172, %v1175
        %v1177 = vadd.f32 %v1173, %v1175
        %1178 = vrot.lane.b32.xlu0 %v851, 16
        %v1179 = vpop.permute.xlu0 %1178
        %v1180 = vsel %vm903, %v1179, %v851
        %1181 = vrot.lane.b32.xlu0 %v852, 16
        %v1182 = vpop.permute.xlu0 %1181
        %v1183 = vsel %vm903, %v1182, %v852
        %1184 = vrot.lane.b32.xlu0 %v1180, 16
        %v1185 = vpop.permute.xlu0 %1184
        %1186 = vrot.lane.b32.xlu0 %v1183, 16
        %v1187 = vpop.permute.xlu0 %1186
        %v1188 = vsel %vm903, %v1185, %v851
        %v1189 = vsel %vm903, %v1187, %v852
        %1192 = vrot.lane.b32.xlu0 %v1188, 113
        %v1193 = vpop.permute.xlu0 %1192
        %1194 = vrot.lane.b32.xlu0 %v1189, 113
        %v1195 = vpop.permute.xlu0 %1194
        %v1198 = vsel %vm919, %v1193, 0.0
        %v1199 = vsel %vm919, %v1195, 0.0
        %1200 = vrot.lane.b32.xlu0 %v1188, 127
        %v1201 = vpop.permute.xlu0 %1200
        %1202 = vrot.lane.b32.xlu0 %v1189, 127
        %v1203 = vpop.permute.xlu0 %1202
        %v1206 = vsel %vm933, %v1201, 0.0
        %v1207 = vsel %vm933, %v1203, 0.0
        %v1208 = vrot.slane %v1198, 7
        %v1209 = vrot.slane %v1199, 7
        %v1210 = vsel %vm944, %v1208, %v1209
        %v1211 = vsel %vm944, %v1209, %v1208
        %v1212 = vsel %vm953, %v1211, 0.0
        %v1213 = vsel %vm954, %v1210, 0.0
        %s1214 = sld [smem:[#allocation12 + $0x2]]
        %v1215 = vstv %s1214
        %v1216 = vmul.f32 %v1215, %v1212
        %v1217 = vmul.f32 %v1215, %v1213
        %v1218 = vadd.f32 %v1216, 0.0
        %v1219 = vadd.f32 %v1217, 0.0
        %v1220 = vrot.slane %v851, 7
        %v1221 = vrot.slane %v852, 7
        %v1222 = vsel %vm944, %v1220, %v1221
        %v1223 = vsel %vm944, %v1221, %v1220
        %v1224 = vsel %vm953, %v1223, 0.0
        %v1225 = vsel %vm954, %v1222, 0.0
        %s1226 = sld [smem:[#allocation12 + $0x82]]
        %v1227 = vstv %s1226
        %v1228 = vmul.f32 %v1227, %v1224
        %v1229 = vmul.f32 %v1227, %v1225
        %v1230 = vadd.f32 %v1218, %v1228
        %v1231 = vadd.f32 %v1219, %v1229
        %v1232 = vrot.slane %v1206, 7
        %v1233 = vrot.slane %v1207, 7
        %v1234 = vsel %vm944, %v1232, %v1233
        %v1235 = vsel %vm944, %v1233, %v1232
        %v1236 = vsel %vm953, %v1235, 0.0
        %v1237 = vsel %vm954, %v1234, 0.0
        %s1238 = sld [smem:[#allocation12 + $0x102]]
        %v1239 = vstv %s1238
        %v1240 = vmul.f32 %v1239, %v1236
        %v1241 = vmul.f32 %v1239, %v1237
        %v1242 = vadd.f32 %v1230, %v1240
        %v1243 = vadd.f32 %v1231, %v1241
        %s1244 = sld [smem:[#allocation12 + $0x182]]
        %v1245 = vstv %s1244
        %v1246 = vmul.f32 %v1245, %v1198
        %v1247 = vmul.f32 %v1245, %v1199
        %v1248 = vadd.f32 %v1242, %v1246
        %v1249 = vadd.f32 %v1243, %v1247
        %s1250 = sld [smem:[#allocation12 + $0x202]]
        %v1251 = vstv %s1250
        %v1252 = vmul.f32 %v1251, %v851
        %v1253 = vmul.f32 %v1251, %v852
        %v1254 = vadd.f32 %v1248, %v1252
        %v1255 = vadd.f32 %v1249, %v1253
        %s1256 = sld [smem:[#allocation12 + $0x282]]
        %v1257 = vstv %s1256
        %v1258 = vmul.f32 %v1257, %v1206
        %v1259 = vmul.f32 %v1257, %v1207
        %v1260 = vadd.f32 %v1254, %v1258
        %v1261 = vadd.f32 %v1255, %v1259
        %v1262 = vrot.slane %v1198, 1
        %v1263 = vrot.slane %v1199, 1
        %v1264 = vsel %vm1007, %v1262, %v1263
        %v1265 = vsel %vm1007, %v1263, %v1262
        %v1266 = vsel %vm1016, %v1264, 0.0
        %v1267 = vsel %vm1017, %v1265, 0.0
        %s1268 = sld [smem:[#allocation12 + $0x302]]
        %v1269 = vstv %s1268
        %v1270 = vmul.f32 %v1269, %v1266
        %v1271 = vmul.f32 %v1269, %v1267
        %v1272 = vadd.f32 %v1260, %v1270
        %v1273 = vadd.f32 %v1261, %v1271
        %v1274 = vrot.slane %v851, 1
        %v1275 = vrot.slane %v852, 1
        %v1276 = vsel %vm1007, %v1274, %v1275
        %v1277 = vsel %vm1007, %v1275, %v1274
        %v1278 = vsel %vm1016, %v1276, 0.0
        %v1279 = vsel %vm1017, %v1277, 0.0
        %s1280 = sld [smem:[#allocation12 + $0x382]]
        %v1281 = vstv %s1280
        %v1282 = vmul.f32 %v1281, %v1278
        %v1283 = vmul.f32 %v1281, %v1279
        %v1284 = vadd.f32 %v1272, %v1282
        %v1285 = vadd.f32 %v1273, %v1283
        %v1286 = vrot.slane %v1206, 1
        %v1287 = vrot.slane %v1207, 1
        %v1288 = vsel %vm1007, %v1286, %v1287
        %v1289 = vsel %vm1007, %v1287, %v1286
        %v1290 = vsel %vm1016, %v1288, 0.0
        %v1291 = vsel %vm1017, %v1289, 0.0
        %s1292 = sld [smem:[#allocation12 + $0x402]]
        %v1293 = vstv %s1292
        %v1294 = vmul.f32 %v1293, %v1290
        %v1295 = vmul.f32 %v1293, %v1291
        %v1296 = vadd.f32 %v1284, %v1294
        %v1297 = vadd.f32 %v1285, %v1295
        %s1298 = sld [smem:[#allocation13 + $0x2]]
        %v1299 = vstv %s1298
        %v1300 = vadd.f32 %v1296, %v1299
        %v1301 = vadd.f32 %v1297, %v1299
        %1302 = vrot.lane.b32.xlu0 %v861, 16
        %v1303 = vpop.permute.xlu0 %1302
        %v1304 = vsel %vm903, %v1303, %v861
        %1305 = vrot.lane.b32.xlu0 %v862, 16
        %v1306 = vpop.permute.xlu0 %1305
        %v1307 = vsel %vm903, %v1306, %v862
        %1308 = vrot.lane.b32.xlu0 %v1304, 16
        %v1309 = vpop.permute.xlu0 %1308
        %1310 = vrot.lane.b32.xlu0 %v1307, 16
        %v1311 = vpop.permute.xlu0 %1310
        %v1312 = vsel %vm903, %v1309, %v861
        %v1313 = vsel %vm903, %v1311, %v862
        %1316 = vrot.lane.b32.xlu0 %v1312, 113
        %v1317 = vpop.permute.xlu0 %1316
        %1318 = vrot.lane.b32.xlu0 %v1313, 113
        %v1319 = vpop.permute.xlu0 %1318
        %v1322 = vsel %vm919, %v1317, 0.0
        %v1323 = vsel %vm919, %v1319, 0.0
        %1324 = vrot.lane.b32.xlu0 %v1312, 127
        %v1325 = vpop.permute.xlu0 %1324
        %1326 = vrot.lane.b32.xlu0 %v1313, 127
        %v1327 = vpop.permute.xlu0 %1326
        %v1330 = vsel %vm933, %v1325, 0.0
        %v1331 = vsel %vm933, %v1327, 0.0
        %v1332 = vrot.slane %v1322, 7
        %v1333 = vrot.slane %v1323, 7
        %v1334 = vsel %vm944, %v1332, %v1333
        %v1335 = vsel %vm944, %v1333, %v1332
        %v1336 = vsel %vm953, %v1335, 0.0
        %v1337 = vsel %vm954, %v1334, 0.0
        %s1338 = sld [smem:[#allocation12 + $0x3]]
        %v1339 = vstv %s1338
        %v1340 = vmul.f32 %v1339, %v1336
        %v1341 = vmul.f32 %v1339, %v1337
        %v1342 = vadd.f32 %v1340, 0.0
        %v1343 = vadd.f32 %v1341, 0.0
        %v1344 = vrot.slane %v861, 7
        %v1345 = vrot.slane %v862, 7
        %v1346 = vsel %vm944, %v1344, %v1345
        %v1347 = vsel %vm944, %v1345, %v1344
        %v1348 = vsel %vm953, %v1347, 0.0
        %v1349 = vsel %vm954, %v1346, 0.0
        %s1350 = sld [smem:[#allocation12 + $0x83]]
        %v1351 = vstv %s1350
        %v1352 = vmul.f32 %v1351, %v1348
        %v1353 = vmul.f32 %v1351, %v1349
        %v1354 = vadd.f32 %v1342, %v1352
        %v1355 = vadd.f32 %v1343, %v1353
        %v1356 = vrot.slane %v1330, 7
        %v1357 = vrot.slane %v1331, 7
        %v1358 = vsel %vm944, %v1356, %v1357
        %v1359 = vsel %vm944, %v1357, %v1356
        %v1360 = vsel %vm953, %v1359, 0.0
        %v1361 = vsel %vm954, %v1358, 0.0
        %s1362 = sld [smem:[#allocation12 + $0x103]]
        %v1363 = vstv %s1362
        %v1364 = vmul.f32 %v1363, %v1360
        %v1365 = vmul.f32 %v1363, %v1361
        %v1366 = vadd.f32 %v1354, %v1364
        %v1367 = vadd.f32 %v1355, %v1365
        %s1368 = sld [smem:[#allocation12 + $0x183]]
        %v1369 = vstv %s1368
        %v1370 = vmul.f32 %v1369, %v1322
        %v1371 = vmul.f32 %v1369, %v1323
        %v1372 = vadd.f32 %v1366, %v1370
        %v1373 = vadd.f32 %v1367, %v1371
        %s1374 = sld [smem:[#allocation12 + $0x203]]
        %v1375 = vstv %s1374
        %v1376 = vmul.f32 %v1375, %v861
        %v1377 = vmul.f32 %v1375, %v862
        %v1378 = vadd.f32 %v1372, %v1376
        %v1379 = vadd.f32 %v1373, %v1377
        %s1380 = sld [smem:[#allocation12 + $0x283]]
        %v1381 = vstv %s1380
        %v1382 = vmul.f32 %v1381, %v1330
        %v1383 = vmul.f32 %v1381, %v1331
        %v1384 = vadd.f32 %v1378, %v1382
        %v1385 = vadd.f32 %v1379, %v1383
        %v1386 = vrot.slane %v1322, 1
        %v1387 = vrot.slane %v1323, 1
        %v1388 = vsel %vm1007, %v1386, %v1387
        %v1389 = vsel %vm1007, %v1387, %v1386
        %v1390 = vsel %vm1016, %v1388, 0.0
        %v1391 = vsel %vm1017, %v1389, 0.0
        %s1392 = sld [smem:[#allocation12 + $0x303]]
        %v1393 = vstv %s1392
        %v1394 = vmul.f32 %v1393, %v1390
        %v1395 = vmul.f32 %v1393, %v1391
        %v1396 = vadd.f32 %v1384, %v1394
        %v1397 = vadd.f32 %v1385, %v1395
        %v1398 = vrot.slane %v861, 1
        %v1399 = vrot.slane %v862, 1
        %v1400 = vsel %vm1007, %v1398, %v1399
        %v1401 = vsel %vm1007, %v1399, %v1398
        %v1402 = vsel %vm1016, %v1400, 0.0
        %v1403 = vsel %vm1017, %v1401, 0.0
        %s1404 = sld [smem:[#allocation12 + $0x383]]
        %v1405 = vstv %s1404
        %v1406 = vmul.f32 %v1405, %v1402
        %v1407 = vmul.f32 %v1405, %v1403
        %v1408 = vadd.f32 %v1396, %v1406
        %v1409 = vadd.f32 %v1397, %v1407
        %v1410 = vrot.slane %v1330, 1
        %v1411 = vrot.slane %v1331, 1
        %v1412 = vsel %vm1007, %v1410, %v1411
        %v1413 = vsel %vm1007, %v1411, %v1410
        %v1414 = vsel %vm1016, %v1412, 0.0
        %v1415 = vsel %vm1017, %v1413, 0.0
        %s1416 = sld [smem:[#allocation12 + $0x403]]
        %v1417 = vstv %s1416
        %v1418 = vmul.f32 %v1417, %v1414
        %v1419 = vmul.f32 %v1417, %v1415
        %v1420 = vadd.f32 %v1408, %v1418
        %v1421 = vadd.f32 %v1409, %v1419
        %s1422 = sld [smem:[#allocation13 + $0x3]]
        %v1423 = vstv %s1422
        %v1424 = vadd.f32 %v1420, %v1423
        %v1425 = vadd.f32 %v1421, %v1423
        %1426 = vrot.lane.b32.xlu0 %v871, 16
        %v1427 = vpop.permute.xlu0 %1426
        %v1428 = vsel %vm903, %v1427, %v871
        %1429 = vrot.lane.b32.xlu0 %v872, 16
        %v1430 = vpop.permute.xlu0 %1429
        %v1431 = vsel %vm903, %v1430, %v872
        %1432 = vrot.lane.b32.xlu0 %v1428, 16
        %v1433 = vpop.permute.xlu0 %1432
        %1434 = vrot.lane.b32.xlu0 %v1431, 16
        %v1435 = vpop.permute.xlu0 %1434
        %v1436 = vsel %vm903, %v1433, %v871
        %v1437 = vsel %vm903, %v1435, %v872
        %1440 = vrot.lane.b32.xlu0 %v1436, 113
        %v1441 = vpop.permute.xlu0 %1440
        %1442 = vrot.lane.b32.xlu0 %v1437, 113
        %v1443 = vpop.permute.xlu0 %1442
        %v1446 = vsel %vm919, %v1441, 0.0
        %v1447 = vsel %vm919, %v1443, 0.0
        %1448 = vrot.lane.b32.xlu0 %v1436, 127
        %v1449 = vpop.permute.xlu0 %1448
        %1450 = vrot.lane.b32.xlu0 %v1437, 127
        %v1451 = vpop.permute.xlu0 %1450
        %v1454 = vsel %vm933, %v1449, 0.0
        %v1455 = vsel %vm933, %v1451, 0.0
        %v1456 = vrot.slane %v1446, 7
        %v1457 = vrot.slane %v1447, 7
        %v1458 = vsel %vm944, %v1456, %v1457
        %v1459 = vsel %vm944, %v1457, %v1456
        %v1460 = vsel %vm953, %v1459, 0.0
        %v1461 = vsel %vm954, %v1458, 0.0
        %s1462 = sld [smem:[#allocation12 + $0x4]]
        %v1463 = vstv %s1462
        %v1464 = vmul.f32 %v1463, %v1460
        %v1465 = vmul.f32 %v1463, %v1461
        %v1466 = vadd.f32 %v1464, 0.0
        %v1467 = vadd.f32 %v1465, 0.0
        %v1468 = vrot.slane %v871, 7
        %v1469 = vrot.slane %v872, 7
        %v1470 = vsel %vm944, %v1468, %v1469
        %v1471 = vsel %vm944, %v1469, %v1468
        %v1472 = vsel %vm953, %v1471, 0.0
        %v1473 = vsel %vm954, %v1470, 0.0
        %s1474 = sld [smem:[#allocation12 + $0x84]]
        %v1475 = vstv %s1474
        %v1476 = vmul.f32 %v1475, %v1472
        %v1477 = vmul.f32 %v1475, %v1473
        %v1478 = vadd.f32 %v1466, %v1476
        %v1479 = vadd.f32 %v1467, %v1477
        %v1480 = vrot.slane %v1454, 7
        %v1481 = vrot.slane %v1455, 7
        %v1482 = vsel %vm944, %v1480, %v1481
        %v1483 = vsel %vm944, %v1481, %v1480
        %v1484 = vsel %vm953, %v1483, 0.0
        %v1485 = vsel %vm954, %v1482, 0.0
        %s1486 = sld [smem:[#allocation12 + $0x104]]
        %v1487 = vstv %s1486
        %v1488 = vmul.f32 %v1487, %v1484
        %v1489 = vmul.f32 %v1487, %v1485
        %v1490 = vadd.f32 %v1478, %v1488
        %v1491 = vadd.f32 %v1479, %v1489
        %s1492 = sld [smem:[#allocation12 + $0x184]]
        %v1493 = vstv %s1492
        %v1494 = vmul.f32 %v1493, %v1446
        %v1495 = vmul.f32 %v1493, %v1447
        %v1496 = vadd.f32 %v1490, %v1494
        %v1497 = vadd.f32 %v1491, %v1495
        %s1498 = sld [smem:[#allocation12 + $0x204]]
        %v1499 = vstv %s1498
        %v1500 = vmul.f32 %v1499, %v871
        %v1501 = vmul.f32 %v1499, %v872
        %v1502 = vadd.f32 %v1496, %v1500
        %v1503 = vadd.f32 %v1497, %v1501
        %s1504 = sld [smem:[#allocation12 + $0x284]]
        %v1505 = vstv %s1504
        %v1506 = vmul.f32 %v1505, %v1454
        %v1507 = vmul.f32 %v1505, %v1455
        %v1508 = vadd.f32 %v1502, %v1506
        %v1509 = vadd.f32 %v1503, %v1507
        %v1510 = vrot.slane %v1446, 1
        %v1511 = vrot.slane %v1447, 1
        %v1512 = vsel %vm1007, %v1510, %v1511
        %v1513 = vsel %vm1007, %v1511, %v1510
        %v1514 = vsel %vm1016, %v1512, 0.0
        %v1515 = vsel %vm1017, %v1513, 0.0
        %s1516 = sld [smem:[#allocation12 + $0x304]]
        %v1517 = vstv %s1516
        %v1518 = vmul.f32 %v1517, %v1514
        %v1519 = vmul.f32 %v1517, %v1515
        %v1520 = vadd.f32 %v1508, %v1518
        %v1521 = vadd.f32 %v1509, %v1519
        %v1522 = vrot.slane %v871, 1
        %v1523 = vrot.slane %v872, 1
        %v1524 = vsel %vm1007, %v1522, %v1523
        %v1525 = vsel %vm1007, %v1523, %v1522
        %v1526 = vsel %vm1016, %v1524, 0.0
        %v1527 = vsel %vm1017, %v1525, 0.0
        %s1528 = sld [smem:[#allocation12 + $0x384]]
        %v1529 = vstv %s1528
        %v1530 = vmul.f32 %v1529, %v1526
        %v1531 = vmul.f32 %v1529, %v1527
        %v1532 = vadd.f32 %v1520, %v1530
        %v1533 = vadd.f32 %v1521, %v1531
        %v1534 = vrot.slane %v1454, 1
        %v1535 = vrot.slane %v1455, 1
        %v1536 = vsel %vm1007, %v1534, %v1535
        %v1537 = vsel %vm1007, %v1535, %v1534
        %v1538 = vsel %vm1016, %v1536, 0.0
        %v1539 = vsel %vm1017, %v1537, 0.0
        %s1540 = sld [smem:[#allocation12 + $0x404]]
        %v1541 = vstv %s1540
        %v1542 = vmul.f32 %v1541, %v1538
        %v1543 = vmul.f32 %v1541, %v1539
        %v1544 = vadd.f32 %v1532, %v1542
        %v1545 = vadd.f32 %v1533, %v1543
        %s1546 = sld [smem:[#allocation13 + $0x4]]
        %v1547 = vstv %s1546
        %v1548 = vadd.f32 %v1544, %v1547
        %v1549 = vadd.f32 %v1545, %v1547
        %1550 = vrot.lane.b32.xlu0 %v881, 16
        %v1551 = vpop.permute.xlu0 %1550
        %v1552 = vsel %vm903, %v1551, %v881
        %1553 = vrot.lane.b32.xlu0 %v882, 16
        %v1554 = vpop.permute.xlu0 %1553
        %v1555 = vsel %vm903, %v1554, %v882
        %1556 = vrot.lane.b32.xlu0 %v1552, 16
        %v1557 = vpop.permute.xlu0 %1556
        %1558 = vrot.lane.b32.xlu0 %v1555, 16
        %v1559 = vpop.permute.xlu0 %1558
        %v1560 = vsel %vm903, %v1557, %v881
        %v1561 = vsel %vm903, %v1559, %v882
        %1564 = vrot.lane.b32.xlu0 %v1560, 113
        %v1565 = vpop.permute.xlu0 %1564
        %1566 = vrot.lane.b32.xlu0 %v1561, 113
        %v1567 = vpop.permute.xlu0 %1566
        %v1570 = vsel %vm919, %v1565, 0.0
        %v1571 = vsel %vm919, %v1567, 0.0
        %1572 = vrot.lane.b32.xlu0 %v1560, 127
        %v1573 = vpop.permute.xlu0 %1572
        %1574 = vrot.lane.b32.xlu0 %v1561, 127
        %v1575 = vpop.permute.xlu0 %1574
        %v1578 = vsel %vm933, %v1573, 0.0
        %v1579 = vsel %vm933, %v1575, 0.0
        %v1580 = vrot.slane %v1570, 7
        %v1581 = vrot.slane %v1571, 7
        %v1582 = vsel %vm944, %v1580, %v1581
        %v1583 = vsel %vm944, %v1581, %v1580
        %v1584 = vsel %vm953, %v1583, 0.0
        %v1585 = vsel %vm954, %v1582, 0.0
        %s1586 = sld [smem:[#allocation12 + $0x5]]
        %v1587 = vstv %s1586
        %v1588 = vmul.f32 %v1587, %v1584
        %v1589 = vmul.f32 %v1587, %v1585
        %v1590 = vadd.f32 %v1588, 0.0
        %v1591 = vadd.f32 %v1589, 0.0
        %v1592 = vrot.slane %v881, 7
        %v1593 = vrot.slane %v882, 7
        %v1594 = vsel %vm944, %v1592, %v1593
        %v1595 = vsel %vm944, %v1593, %v1592
        %v1596 = vsel %vm953, %v1595, 0.0
        %v1597 = vsel %vm954, %v1594, 0.0
        %s1598 = sld [smem:[#allocation12 + $0x85]]
        %v1599 = vstv %s1598
        %v1600 = vmul.f32 %v1599, %v1596
        %v1601 = vmul.f32 %v1599, %v1597
        %v1602 = vadd.f32 %v1590, %v1600
        %v1603 = vadd.f32 %v1591, %v1601
        %v1604 = vrot.slane %v1578, 7
        %v1605 = vrot.slane %v1579, 7
        %v1606 = vsel %vm944, %v1604, %v1605
        %v1607 = vsel %vm944, %v1605, %v1604
        %v1608 = vsel %vm953, %v1607, 0.0
        %v1609 = vsel %vm954, %v1606, 0.0
        %s1610 = sld [smem:[#allocation12 + $0x105]]
        %v1611 = vstv %s1610
        %v1612 = vmul.f32 %v1611, %v1608
        %v1613 = vmul.f32 %v1611, %v1609
        %v1614 = vadd.f32 %v1602, %v1612
        %v1615 = vadd.f32 %v1603, %v1613
        %s1616 = sld [smem:[#allocation12 + $0x185]]
        %v1617 = vstv %s1616
        %v1618 = vmul.f32 %v1617, %v1570
        %v1619 = vmul.f32 %v1617, %v1571
        %v1620 = vadd.f32 %v1614, %v1618
        %v1621 = vadd.f32 %v1615, %v1619
        %s1622 = sld [smem:[#allocation12 + $0x205]]
        %v1623 = vstv %s1622
        %v1624 = vmul.f32 %v1623, %v881
        %v1625 = vmul.f32 %v1623, %v882
        %v1626 = vadd.f32 %v1620, %v1624
        %v1627 = vadd.f32 %v1621, %v1625
        %s1628 = sld [smem:[#allocation12 + $0x285]]
        %v1629 = vstv %s1628
        %v1630 = vmul.f32 %v1629, %v1578
        %v1631 = vmul.f32 %v1629, %v1579
        %v1632 = vadd.f32 %v1626, %v1630
        %v1633 = vadd.f32 %v1627, %v1631
        %v1634 = vrot.slane %v1570, 1
        %v1635 = vrot.slane %v1571, 1
        %v1636 = vsel %vm1007, %v1634, %v1635
        %v1637 = vsel %vm1007, %v1635, %v1634
        %v1638 = vsel %vm1016, %v1636, 0.0
        %v1639 = vsel %vm1017, %v1637, 0.0
        %s1640 = sld [smem:[#allocation12 + $0x305]]
        %v1641 = vstv %s1640
        %v1642 = vmul.f32 %v1641, %v1638
        %v1643 = vmul.f32 %v1641, %v1639
        %v1644 = vadd.f32 %v1632, %v1642
        %v1645 = vadd.f32 %v1633, %v1643
        %v1646 = vrot.slane %v881, 1
        %v1647 = vrot.slane %v882, 1
        %v1648 = vsel %vm1007, %v1646, %v1647
        %v1649 = vsel %vm1007, %v1647, %v1646
        %v1650 = vsel %vm1016, %v1648, 0.0
        %v1651 = vsel %vm1017, %v1649, 0.0
        %s1652 = sld [smem:[#allocation12 + $0x385]]
        %v1653 = vstv %s1652
        %v1654 = vmul.f32 %v1653, %v1650
        %v1655 = vmul.f32 %v1653, %v1651
        %v1656 = vadd.f32 %v1644, %v1654
        %v1657 = vadd.f32 %v1645, %v1655
        %v1658 = vrot.slane %v1578, 1
        %v1659 = vrot.slane %v1579, 1
        %v1660 = vsel %vm1007, %v1658, %v1659
        %v1661 = vsel %vm1007, %v1659, %v1658
        %v1662 = vsel %vm1016, %v1660, 0.0
        %v1663 = vsel %vm1017, %v1661, 0.0
        %s1664 = sld [smem:[#allocation12 + $0x405]]
        %v1665 = vstv %s1664
        %v1666 = vmul.f32 %v1665, %v1662
        %v1667 = vmul.f32 %v1665, %v1663
        %v1668 = vadd.f32 %v1656, %v1666
        %v1669 = vadd.f32 %v1657, %v1667
        %s1670 = sld [smem:[#allocation13 + $0x5]]
        %v1671 = vstv %s1670
        %v1672 = vadd.f32 %v1668, %v1671
        %v1673 = vadd.f32 %v1669, %v1671
        %1674 = vrot.lane.b32.xlu0 %v891, 16
        %v1675 = vpop.permute.xlu0 %1674
        %v1676 = vsel %vm903, %v1675, %v891
        %1677 = vrot.lane.b32.xlu0 %v892, 16
        %v1678 = vpop.permute.xlu0 %1677
        %v1679 = vsel %vm903, %v1678, %v892
        %1680 = vrot.lane.b32.xlu0 %v1676, 16
        %v1681 = vpop.permute.xlu0 %1680
        %1682 = vrot.lane.b32.xlu0 %v1679, 16
        %v1683 = vpop.permute.xlu0 %1682
        %v1684 = vsel %vm903, %v1681, %v891
        %v1685 = vsel %vm903, %v1683, %v892
        %1688 = vrot.lane.b32.xlu0 %v1684, 113
        %v1689 = vpop.permute.xlu0 %1688
        %1690 = vrot.lane.b32.xlu0 %v1685, 113
        %v1691 = vpop.permute.xlu0 %1690
        %v1694 = vsel %vm919, %v1689, 0.0
        %v1695 = vsel %vm919, %v1691, 0.0
        %1696 = vrot.lane.b32.xlu0 %v1684, 127
        %v1697 = vpop.permute.xlu0 %1696
        %1698 = vrot.lane.b32.xlu0 %v1685, 127
        %v1699 = vpop.permute.xlu0 %1698
        %v1702 = vsel %vm933, %v1697, 0.0
        %v1703 = vsel %vm933, %v1699, 0.0
        %v1704 = vrot.slane %v1694, 7
        %v1705 = vrot.slane %v1695, 7
        %v1706 = vsel %vm944, %v1704, %v1705
        %v1707 = vsel %vm944, %v1705, %v1704
        %v1708 = vsel %vm953, %v1707, 0.0
        %v1709 = vsel %vm954, %v1706, 0.0
        %s1710 = sld [smem:[#allocation12 + $0x6]]
        %v1711 = vstv %s1710
        %v1712 = vmul.f32 %v1711, %v1708
        %v1713 = vmul.f32 %v1711, %v1709
        %v1714 = vadd.f32 %v1712, 0.0
        %v1715 = vadd.f32 %v1713, 0.0
        %v1716 = vrot.slane %v891, 7
        %v1717 = vrot.slane %v892, 7
        %v1718 = vsel %vm944, %v1716, %v1717
        %v1719 = vsel %vm944, %v1717, %v1716
        %v1720 = vsel %vm953, %v1719, 0.0
        %v1721 = vsel %vm954, %v1718, 0.0
        %s1722 = sld [smem:[#allocation12 + $0x86]]
        %v1723 = vstv %s1722
        %v1724 = vmul.f32 %v1723, %v1720
        %v1725 = vmul.f32 %v1723, %v1721
        %v1726 = vadd.f32 %v1714, %v1724
        %v1727 = vadd.f32 %v1715, %v1725
        %v1728 = vrot.slane %v1702, 7
        %v1729 = vrot.slane %v1703, 7
        %v1730 = vsel %vm944, %v1728, %v1729
        %v1731 = vsel %vm944, %v1729, %v1728
        %v1732 = vsel %vm953, %v1731, 0.0
        %v1733 = vsel %vm954, %v1730, 0.0
        %s1734 = sld [smem:[#allocation12 + $0x106]]
        %v1735 = vstv %s1734
        %v1736 = vmul.f32 %v1735, %v1732
        %v1737 = vmul.f32 %v1735, %v1733
        %v1738 = vadd.f32 %v1726, %v1736
        %v1739 = vadd.f32 %v1727, %v1737
        %s1740 = sld [smem:[#allocation12 + $0x186]]
        %v1741 = vstv %s1740
        %v1742 = vmul.f32 %v1741, %v1694
        %v1743 = vmul.f32 %v1741, %v1695
        %v1744 = vadd.f32 %v1738, %v1742
        %v1745 = vadd.f32 %v1739, %v1743
        %s1746 = sld [smem:[#allocation12 + $0x206]]
        %v1747 = vstv %s1746
        %v1748 = vmul.f32 %v1747, %v891
        %v1749 = vmul.f32 %v1747, %v892
        %v1750 = vadd.f32 %v1744, %v1748
        %v1751 = vadd.f32 %v1745, %v1749
        %s1752 = sld [smem:[#allocation12 + $0x286]]
        %v1753 = vstv %s1752
        %v1754 = vmul.f32 %v1753, %v1702
        %v1755 = vmul.f32 %v1753, %v1703
        %v1756 = vadd.f32 %v1750, %v1754
        %v1757 = vadd.f32 %v1751, %v1755
        %v1758 = vrot.slane %v1694, 1
        %v1759 = vrot.slane %v1695, 1
        %v1760 = vsel %vm1007, %v1758, %v1759
        %v1761 = vsel %vm1007, %v1759, %v1758
        %v1762 = vsel %vm1016, %v1760, 0.0
        %v1763 = vsel %vm1017, %v1761, 0.0
        %s1764 = sld [smem:[#allocation12 + $0x306]]
        %v1765 = vstv %s1764
        %v1766 = vmul.f32 %v1765, %v1762
        %v1767 = vmul.f32 %v1765, %v1763
        %v1768 = vadd.f32 %v1756, %v1766
        %v1769 = vadd.f32 %v1757, %v1767
        %v1770 = vrot.slane %v891, 1
        %v1771 = vrot.slane %v892, 1
        %v1772 = vsel %vm1007, %v1770, %v1771
        %v1773 = vsel %vm1007, %v1771, %v1770
        %v1774 = vsel %vm1016, %v1772, 0.0
        %v1775 = vsel %vm1017, %v1773, 0.0
        %s1776 = sld [smem:[#allocation12 + $0x386]]
        %v1777 = vstv %s1776
        %v1778 = vmul.f32 %v1777, %v1774
        %v1779 = vmul.f32 %v1777, %v1775
        %v1780 = vadd.f32 %v1768, %v1778
        %v1781 = vadd.f32 %v1769, %v1779
        %v1782 = vrot.slane %v1702, 1
        %v1783 = vrot.slane %v1703, 1
        %v1784 = vsel %vm1007, %v1782, %v1783
        %v1785 = vsel %vm1007, %v1783, %v1782
        %v1786 = vsel %vm1016, %v1784, 0.0
        %v1787 = vsel %vm1017, %v1785, 0.0
        %s1788 = sld [smem:[#allocation12 + $0x406]]
        %v1789 = vstv %s1788
        %v1790 = vmul.f32 %v1789, %v1786
        %v1791 = vmul.f32 %v1789, %v1787
        %v1792 = vadd.f32 %v1780, %v1790
        %v1793 = vadd.f32 %v1781, %v1791
        %s1794 = sld [smem:[#allocation13 + $0x6]]
        %v1795 = vstv %s1794
        %v1796 = vadd.f32 %v1792, %v1795
        %v1797 = vadd.f32 %v1793, %v1795
        %1798 = vrot.lane.b32.xlu0 %v901, 16
        %v1799 = vpop.permute.xlu0 %1798
        %v1800 = vsel %vm903, %v1799, %v901
        %1801 = vrot.lane.b32.xlu0 %v902, 16
        %v1802 = vpop.permute.xlu0 %1801
        %v1803 = vsel %vm903, %v1802, %v902
        %1804 = vrot.lane.b32.xlu0 %v1800, 16
        %v1805 = vpop.permute.xlu0 %1804
        %1806 = vrot.lane.b32.xlu0 %v1803, 16
        %v1807 = vpop.permute.xlu0 %1806
        %v1808 = vsel %vm903, %v1805, %v901
        %v1809 = vsel %vm903, %v1807, %v902
        %1812 = vrot.lane.b32.xlu0 %v1808, 113
        %v1813 = vpop.permute.xlu0 %1812
        %1814 = vrot.lane.b32.xlu0 %v1809, 113
        %v1815 = vpop.permute.xlu0 %1814
        %v1818 = vsel %vm919, %v1813, 0.0
        %v1819 = vsel %vm919, %v1815, 0.0
        %1820 = vrot.lane.b32.xlu0 %v1808, 127
        %v1821 = vpop.permute.xlu0 %1820
        %1822 = vrot.lane.b32.xlu0 %v1809, 127
        %v1823 = vpop.permute.xlu0 %1822
        %v1826 = vsel %vm933, %v1821, 0.0
        %v1827 = vsel %vm933, %v1823, 0.0
        %v1828 = vrot.slane %v1818, 7
        %v1829 = vrot.slane %v1819, 7
        %v1830 = vsel %vm944, %v1828, %v1829
        %v1831 = vsel %vm944, %v1829, %v1828
        %v1832 = vsel %vm953, %v1831, 0.0
        %v1833 = vsel %vm954, %v1830, 0.0
        %s1834 = sld [smem:[#allocation12 + $0x7]]
        %v1835 = vstv %s1834
        %v1836 = vmul.f32 %v1835, %v1832
        %v1837 = vmul.f32 %v1835, %v1833
        %v1838 = vadd.f32 %v1836, 0.0
        %v1839 = vadd.f32 %v1837, 0.0
        %v1840 = vrot.slane %v901, 7
        %v1841 = vrot.slane %v902, 7
        %v1842 = vsel %vm944, %v1840, %v1841
        %v1843 = vsel %vm944, %v1841, %v1840
        %v1844 = vsel %vm953, %v1843, 0.0
        %v1845 = vsel %vm954, %v1842, 0.0
        %s1846 = sld [smem:[#allocation12 + $0x87]]
        %v1847 = vstv %s1846
        %v1848 = vmul.f32 %v1847, %v1844
        %v1849 = vmul.f32 %v1847, %v1845
        %v1850 = vadd.f32 %v1838, %v1848
        %v1851 = vadd.f32 %v1839, %v1849
        %v1852 = vrot.slane %v1826, 7
        %v1853 = vrot.slane %v1827, 7
        %v1854 = vsel %vm944, %v1852, %v1853
        %v1855 = vsel %vm944, %v1853, %v1852
        %v1856 = vsel %vm953, %v1855, 0.0
        %v1857 = vsel %vm954, %v1854, 0.0
        %s1858 = sld [smem:[#allocation12 + $0x107]]
        %v1859 = vstv %s1858
        %v1860 = vmul.f32 %v1859, %v1856
        %v1861 = vmul.f32 %v1859, %v1857
        %v1862 = vadd.f32 %v1850, %v1860
        %v1863 = vadd.f32 %v1851, %v1861
        %s1864 = sld [smem:[#allocation12 + $0x187]]
        %v1865 = vstv %s1864
        %v1866 = vmul.f32 %v1865, %v1818
        %v1867 = vmul.f32 %v1865, %v1819
        %v1868 = vadd.f32 %v1862, %v1866
        %v1869 = vadd.f32 %v1863, %v1867
        %s1870 = sld [smem:[#allocation12 + $0x207]]
        %v1871 = vstv %s1870
        %v1872 = vmul.f32 %v1871, %v901
        %v1873 = vmul.f32 %v1871, %v902
        %v1874 = vadd.f32 %v1868, %v1872
        %v1875 = vadd.f32 %v1869, %v1873
        %s1876 = sld [smem:[#allocation12 + $0x287]]
        %v1877 = vstv %s1876
        %v1878 = vmul.f32 %v1877, %v1826
        %v1879 = vmul.f32 %v1877, %v1827
        %v1880 = vadd.f32 %v1874, %v1878
        %v1881 = vadd.f32 %v1875, %v1879
        %v1882 = vrot.slane %v1818, 1
        %v1883 = vrot.slane %v1819, 1
        %v1884 = vsel %vm1007, %v1882, %v1883
        %v1885 = vsel %vm1007, %v1883, %v1882
        %v1886 = vsel %vm1016, %v1884, 0.0
        %v1887 = vsel %vm1017, %v1885, 0.0
        %s1888 = sld [smem:[#allocation12 + $0x307]]
        %v1889 = vstv %s1888
        %v1890 = vmul.f32 %v1889, %v1886
        %v1891 = vmul.f32 %v1889, %v1887
        %v1892 = vadd.f32 %v1880, %v1890
        %v1893 = vadd.f32 %v1881, %v1891
        %v1894 = vrot.slane %v901, 1
        %v1895 = vrot.slane %v902, 1
        %v1896 = vsel %vm1007, %v1894, %v1895
        %v1897 = vsel %vm1007, %v1895, %v1894
        %v1898 = vsel %vm1016, %v1896, 0.0
        %v1899 = vsel %vm1017, %v1897, 0.0
        %s1900 = sld [smem:[#allocation12 + $0x387]]
        %v1901 = vstv %s1900
        %v1902 = vmul.f32 %v1901, %v1898
        %v1903 = vmul.f32 %v1901, %v1899
        %v1904 = vadd.f32 %v1892, %v1902
        %v1905 = vadd.f32 %v1893, %v1903
        %v1906 = vrot.slane %v1826, 1
        %v1907 = vrot.slane %v1827, 1
        %v1908 = vsel %vm1007, %v1906, %v1907
        %v1909 = vsel %vm1007, %v1907, %v1906
        %v1910 = vsel %vm1016, %v1908, 0.0
        %v1911 = vsel %vm1017, %v1909, 0.0
        %s1912 = sld [smem:[#allocation12 + $0x407]]
        %v1913 = vstv %s1912
        %v1914 = vmul.f32 %v1913, %v1910
        %v1915 = vmul.f32 %v1913, %v1911
        %v1916 = vadd.f32 %v1904, %v1914
        %v1917 = vadd.f32 %v1905, %v1915
        %s1918 = sld [smem:[#allocation13 + $0x7]]
        %v1919 = vstv %s1918
        %v1920 = vadd.f32 %v1916, %v1919
        %v1921 = vadd.f32 %v1917, %v1919
        %s1922 = sld [smem:[#allocation15]]
        %v1923 = vstv %s1922
        %v1924 = vmul.f32 %v1923, %v1052
        %v1925 = vmul.f32 %v1923, %v1053
        %v1926 = vadd.f32 %v1924, 0.0
        %v1927 = vadd.f32 %v1925, 0.0
        %s1928 = sld [smem:[#allocation15 + $0x80]]
        %v1929 = vstv %s1928
        %v1930 = vmul.f32 %v1929, %v1176
        %v1931 = vmul.f32 %v1929, %v1177
        %v1932 = vadd.f32 %v1926, %v1930
        %v1933 = vadd.f32 %v1927, %v1931
        %s1934 = sld [smem:[#allocation15 + $0x100]]
        %v1935 = vstv %s1934
        %v1936 = vmul.f32 %v1935, %v1300
        %v1937 = vmul.f32 %v1935, %v1301
        %v1938 = vadd.f32 %v1932, %v1936
        %v1939 = vadd.f32 %v1933, %v1937
        %s1940 = sld [smem:[#allocation15 + $0x180]]
        %v1941 = vstv %s1940
        %v1942 = vmul.f32 %v1941, %v1424
        %v1943 = vmul.f32 %v1941, %v1425
        %v1944 = vadd.f32 %v1938, %v1942
        %v1945 = vadd.f32 %v1939, %v1943
        %s1946 = sld [smem:[#allocation15 + $0x200]]
        %v1947 = vstv %s1946
        %v1948 = vmul.f32 %v1947, %v1548
        %v1949 = vmul.f32 %v1947, %v1549
        %v1950 = vadd.f32 %v1944, %v1948
        %v1951 = vadd.f32 %v1945, %v1949
        %s1952 = sld [smem:[#allocation15 + $0x280]]
        %v1953 = vstv %s1952
        %v1954 = vmul.f32 %v1953, %v1672
        %v1955 = vmul.f32 %v1953, %v1673
        %v1956 = vadd.f32 %v1950, %v1954
        %v1957 = vadd.f32 %v1951, %v1955
        %s1958 = sld [smem:[#allocation15 + $0x300]]
        %v1959 = vstv %s1958
        %v1960 = vmul.f32 %v1959, %v1796
        %v1961 = vmul.f32 %v1959, %v1797
        %v1962 = vadd.f32 %v1956, %v1960
        %v1963 = vadd.f32 %v1957, %v1961
        %s1964 = sld [smem:[#allocation15 + $0x380]]
        %v1965 = vstv %s1964
        %v1966 = vmul.f32 %v1965, %v1920
        %v1967 = vmul.f32 %v1965, %v1921
        %v1968 = vadd.f32 %v1962, %v1966
        %v1969 = vadd.f32 %v1963, %v1967
        %s1970 = sld [smem:[#allocation16]]
        %v1971 = vstv %s1970
        %v1972 = vadd.f32 %v1968, %v1971
        %v1973 = vadd.f32 %v1969, %v1971
        %v1974 = vmul.f32 %v1972, 0.5
        %v1975 = vmul.f32 %v1973, 0.5
        %v1976 = vmul.f32 %v1972, 0.70710677
        %v1977 = vmul.f32 %v1973, 0.70710677
        %v1978 = vmul.f32 %v1976, %v1976
        %v1979 = vmin.f32 16.0, %v1978
        %v1980 = vmul.f32 %v1979, 2.1237322e-06
        %v1981 = vadd.f32 %v1980, 0.00028619796
        %v1982 = vmul.f32 %v1979, %v1981
        %v1983 = vadd.f32 %v1982, 0.0036580483
        %v1984 = vmul.f32 %v1979, %v1983
        %v1985 = vadd.f32 %v1984, 0.05243302
        %v1986 = vmul.f32 %v1979, %v1985
        %v1987 = vadd.f32 %v1986, 0.18741608
        %v1988 = vmul.f32 %v1979, %v1987
        %v1989 = vadd.f32 %v1988, 1.1283791
        %v1990 = vmul.f32 %v1976, %v1989
        %v1991 = vmul.f32 %v1979, 3.8918573e-05
        %v1992 = vadd.f32 %v1991, 0.001143296
        %v1993 = vmul.f32 %v1979, %v1992
        %v1994 = vadd.f32 %v1993, 0.014752088
        %v1995 = vmul.f32 %v1979, %v1994
        %v1996 = vadd.f32 %v1995, 0.112945676
        %v1997 = vmul.f32 %v1979, %v1996
        %v1998 = vadd.f32 %v1997, 0.4994258
        %v1999 = vmul.f32 %v1979, %v1998
        %v2000 = vadd.f32 %v1999, 1.0
        %v2001 = vrcp.pop %v2000
        %v2002 = vmul.f32 %v2000, %v2001
        %v2003 = vsub.f32 1.0, %v2002
        %v2004 = vmul.f32 %v2001, %v2003
        %v2005 = vadd.f32 %v2001, %v2004
        %vm2006 = vweird.f32 %v2000
        %vm2007 = vweird.f32 %v2001
        %vm2008 = vmor %vm2006, %vm2007
        %v2009 = vsel %vm2008, %v2001, %v2005
        %v2010 = vand.u32 2147483647, %v2000
        %vm2011 = vcmp.eq.f32.partialorder %v2010, 8.507059e+37
        %v2012 = vand.u32 %v2000, 2147483648
        %v2013 = vor.u32 1.1754944e-38, %v2012
        %v2014 = vsel %vm2011, %v2013, %v2009
        %v2015 = vmul.f32 %v1990, %v2014
        %v2016 = vmin.f32 %v2015, 1.0
        %v2017 = vmax.f32 %v2016, -1.0
        %v2018 = vmul.f32 %v1977, %v1977
        %v2019 = vmin.f32 16.0, %v2018
        %v2020 = vmul.f32 %v2019, 2.1237322e-06
        %v2021 = vadd.f32 %v2020, 0.00028619796
        %v2022 = vmul.f32 %v2019, %v2021
        %v2023 = vadd.f32 %v2022, 0.0036580483
        %v2024 = vmul.f32 %v2019, %v2023
        %v2025 = vadd.f32 %v2024, 0.05243302
        %v2026 = vmul.f32 %v2019, %v2025
        %v2027 = vadd.f32 %v2026, 0.18741608
        %v2028 = vmul.f32 %v2019, %v2027
        %v2029 = vadd.f32 %v2028, 1.1283791
        %v2030 = vmul.f32 %v1977, %v2029
        %v2031 = vmul.f32 %v2019, 3.8918573e-05
        %v2032 = vadd.f32 %v2031, 0.001143296
        %v2033 = vmul.f32 %v2019, %v2032
        %v2034 = vadd.f32 %v2033, 0.014752088
        %v2035 = vmul.f32 %v2019, %v2034
        %v2036 = vadd.f32 %v2035, 0.112945676
        %v2037 = vmul.f32 %v2019, %v2036
        %v2038 = vadd.f32 %v2037, 0.4994258
        %v2039 = vmul.f32 %v2019, %v2038
        %v2040 = vadd.f32 %v2039, 1.0
        %v2041 = vrcp.pop %v2040
        %v2042 = vmul.f32 %v2040, %v2041
        %v2043 = vsub.f32 1.0, %v2042
        %v2044 = vmul.f32 %v2041, %v2043
        %v2045 = vadd.f32 %v2041, %v2044
        %vm2046 = vweird.f32 %v2040
        %vm2047 = vweird.f32 %v2041
        %vm2048 = vmor %vm2046, %vm2047
        %v2049 = vsel %vm2048, %v2041, %v2045
        %v2050 = vand.u32 2147483647, %v2040
        %vm2051 = vcmp.eq.f32.partialorder %v2050, 8.507059e+37
        %v2052 = vand.u32 %v2040, 2147483648
        %v2053 = vor.u32 1.1754944e-38, %v2052
        %v2054 = vsel %vm2051, %v2053, %v2049
        %v2055 = vmul.f32 %v2030, %v2054
        %v2056 = vmin.f32 %v2055, 1.0
        %v2057 = vmax.f32 %v2056, -1.0
        %v2058 = vadd.f32 %v2017, 1.0
        %v2059 = vadd.f32 %v2057, 1.0
        %v2060 = vmul.f32 %v1974, %v2058
        %v2061 = vmul.f32 %v1975, %v2059
        %vm2062 = vcmask 130048
        %2063 = vst.msk [vmem:[%s484] sm:$0xff] %vm2062, %v2060
        %2064 = vst.msk [vmem:[%s484 + $0x8] sm:$0xff] %vm2062, %v2061
        %v2065 = vmul.f32 %v2060, %v2060
        %v2066 = vmul.f32 %v2061, %v2061
        %v2067 = vsel %vm2062, %v2065, 0.0
        %v2068 = vsel %vm2062, %v2066, 0.0
        %v2069 = vadd.f32 %v2067, %v2068
        %v2070 = vrot.slane %v2069, 4
        %v2071 = vadd.f32 %v2069, %v2070
        %v2072 = vrot.slane %v2071, 2
        %v2073 = vadd.f32 %v2071, %v2072
        %v2074 = vrot.slane %v2073, 1
        %v2075 = vadd.f32 %v2073, %v2074
        %s2076 = sld [smem:[#allocation15 + $0x1]]
        %v2077 = vstv %s2076
        %v2078 = vmul.f32 %v2077, %v1052
        %v2079 = vmul.f32 %v2077, %v1053
        %v2080 = vadd.f32 %v2078, 0.0
        %v2081 = vadd.f32 %v2079, 0.0
        %s2082 = sld [smem:[#allocation15 + $0x81]]
        %v2083 = vstv %s2082
        %v2084 = vmul.f32 %v2083, %v1176
        %v2085 = vmul.f32 %v2083, %v1177
        %v2086 = vadd.f32 %v2080, %v2084
        %v2087 = vadd.f32 %v2081, %v2085
        %s2088 = sld [smem:[#allocation15 + $0x101]]
        %v2089 = vstv %s2088
        %v2090 = vmul.f32 %v2089, %v1300
        %v2091 = vmul.f32 %v2089, %v1301
        %v2092 = vadd.f32 %v2086, %v2090
        %v2093 = vadd.f32 %v2087, %v2091
        %s2094 = sld [smem:[#allocation15 + $0x181]]
        %v2095 = vstv %s2094
        %v2096 = vmul.f32 %v2095, %v1424
        %v2097 = vmul.f32 %v2095, %v1425
        %v2098 = vadd.f32 %v2092, %v2096
        %v2099 = vadd.f32 %v2093, %v2097
        %s2100 = sld [smem:[#allocation15 + $0x201]]
        %v2101 = vstv %s2100
        %v2102 = vmul.f32 %v2101, %v1548
        %v2103 = vmul.f32 %v2101, %v1549
        %v2104 = vadd.f32 %v2098, %v2102
        %v2105 = vadd.f32 %v2099, %v2103
        %s2106 = sld [smem:[#allocation15 + $0x281]]
        %v2107 = vstv %s2106
        %v2108 = vmul.f32 %v2107, %v1672
        %v2109 = vmul.f32 %v2107, %v1673
        %v2110 = vadd.f32 %v2104, %v2108
        %v2111 = vadd.f32 %v2105, %v2109
        %s2112 = sld [smem:[#allocation15 + $0x301]]
        %v2113 = vstv %s2112
        %v2114 = vmul.f32 %v2113, %v1796
        %v2115 = vmul.f32 %v2113, %v1797
        %v2116 = vadd.f32 %v2110, %v2114
        %v2117 = vadd.f32 %v2111, %v2115
        %s2118 = sld [smem:[#allocation15 + $0x381]]
        %v2119 = vstv %s2118
        %v2120 = vmul.f32 %v2119, %v1920
        %v2121 = vmul.f32 %v2119, %v1921
        %v2122 = vadd.f32 %v2116, %v2120
        %v2123 = vadd.f32 %v2117, %v2121
        %s2124 = sld [smem:[#allocation16 + $0x1]]
        %v2125 = vstv %s2124
        %v2126 = vadd.f32 %v2122, %v2125
        %v2127 = vadd.f32 %v2123, %v2125
        %v2128 = vmul.f32 %v2126, 0.5
        %v2129 = vmul.f32 %v2127, 0.5
        %v2130 = vmul.f32 %v2126, 0.70710677
        %v2131 = vmul.f32 %v2127, 0.70710677
        %v2132 = vmul.f32 %v2130, %v2130
        %v2133 = vmin.f32 16.0, %v2132
        %v2134 = vmul.f32 %v2133, 2.1237322e-06
        %v2135 = vadd.f32 %v2134, 0.00028619796
        %v2136 = vmul.f32 %v2133, %v2135
        %v2137 = vadd.f32 %v2136, 0.0036580483
        %v2138 = vmul.f32 %v2133, %v2137
        %v2139 = vadd.f32 %v2138, 0.05243302
        %v2140 = vmul.f32 %v2133, %v2139
        %v2141 = vadd.f32 %v2140, 0.18741608
        %v2142 = vmul.f32 %v2133, %v2141
        %v2143 = vadd.f32 %v2142, 1.1283791
        %v2144 = vmul.f32 %v2130, %v2143
        %v2145 = vmul.f32 %v2133, 3.8918573e-05
        %v2146 = vadd.f32 %v2145, 0.001143296
        %v2147 = vmul.f32 %v2133, %v2146
        %v2148 = vadd.f32 %v2147, 0.014752088
        %v2149 = vmul.f32 %v2133, %v2148
        %v2150 = vadd.f32 %v2149, 0.112945676
        %v2151 = vmul.f32 %v2133, %v2150
        %v2152 = vadd.f32 %v2151, 0.4994258
        %v2153 = vmul.f32 %v2133, %v2152
        %v2154 = vadd.f32 %v2153, 1.0
        %v2155 = vrcp.pop %v2154
        %v2156 = vmul.f32 %v2154, %v2155
        %v2157 = vsub.f32 1.0, %v2156
        %v2158 = vmul.f32 %v2155, %v2157
        %v2159 = vadd.f32 %v2155, %v2158
        %vm2160 = vweird.f32 %v2154
        %vm2161 = vweird.f32 %v2155
        %vm2162 = vmor %vm2160, %vm2161
        %v2163 = vsel %vm2162, %v2155, %v2159
        %v2164 = vand.u32 2147483647, %v2154
        %vm2165 = vcmp.eq.f32.partialorder %v2164, 8.507059e+37
        %v2166 = vand.u32 %v2154, 2147483648
        %v2167 = vor.u32 1.1754944e-38, %v2166
        %v2168 = vsel %vm2165, %v2167, %v2163
        %v2169 = vmul.f32 %v2144, %v2168
        %v2170 = vmin.f32 %v2169, 1.0
        %v2171 = vmax.f32 %v2170, -1.0
        %v2172 = vmul.f32 %v2131, %v2131
        %v2173 = vmin.f32 16.0, %v2172
        %v2174 = vmul.f32 %v2173, 2.1237322e-06
        %v2175 = vadd.f32 %v2174, 0.00028619796
        %v2176 = vmul.f32 %v2173, %v2175
        %v2177 = vadd.f32 %v2176, 0.0036580483
        %v2178 = vmul.f32 %v2173, %v2177
        %v2179 = vadd.f32 %v2178, 0.05243302
        %v2180 = vmul.f32 %v2173, %v2179
        %v2181 = vadd.f32 %v2180, 0.18741608
        %v2182 = vmul.f32 %v2173, %v2181
        %v2183 = vadd.f32 %v2182, 1.1283791
        %v2184 = vmul.f32 %v2131, %v2183
        %v2185 = vmul.f32 %v2173, 3.8918573e-05
        %v2186 = vadd.f32 %v2185, 0.001143296
        %v2187 = vmul.f32 %v2173, %v2186
        %v2188 = vadd.f32 %v2187, 0.014752088
        %v2189 = vmul.f32 %v2173, %v2188
        %v2190 = vadd.f32 %v2189, 0.112945676
        %v2191 = vmul.f32 %v2173, %v2190
        %v2192 = vadd.f32 %v2191, 0.4994258
        %v2193 = vmul.f32 %v2173, %v2192
        %v2194 = vadd.f32 %v2193, 1.0
        %v2195 = vrcp.pop %v2194
        %v2196 = vmul.f32 %v2194, %v2195
        %v2197 = vsub.f32 1.0, %v2196
        %v2198 = vmul.f32 %v2195, %v2197
        %v2199 = vadd.f32 %v2195, %v2198
        %vm2200 = vweird.f32 %v2194
        %vm2201 = vweird.f32 %v2195
        %vm2202 = vmor %vm2200, %vm2201
        %v2203 = vsel %vm2202, %v2195, %v2199
        %v2204 = vand.u32 2147483647, %v2194
        %vm2205 = vcmp.eq.f32.partialorder %v2204, 8.507059e+37
        %v2206 = vand.u32 %v2194, 2147483648
        %v2207 = vor.u32 1.1754944e-38, %v2206
        %v2208 = vsel %vm2205, %v2207, %v2203
        %v2209 = vmul.f32 %v2184, %v2208
        %v2210 = vmin.f32 %v2209, 1.0
        %v2211 = vmax.f32 %v2210, -1.0
        %v2212 = vadd.f32 %v2171, 1.0
        %v2213 = vadd.f32 %v2211, 1.0
        %v2214 = vmul.f32 %v2128, %v2212
        %v2215 = vmul.f32 %v2129, %v2213
        %s2216 = scalar_lea.vmem %s484, 16 [#allocation18]
        %2217 = vst.msk [vmem:[%s2216] sm:$0xff] %vm2062, %v2214
        %2218 = vst.msk [vmem:[%s2216 + $0x8] sm:$0xff] %vm2062, %v2215
        %v2219 = vmul.f32 %v2214, %v2214
        %v2220 = vmul.f32 %v2215, %v2215
        %v2221 = vsel %vm2062, %v2219, 0.0
        %v2222 = vsel %vm2062, %v2220, 0.0
        %v2223 = vadd.f32 %v2221, %v2222
        %v2224 = vrot.slane %v2223, 4
        %v2225 = vadd.f32 %v2223, %v2224
        %v2226 = vrot.slane %v2225, 2
        %v2227 = vadd.f32 %v2225, %v2226
        %v2228 = vrot.slane %v2227, 1
        %v2229 = vadd.f32 %v2227, %v2228
        %s2230 = sld [smem:[#allocation15 + $0x2]]
        %v2231 = vstv %s2230
        %v2232 = vmul.f32 %v2231, %v1052
        %v2233 = vmul.f32 %v2231, %v1053
        %v2234 = vadd.f32 %v2232, 0.0
        %v2235 = vadd.f32 %v2233, 0.0
        %s2236 = sld [smem:[#allocation15 + $0x82]]
        %v2237 = vstv %s2236
        %v2238 = vmul.f32 %v2237, %v1176
        %v2239 = vmul.f32 %v2237, %v1177
        %v2240 = vadd.f32 %v2234, %v2238
        %v2241 = vadd.f32 %v2235, %v2239
        %s2242 = sld [smem:[#allocation15 + $0x102]]
        %v2243 = vstv %s2242
        %v2244 = vmul.f32 %v2243, %v1300
        %v2245 = vmul.f32 %v2243, %v1301
        %v2246 = vadd.f32 %v2240, %v2244
        %v2247 = vadd.f32 %v2241, %v2245
        %s2248 = sld [smem:[#allocation15 + $0x182]]
        %v2249 = vstv %s2248
        %v2250 = vmul.f32 %v2249, %v1424
        %v2251 = vmul.f32 %v2249, %v1425
        %v2252 = vadd.f32 %v2246, %v2250
        %v2253 = vadd.f32 %v2247, %v2251
        %s2254 = sld [smem:[#allocation15 + $0x202]]
        %v2255 = vstv %s2254
        %v2256 = vmul.f32 %v2255, %v1548
        %v2257 = vmul.f32 %v2255, %v1549
        %v2258 = vadd.f32 %v2252, %v2256
        %v2259 = vadd.f32 %v2253, %v2257
        %s2260 = sld [smem:[#allocation15 + $0x282]]
        %v2261 = vstv %s2260
        %v2262 = vmul.f32 %v2261, %v1672
        %v2263 = vmul.f32 %v2261, %v1673
        %v2264 = vadd.f32 %v2258, %v2262
        %v2265 = vadd.f32 %v2259, %v2263
        %s2266 = sld [smem:[#allocation15 + $0x302]]
        %v2267 = vstv %s2266
        %v2268 = vmul.f32 %v2267, %v1796
        %v2269 = vmul.f32 %v2267, %v1797
        %v2270 = vadd.f32 %v2264, %v2268
        %v2271 = vadd.f32 %v2265, %v2269
        %s2272 = sld [smem:[#allocation15 + $0x382]]
        %v2273 = vstv %s2272
        %v2274 = vmul.f32 %v2273, %v1920
        %v2275 = vmul.f32 %v2273, %v1921
        %v2276 = vadd.f32 %v2270, %v2274
        %v2277 = vadd.f32 %v2271, %v2275
        %s2278 = sld [smem:[#allocation16 + $0x2]]
        %v2279 = vstv %s2278
        %v2280 = vadd.f32 %v2276, %v2279
        %v2281 = vadd.f32 %v2277, %v2279
        %v2282 = vmul.f32 %v2280, 0.5
        %v2283 = vmul.f32 %v2281, 0.5
        %v2284 = vmul.f32 %v2280, 0.70710677
        %v2285 = vmul.f32 %v2281, 0.70710677
        %v2286 = vmul.f32 %v2284, %v2284
        %v2287 = vmin.f32 16.0, %v2286
        %v2288 = vmul.f32 %v2287, 2.1237322e-06
        %v2289 = vadd.f32 %v2288, 0.00028619796
        %v2290 = vmul.f32 %v2287, %v2289
        %v2291 = vadd.f32 %v2290, 0.0036580483
        %v2292 = vmul.f32 %v2287, %v2291
        %v2293 = vadd.f32 %v2292, 0.05243302
        %v2294 = vmul.f32 %v2287, %v2293
        %v2295 = vadd.f32 %v2294, 0.18741608
        %v2296 = vmul.f32 %v2287, %v2295
        %v2297 = vadd.f32 %v2296, 1.1283791
        %v2298 = vmul.f32 %v2284, %v2297
        %v2299 = vmul.f32 %v2287, 3.8918573e-05
        %v2300 = vadd.f32 %v2299, 0.001143296
        %v2301 = vmul.f32 %v2287, %v2300
        %v2302 = vadd.f32 %v2301, 0.014752088
        %v2303 = vmul.f32 %v2287, %v2302
        %v2304 = vadd.f32 %v2303, 0.112945676
        %v2305 = vmul.f32 %v2287, %v2304
        %v2306 = vadd.f32 %v2305, 0.4994258
        %v2307 = vmul.f32 %v2287, %v2306
        %v2308 = vadd.f32 %v2307, 1.0
        %v2309 = vrcp.pop %v2308
        %v2310 = vmul.f32 %v2308, %v2309
        %v2311 = vsub.f32 1.0, %v2310
        %v2312 = vmul.f32 %v2309, %v2311
        %v2313 = vadd.f32 %v2309, %v2312
        %vm2314 = vweird.f32 %v2308
        %vm2315 = vweird.f32 %v2309
        %vm2316 = vmor %vm2314, %vm2315
        %v2317 = vsel %vm2316, %v2309, %v2313
        %v2318 = vand.u32 2147483647, %v2308
        %vm2319 = vcmp.eq.f32.partialorder %v2318, 8.507059e+37
        %v2320 = vand.u32 %v2308, 2147483648
        %v2321 = vor.u32 1.1754944e-38, %v2320
        %v2322 = vsel %vm2319, %v2321, %v2317
        %v2323 = vmul.f32 %v2298, %v2322
        %v2324 = vmin.f32 %v2323, 1.0
        %v2325 = vmax.f32 %v2324, -1.0
        %v2326 = vmul.f32 %v2285, %v2285
        %v2327 = vmin.f32 16.0, %v2326
        %v2328 = vmul.f32 %v2327, 2.1237322e-06
        %v2329 = vadd.f32 %v2328, 0.00028619796
        %v2330 = vmul.f32 %v2327, %v2329
        %v2331 = vadd.f32 %v2330, 0.0036580483
        %v2332 = vmul.f32 %v2327, %v2331
        %v2333 = vadd.f32 %v2332, 0.05243302
        %v2334 = vmul.f32 %v2327, %v2333
        %v2335 = vadd.f32 %v2334, 0.18741608
        %v2336 = vmul.f32 %v2327, %v2335
        %v2337 = vadd.f32 %v2336, 1.1283791
        %v2338 = vmul.f32 %v2285, %v2337
        %v2339 = vmul.f32 %v2327, 3.8918573e-05
        %v2340 = vadd.f32 %v2339, 0.001143296
        %v2341 = vmul.f32 %v2327, %v2340
        %v2342 = vadd.f32 %v2341, 0.014752088
        %v2343 = vmul.f32 %v2327, %v2342
        %v2344 = vadd.f32 %v2343, 0.112945676
        %v2345 = vmul.f32 %v2327, %v2344
        %v2346 = vadd.f32 %v2345, 0.4994258
        %v2347 = vmul.f32 %v2327, %v2346
        %v2348 = vadd.f32 %v2347, 1.0
        %v2349 = vrcp.pop %v2348
        %v2350 = vmul.f32 %v2348, %v2349
        %v2351 = vsub.f32 1.0, %v2350
        %v2352 = vmul.f32 %v2349, %v2351
        %v2353 = vadd.f32 %v2349, %v2352
        %vm2354 = vweird.f32 %v2348
        %vm2355 = vweird.f32 %v2349
        %vm2356 = vmor %vm2354, %vm2355
        %v2357 = vsel %vm2356, %v2349, %v2353
        %v2358 = vand.u32 2147483647, %v2348
        %vm2359 = vcmp.eq.f32.partialorder %v2358, 8.507059e+37
        %v2360 = vand.u32 %v2348, 2147483648
        %v2361 = vor.u32 1.1754944e-38, %v2360
        %v2362 = vsel %vm2359, %v2361, %v2357
        %v2363 = vmul.f32 %v2338, %v2362
        %v2364 = vmin.f32 %v2363, 1.0
        %v2365 = vmax.f32 %v2364, -1.0
        %v2366 = vadd.f32 %v2325, 1.0
        %v2367 = vadd.f32 %v2365, 1.0
        %v2368 = vmul.f32 %v2282, %v2366
        %v2369 = vmul.f32 %v2283, %v2367
        %s2370 = scalar_lea.vmem %s484, 32 [#allocation18]
        %2371 = vst.msk [vmem:[%s2370] sm:$0xff] %vm2062, %v2368
        %2372 = vst.msk [vmem:[%s2370 + $0x8] sm:$0xff] %vm2062, %v2369
        %v2373 = vmul.f32 %v2368, %v2368
        %v2374 = vmul.f32 %v2369, %v2369
        %v2375 = vsel %vm2062, %v2373, 0.0
        %v2376 = vsel %vm2062, %v2374, 0.0
        %v2377 = vadd.f32 %v2375, %v2376
        %v2378 = vrot.slane %v2377, 4
        %v2379 = vadd.f32 %v2377, %v2378
        %v2380 = vrot.slane %v2379, 2
        %v2381 = vadd.f32 %v2379, %v2380
        %v2382 = vrot.slane %v2381, 1
        %v2383 = vadd.f32 %v2381, %v2382
        %s2384 = sld [smem:[#allocation15 + $0x3]]
        %v2385 = vstv %s2384
        %v2386 = vmul.f32 %v2385, %v1052
        %v2387 = vmul.f32 %v2385, %v1053
        %v2388 = vadd.f32 %v2386, 0.0
        %v2389 = vadd.f32 %v2387, 0.0
        %s2390 = sld [smem:[#allocation15 + $0x83]]
        %v2391 = vstv %s2390
        %v2392 = vmul.f32 %v2391, %v1176
        %v2393 = vmul.f32 %v2391, %v1177
        %v2394 = vadd.f32 %v2388, %v2392
        %v2395 = vadd.f32 %v2389, %v2393
        %s2396 = sld [smem:[#allocation15 + $0x103]]
        %v2397 = vstv %s2396
        %v2398 = vmul.f32 %v2397, %v1300
        %v2399 = vmul.f32 %v2397, %v1301
        %v2400 = vadd.f32 %v2394, %v2398
        %v2401 = vadd.f32 %v2395, %v2399
        %s2402 = sld [smem:[#allocation15 + $0x183]]
        %v2403 = vstv %s2402
        %v2404 = vmul.f32 %v2403, %v1424
        %v2405 = vmul.f32 %v2403, %v1425
        %v2406 = vadd.f32 %v2400, %v2404
        %v2407 = vadd.f32 %v2401, %v2405
        %s2408 = sld [smem:[#allocation15 + $0x203]]
        %v2409 = vstv %s2408
        %v2410 = vmul.f32 %v2409, %v1548
        %v2411 = vmul.f32 %v2409, %v1549
        %v2412 = vadd.f32 %v2406, %v2410
        %v2413 = vadd.f32 %v2407, %v2411
        %s2414 = sld [smem:[#allocation15 + $0x283]]
        %v2415 = vstv %s2414
        %v2416 = vmul.f32 %v2415, %v1672
        %v2417 = vmul.f32 %v2415, %v1673
        %v2418 = vadd.f32 %v2412, %v2416
        %v2419 = vadd.f32 %v2413, %v2417
        %s2420 = sld [smem:[#allocation15 + $0x303]]
        %v2421 = vstv %s2420
        %v2422 = vmul.f32 %v2421, %v1796
        %v2423 = vmul.f32 %v2421, %v1797
        %v2424 = vadd.f32 %v2418, %v2422
        %v2425 = vadd.f32 %v2419, %v2423
        %s2426 = sld [smem:[#allocation15 + $0x383]]
        %v2427 = vstv %s2426
        %v2428 = vmul.f32 %v2427, %v1920
        %v2429 = vmul.f32 %v2427, %v1921
        %v2430 = vadd.f32 %v2424, %v2428
        %v2431 = vadd.f32 %v2425, %v2429
        %s2432 = sld [smem:[#allocation16 + $0x3]]
        %v2433 = vstv %s2432
        %v2434 = vadd.f32 %v2430, %v2433
        %v2435 = vadd.f32 %v2431, %v2433
        %v2436 = vmul.f32 %v2434, 0.5
        %v2437 = vmul.f32 %v2435, 0.5
        %v2438 = vmul.f32 %v2434, 0.70710677
        %v2439 = vmul.f32 %v2435, 0.70710677
        %v2440 = vmul.f32 %v2438, %v2438
        %v2441 = vmin.f32 16.0, %v2440
        %v2442 = vmul.f32 %v2441, 2.1237322e-06
        %v2443 = vadd.f32 %v2442, 0.00028619796
        %v2444 = vmul.f32 %v2441, %v2443
        %v2445 = vadd.f32 %v2444, 0.0036580483
        %v2446 = vmul.f32 %v2441, %v2445
        %v2447 = vadd.f32 %v2446, 0.05243302
        %v2448 = vmul.f32 %v2441, %v2447
        %v2449 = vadd.f32 %v2448, 0.18741608
        %v2450 = vmul.f32 %v2441, %v2449
        %v2451 = vadd.f32 %v2450, 1.1283791
        %v2452 = vmul.f32 %v2438, %v2451
        %v2453 = vmul.f32 %v2441, 3.8918573e-05
        %v2454 = vadd.f32 %v2453, 0.001143296
        %v2455 = vmul.f32 %v2441, %v2454
        %v2456 = vadd.f32 %v2455, 0.014752088
        %v2457 = vmul.f32 %v2441, %v2456
        %v2458 = vadd.f32 %v2457, 0.112945676
        %v2459 = vmul.f32 %v2441, %v2458
        %v2460 = vadd.f32 %v2459, 0.4994258
        %v2461 = vmul.f32 %v2441, %v2460
        %v2462 = vadd.f32 %v2461, 1.0
        %v2463 = vrcp.pop %v2462
        %v2464 = vmul.f32 %v2462, %v2463
        %v2465 = vsub.f32 1.0, %v2464
        %v2466 = vmul.f32 %v2463, %v2465
        %v2467 = vadd.f32 %v2463, %v2466
        %vm2468 = vweird.f32 %v2462
        %vm2469 = vweird.f32 %v2463
        %vm2470 = vmor %vm2468, %vm2469
        %v2471 = vsel %vm2470, %v2463, %v2467
        %v2472 = vand.u32 2147483647, %v2462
        %vm2473 = vcmp.eq.f32.partialorder %v2472, 8.507059e+37
        %v2474 = vand.u32 %v2462, 2147483648
        %v2475 = vor.u32 1.1754944e-38, %v2474
        %v2476 = vsel %vm2473, %v2475, %v2471
        %v2477 = vmul.f32 %v2452, %v2476
        %v2478 = vmin.f32 %v2477, 1.0
        %v2479 = vmax.f32 %v2478, -1.0
        %v2480 = vmul.f32 %v2439, %v2439
        %v2481 = vmin.f32 16.0, %v2480
        %v2482 = vmul.f32 %v2481, 2.1237322e-06
        %v2483 = vadd.f32 %v2482, 0.00028619796
        %v2484 = vmul.f32 %v2481, %v2483
        %v2485 = vadd.f32 %v2484, 0.0036580483
        %v2486 = vmul.f32 %v2481, %v2485
        %v2487 = vadd.f32 %v2486, 0.05243302
        %v2488 = vmul.f32 %v2481, %v2487
        %v2489 = vadd.f32 %v2488, 0.18741608
        %v2490 = vmul.f32 %v2481, %v2489
        %v2491 = vadd.f32 %v2490, 1.1283791
        %v2492 = vmul.f32 %v2439, %v2491
        %v2493 = vmul.f32 %v2481, 3.8918573e-05
        %v2494 = vadd.f32 %v2493, 0.001143296
        %v2495 = vmul.f32 %v2481, %v2494
        %v2496 = vadd.f32 %v2495, 0.014752088
        %v2497 = vmul.f32 %v2481, %v2496
        %v2498 = vadd.f32 %v2497, 0.112945676
        %v2499 = vmul.f32 %v2481, %v2498
        %v2500 = vadd.f32 %v2499, 0.4994258
        %v2501 = vmul.f32 %v2481, %v2500
        %v2502 = vadd.f32 %v2501, 1.0
        %v2503 = vrcp.pop %v2502
        %v2504 = vmul.f32 %v2502, %v2503
        %v2505 = vsub.f32 1.0, %v2504
        %v2506 = vmul.f32 %v2503, %v2505
        %v2507 = vadd.f32 %v2503, %v2506
        %vm2508 = vweird.f32 %v2502
        %vm2509 = vweird.f32 %v2503
        %vm2510 = vmor %vm2508, %vm2509
        %v2511 = vsel %vm2510, %v2503, %v2507
        %v2512 = vand.u32 2147483647, %v2502
        %vm2513 = vcmp.eq.f32.partialorder %v2512, 8.507059e+37
        %v2514 = vand.u32 %v2502, 2147483648
        %v2515 = vor.u32 1.1754944e-38, %v2514
        %v2516 = vsel %vm2513, %v2515, %v2511
        %v2517 = vmul.f32 %v2492, %v2516
        %v2518 = vmin.f32 %v2517, 1.0
        %v2519 = vmax.f32 %v2518, -1.0
        %v2520 = vadd.f32 %v2479, 1.0
        %v2521 = vadd.f32 %v2519, 1.0
        %v2522 = vmul.f32 %v2436, %v2520
        %v2523 = vmul.f32 %v2437, %v2521
        %s2524 = scalar_lea.vmem %s484, 48 [#allocation18]
        %2525 = vst.msk [vmem:[%s2524] sm:$0xff] %vm2062, %v2522
        %2526 = vst.msk [vmem:[%s2524 + $0x8] sm:$0xff] %vm2062, %v2523
        %v2527 = vmul.f32 %v2522, %v2522
        %v2528 = vmul.f32 %v2523, %v2523
        %v2529 = vsel %vm2062, %v2527, 0.0
        %v2530 = vsel %vm2062, %v2528, 0.0
        %v2531 = vadd.f32 %v2529, %v2530
        %v2532 = vrot.slane %v2531, 4
        %v2533 = vadd.f32 %v2531, %v2532
        %v2534 = vrot.slane %v2533, 2
        %v2535 = vadd.f32 %v2533, %v2534
        %v2536 = vrot.slane %v2535, 1
        %v2537 = vadd.f32 %v2535, %v2536
        %vm2538 = vcmask 1040384
        %v2539 = vsel %vm2538, %v2075, %v2229
        %vm2540 = vcmask 1041408
        %v2541 = vsel %vm2540, %v2539, %v2383
        %vm2542 = vcmask 1042432
        %v2543 = vsel %vm2542, %v2541, %v2537
        %vm2544 = vcmask 125952
        %2545 = vst.msk [vmem:[%s494] sm:$0xf] %vm2544, %v2543
        %s2546 = sand.u32 %s235, 1
        %s2547 = scalar_lea.sflag [#allocation4], %s2546
        %s2548 = sand.u32 %s235, 1
        %s2549 = smul.addr %s2548, 64
        %s2550 = scalar_lea.vmem [#allocation18], %s2549
        %p2551 = scmp.lt.s32.totalorder %s33, 1
        %s2552 = scalar_select %p2551, %s33, 1
        %s2553 = smul.addr %s2552, 4
        %s2554 = scalar_lea.vmem %s10, %s2553
        // Predicated region
        $region93: #{depthwise_block_forward.2} parent=55 // pred_check
          %p2555 = pneg %p245
        $region94: #{depthwise_block_forward.2} parent=55 // pred_check_branch
          %2557 = sbr.rel (%p2555) target = $region96
        $region95: #{depthwise_block_forward.2} parent=55 // pred_region
          %2559 = vsyncadd %s2547, 0
          %s2560 = smul.addr %s33, 8
          %s2561 = smul.addr %s2560, 8
          %s2562 = scalar_lea.hbm %s9, %s2561
          %s2563 = sshll.u32 %s2550, 4
          %s2564 = int_to_ptr.vmem [resolvable:$true] %s2563
          %s2565 = sshll.u32 %s2562, 4
          %s2566 = int_to_ptr.hbm [resolvable:$true] %s2565
          %2571 = dma.vmem_to_hbm [thread:$0]  %s2564, 1024, %s2566, %s2547, 128, 128, 8
        $region96: #{depthwise_block_forward.2} parent=55 // pred_fallthru
          _
        // Predicated region
        $region97: #{depthwise_block_forward.2} parent=55 // pred_check
          %p2572 = pneg %p271
        $region98: #{depthwise_block_forward.2} parent=55 // pred_check_branch
          %2574 = sbr.rel (%p2572) target = $region100
        $region99: #{depthwise_block_forward.2} parent=55 // pred_region
          _
        $region100: #{depthwise_block_forward.2} parent=55 // pred_fallthru
          _
      $region56: #{depthwise_block_forward.2} parent=5 // pred_fallthru
        _
      %p2575 = scmp.le.s32.totalorder 2, %s28
      // Predicated region
      $region101: #{depthwise_block_forward.2} parent=5 // pred_check
        %p2576 = pneg %p2575
      $region102: #{depthwise_block_forward.2} parent=5 // pred_check_branch
        %2578 = sbr.rel (%p2576) target = $region104
      $region103: #{depthwise_block_forward.2} parent=5 // pred_region
        %s2579 = ssub.s32 %s28, 2
        // Predicated region
        $region105: #{depthwise_block_forward.2} parent=103 // pred_check
          %p2580 = pneg %p251
        $region106: #{depthwise_block_forward.2} parent=103 // pred_check_branch
          %2582 = sbr.rel (%p2580) target = $region108
        $region107: #{depthwise_block_forward.2} parent=103 // pred_region
          %s2583 = sand.u32 %s236, 1
          %s2584 = scalar_lea.sflag [#allocation4], %s2583
          %s2585 = sand.u32 %s236, 1
          %s2586 = smul.addr %s2585, 64
          %s2587 = scalar_lea.vmem [#allocation18], %s2586
          %2589 = dma.done %s2584, 1024
        $region108: #{depthwise_block_forward.2} parent=103 // pred_fallthru
          _
        // Predicated region
        $region109: #{depthwise_block_forward.2} parent=103 // pred_check
          %p2590 = pneg %p277
        $region110: #{depthwise_block_forward.2} parent=103 // pred_check_branch
          %2592 = sbr.rel (%p2590) target = $region112
        $region111: #{depthwise_block_forward.2} parent=103 // pred_region
          %p2593 = scmp.lt.s32.totalorder %s34, 1
          %s2594 = scalar_select %p2593, %s34, 1
          %s2595 = smul.addr %s2594, 4
          %s2596 = scalar_lea.vmem %s10, %s2595
        $region112: #{depthwise_block_forward.2} parent=103 // pred_fallthru
          _
      $region104: #{depthwise_block_forward.2} parent=5 // pred_fallthru
        _
    $region6: #{depthwise_block_forward.2} parent=1 // loop_footer
      %s32 = sadd.s32 1, %s28
    $region7: #{depthwise_block_forward.2} parent=1 // loop_footer_branch
      %27 = sbr.rel target = $region3
    $region8: #{depthwise_block_forward.2} parent=1 // loop_exit
      _
    %2597 = vsyncpa [#allocation3], 1
    %s2598 = scalar_lea.sflag [#allocation3], 1
    %2599 = vsyncpa %s2598, 1
    %2600 = vsyncpa [#allocation4], 1
    %s2601 = scalar_lea.sflag [#allocation4], 1
    %2602 = vsyncpa %s2601, 1
    %2603 = vsyncpa [#allocation5], 1
    %s2604 = scalar_lea.sflag [#allocation5], 1
    %2605 = vsyncpa %s2604, 1
    %2606 = vsyncpa [#allocation8], 1
    %2607 = vsyncpa [#allocation11], 1
    %2608 = vsyncpa [#allocation14], 1
    %2609 = vsyncpa [#allocation17], 1

</llo_original>
